<compile_context>
chip_gen: v7x
topology: tpu7x:2x2x1
jax: 0.10.0
libtpu: 0.0.40
codegen_flags: <defaults>
</compile_context>

<pallas_src>
import functools

import jax
import jax.numpy as jnp
from jax.experimental import pallas as pl
from jax.experimental.pallas import tpu as pltpu


def _tlstm_gen_kernel(x_ref, dt_ref,
                      eWx_ref, eb_ref, eWh_ref, eWd_ref, ebd_ref,   # encoder TLSTM
                      efW_ref, efb_ref,                             # encoder_fc
                      dWx_ref, db_ref, dWh_ref, dWd_ref, dbd_ref,   # decoder TLSTM
                      dfW_ref, dfb_ref,                             # decoder_fc
                      rec_ref, lat_ref,
                      *, seq_len, batch, hidden):
    """batch here is the sublane-padded batch (multiple of 8)."""
    f32 = jnp.float32
    S, B, H = seq_len, batch, hidden

    # ---- hoist all weight / bias materialization out of the recurrences ----
    eWh = eWh_ref[...]
    eWd = eWd_ref[...]
    dWh = dWh_ref[...]
    dWd = dWd_ref[...]
    ebd_b = jnp.broadcast_to(ebd_ref[...], (B, H))   # broadcast biases once
    dbd_b = jnp.broadcast_to(dbd_ref[...], (B, H))

    # ---- time decay, shared by encoder and decoder: 1 / log(e + dt) ----
    # Exact reciprocal for parity with the reference; broadcast to H lanes once
    # so no per-step broadcast_in_dim is re-emitted in the unrolled loops.
    decay_all = jnp.broadcast_to(
        pl.reciprocal(jnp.log(jnp.float32(jnp.e) + dt_ref[...]), approx=False),
        (S * B, H))                                       # (S*B, H)

    # ---- encoder input projection for ALL timesteps in one matmul ----
    xW_all = (jnp.dot(x_ref[...], eWx_ref[...], preferred_element_type=f32)
              + eb_ref[...])                              # (S*B, 4H)

    def step(xw_t, decay_t, h, c, Wh, Wd, bd_b):
        """One T-LSTM step. No per-step concat/broadcast; two MXU pushes."""
        c_s = jnp.tanh(jnp.dot(c, Wd, preferred_element_type=f32) + bd_b)
        c_adj = (c - c_s) + c_s * decay_t
        gates = xw_t + jnp.dot(h, Wh, preferred_element_type=f32)     # (B, 4H)
        sig = jax.nn.sigmoid(gates)        # one full-width sigmoid, then slice
        i_g = sig[:, 0 * H:1 * H]
        f_g = sig[:, 1 * H:2 * H]
        o_g = sig[:, 2 * H:3 * H]
        g_g = jnp.tanh(gates[:, 3 * H:4 * H])
        c_new = f_g * c_adj + i_g * g_g
        h_new = o_g * jnp.tanh(c_new)
        return h_new, c_new

    # ---- encoder recurrence (only final h is needed) ----
    h = jnp.zeros((B, H), f32)
    c = jnp.zeros((B, H), f32)
    for t in range(S):                           # fully unrolled (small, static S)
        h, c = step(xW_all[t * B:(t + 1) * B],   # sublane-aligned static slices
                    decay_all[t * B:(t + 1) * B],
                    h, c, eWh, eWd, ebd_b)

    # ---- latent bottleneck: relu(Linear(h_enc)) ----
    latent = jnp.maximum(
        jnp.dot(h, efW_ref[...], preferred_element_type=f32) + efb_ref[...], 0.0)
    lat_ref[...] = latent
    # TODO(synk): pad latent/output last dims to 128 lanes if L/O ever scale up.

    # ---- decoder recurrence; input projection is loop-invariant ----
    dec_xW = (jnp.dot(latent, dWx_ref[...], preferred_element_type=f32)
              + db_ref[...])                              # (B, 4H)

    # TODO(synk): decoder state initialized to zeros (reference TLSTM not given;
    # some implementations seed it with the encoder's final state).
    h = jnp.zeros((B, H), f32)
    c = jnp.zeros((B, H), f32)
    h_list = []                                  # states live in vregs until the end
    for t in range(S):
        h, c = step(dec_xW, decay_all[t * B:(t + 1) * B], h, c, dWh, dWd, dbd_b)
        h_list.append(h)

    # ---- decoder_fc as ONE matmul + one contiguous slab store ----
    h_all = jnp.concatenate(h_list, axis=0)               # (S*B, H), aligned
    rec_ref[...] = (jnp.dot(h_all, dfW_ref[...], preferred_element_type=f32)
                    + dfb_ref[...])                       # (S*B, O)


def tlstm_generator_forward(x, delta_t, params):
    """x: (B, S, input_size), delta_t: (B, S, 1). Returns (reconstructed, latent)."""
    B, S, Din = x.shape
    H = params["enc_Wh"].shape[0]
    L = params["enc_fc_W"].shape[1]
    O = params["dec_fc_W"].shape[1]

    # Sublane-aligned padded batch: keep Bp rows flowing through the kernel,
    # slice the real B rows off afterwards (padding is free compute).
    Bp = max(8, ((B + 7) // 8) * 8)

    # All layout plumbing lives in the wrapper: time-major, batch-padded, flat.
    x_tm = jnp.transpose(x, (1, 0, 2)).astype(jnp.float32)        # (S, B, Din)
    dt_tm = jnp.transpose(delta_t, (1, 0, 2)).astype(jnp.float32)  # (S, B, 1)
    pad = ((0, 0), (0, Bp - B), (0, 0))
    x_flat = jnp.pad(x_tm, pad).reshape(S * Bp, Din)
    dt_flat = jnp.pad(dt_tm, pad).reshape(S * Bp, 1)

    weights = [
        params["enc_Wx"], params["enc_b"], params["enc_Wh"],
        params["enc_Wd"], params["enc_bd"],
        params["enc_fc_W"], params["enc_fc_b"],
        params["dec_Wx"], params["dec_b"], params["dec_Wh"],
        params["dec_Wd"], params["dec_bd"],
        params["dec_fc_W"], params["dec_fc_b"],
    ]

    vmem = pl.BlockSpec(memory_space=pltpu.MemorySpace.VMEM)
    n_in = 2 + len(weights)

    rec_flat, latent_p = pl.pallas_call(
        functools.partial(_tlstm_gen_kernel, seq_len=S, batch=Bp, hidden=H),
        out_shape=(
            jax.ShapeDtypeStruct((S * Bp, O), jnp.float32),
            jax.ShapeDtypeStruct((Bp, L), jnp.float32),
        ),
        in_specs=[vmem] * n_in,
        out_specs=(vmem, vmem),
        compiler_params=pltpu.CompilerParams(
            vmem_limit_bytes=32 * 1024 * 1024),
        # TODO(synk): add a batch-tiled grid + dimension_semantics=("parallel",)
        # before scaling B/S (v7x dual-TC, 64 MiB VMEM).
    )(x_flat, dt_flat, *weights)

    rec = rec_flat.reshape(S, Bp, O)[:, :B, :]
    reconstructed = jnp.transpose(rec, (1, 0, 2))      # back to (B, S, O)
    latent = latent_p[:B]
    return reconstructed, latent


def init_params(input_size, hidden_size, latent_size, output_size, key):
    """Deterministic synthetic parameters (shapes match the PyTorch module)."""
    ks = jax.random.split(key, 14)
    s = 0.1

    def mat(k, shape):
        return (s * jax.random.normal(k, shape)).astype(jnp.float32)

    H = hidden_size
    return {
        # encoder TLSTM
        "enc_Wx": mat(ks[0], (input_size, 4 * H)),
        "enc_Wh": mat(ks[1], (H, 4 * H)),
        "enc_b":  mat(ks[2], (1, 4 * H)),
        "enc_Wd": mat(ks[3], (H, H)),
        "enc_bd": mat(ks[4], (1, H)),
        # encoder_fc
        "enc_fc_W": mat(ks[5], (H, latent_size)),
        "enc_fc_b": mat(ks[6], (1, latent_size)),
        # decoder TLSTM (input = latent)
        "dec_Wx": mat(ks[7], (latent_size, 4 * H)),
        "dec_Wh": mat(ks[8], (H, 4 * H)),
        "dec_b":  mat(ks[9], (1, 4 * H)),
        "dec_Wd": mat(ks[10], (H, H)),
        "dec_bd": mat(ks[11], (1, H)),
        # decoder_fc
        "dec_fc_W": mat(ks[12], (H, output_size)),
        "dec_fc_b": mat(ks[13], (1, output_size)),
    }


if __name__ == "__main__":
    batch, seq_len = 2, 8
    input_size, hidden_size, latent_size, output_size = 8, 32, 16, 8

    key = jax.random.PRNGKey(0)
    kx, kd, kp = jax.random.split(key, 3)

    x = jax.random.normal(kx, (batch, seq_len, input_size), dtype=jnp.float32)
    delta_t = jax.random.uniform(kd, (batch, seq_len, 1), dtype=jnp.float32,
                                 minval=0.0, maxval=5.0)
    params = init_params(input_size, hidden_size, latent_size, output_size, kp)

    reconstructed, latent = jax.jit(tlstm_generator_forward)(x, delta_t, params)
    jax.block_until_ready((reconstructed, latent))

    assert reconstructed.shape == (batch, seq_len, output_size)
    assert latent.shape == (batch, latent_size)
    print("KERNEL_OK")
</pallas_src>

<mosaic_0001>
module attributes {stable_mosaic.version = 11 : i64} {
  func.func @_tlstm_gen_kernel(%arg0: memref<64x8xf32, #tpu.memory_space<vmem>>, %arg1: memref<64x1xf32, #tpu.memory_space<vmem>>, %arg2: memref<8x128xf32, #tpu.memory_space<vmem>>, %arg3: memref<1x128xf32, #tpu.memory_space<vmem>>, %arg4: memref<32x128xf32, #tpu.memory_space<vmem>>, %arg5: memref<32x32xf32, #tpu.memory_space<vmem>>, %arg6: memref<1x32xf32, #tpu.memory_space<vmem>>, %arg7: memref<32x16xf32, #tpu.memory_space<vmem>>, %arg8: memref<1x16xf32, #tpu.memory_space<vmem>>, %arg9: memref<16x128xf32, #tpu.memory_space<vmem>>, %arg10: memref<1x128xf32, #tpu.memory_space<vmem>>, %arg11: memref<32x128xf32, #tpu.memory_space<vmem>>, %arg12: memref<32x32xf32, #tpu.memory_space<vmem>>, %arg13: memref<1x32xf32, #tpu.memory_space<vmem>>, %arg14: memref<32x8xf32, #tpu.memory_space<vmem>>, %arg15: memref<1x8xf32, #tpu.memory_space<vmem>>, %arg16: memref<64x8xf32, #tpu.memory_space<vmem>>, %arg17: memref<8x16xf32, #tpu.memory_space<vmem>>) attributes {dimension_semantics = [], scalar_prefetch = 0 : i64, scratch_operands = 0 : i64, tpu.core_type = #tpu.core_type<tc>} {
    %c0 = arith.constant 0 : index
    %c0_0 = arith.constant 0 : index
    %0 = vector.load %arg4[%c0, %c0_0] : memref<32x128xf32, #tpu.memory_space<vmem>>, vector<32x128xf32>
    %c0_1 = arith.constant 0 : index
    %c0_2 = arith.constant 0 : index
    %1 = vector.load %arg5[%c0_1, %c0_2] : memref<32x32xf32, #tpu.memory_space<vmem>>, vector<32x32xf32>
    %c0_3 = arith.constant 0 : index
    %c0_4 = arith.constant 0 : index
    %2 = vector.load %arg11[%c0_3, %c0_4] : memref<32x128xf32, #tpu.memory_space<vmem>>, vector<32x128xf32>
    %c0_5 = arith.constant 0 : index
    %c0_6 = arith.constant 0 : index
    %3 = vector.load %arg12[%c0_5, %c0_6] : memref<32x32xf32, #tpu.memory_space<vmem>>, vector<32x32xf32>
    %c0_7 = arith.constant 0 : index
    %c0_8 = arith.constant 0 : index
    %4 = vector.load %arg6[%c0_7, %c0_8] : memref<1x32xf32, #tpu.memory_space<vmem>>, vector<1x32xf32>
    %5 = vector.shape_cast %4 : vector<1x32xf32> to vector<1x32xf32>
    %6 = vector.broadcast %5 : vector<1x32xf32> to vector<8x32xf32>
    %c0_9 = arith.constant 0 : index
    %c0_10 = arith.constant 0 : index
    %7 = vector.load %arg13[%c0_9, %c0_10] : memref<1x32xf32, #tpu.memory_space<vmem>>, vector<1x32xf32>
    %8 = vector.shape_cast %7 : vector<1x32xf32> to vector<1x32xf32>
    %9 = vector.broadcast %8 : vector<1x32xf32> to vector<8x32xf32>
    %c0_11 = arith.constant 0 : index
    %c0_12 = arith.constant 0 : index
    %10 = vector.load %arg1[%c0_11, %c0_12] : memref<64x1xf32, #tpu.memory_space<vmem>>, vector<64x1xf32>
    %cst = arith.constant 2.71828175 : f32
    %11 = vector.broadcast %cst : f32 to vector<64x1xf32>
    %12 = arith.addf %11, %10 : vector<64x1xf32>
    %13 = math.log %12 : vector<64x1xf32>
    %14 = tpu.reciprocal %13 : vector<64x1xf32> -> vector<64x1xf32>
    %15 = vector.shape_cast %14 : vector<64x1xf32> to vector<64x1xf32>
    %16 = vector.broadcast %15 : vector<64x1xf32> to vector<64x32xf32>
    %c0_13 = arith.constant 0 : index
    %c0_14 = arith.constant 0 : index
    %17 = vector.load %arg0[%c0_13, %c0_14] : memref<64x8xf32, #tpu.memory_space<vmem>>, vector<64x8xf32>
    %c0_15 = arith.constant 0 : index
    %c0_16 = arith.constant 0 : index
    %18 = vector.load %arg2[%c0_15, %c0_16] : memref<8x128xf32, #tpu.memory_space<vmem>>, vector<8x128xf32>
    %cst_17 = arith.constant dense<0.000000e+00> : vector<64x128xf32>
    %19 = tpu.matmul %17, %18, %cst_17 {dimension_numbers = #tpu.dot_dimension_numbers<[1], [0], [0], [1], [0, 0, 1, 1], [], []>} : vector<64x8xf32>, vector<8x128xf32>, vector<64x128xf32> -> vector<64x128xf32>
    %c0_18 = arith.constant 0 : index
    %c0_19 = arith.constant 0 : index
    %20 = vector.load %arg3[%c0_18, %c0_19] : memref<1x128xf32, #tpu.memory_space<vmem>>, vector<1x128xf32>
    %21 = vector.broadcast %20 : vector<1x128xf32> to vector<64x128xf32>
    %22 = arith.addf %19, %21 : vector<64x128xf32>
    %cst_20 = arith.constant 0.000000e+00 : f32
    %23 = vector.broadcast %cst_20 : f32 to vector<8x32xf32>
    %cst_21 = arith.constant 0.000000e+00 : f32
    %24 = vector.broadcast %cst_21 : f32 to vector<8x32xf32>
    %25 = vector.extract_strided_slice %22 {offsets = [0, 0], sizes = [8, 128], strides = [1, 1]} : vector<64x128xf32> to vector<8x128xf32>
    %26 = vector.extract_strided_slice %16 {offsets = [0, 0], sizes = [8, 32], strides = [1, 1]} : vector<64x32xf32> to vector<8x32xf32>
    %cst_22 = arith.constant dense<0.000000e+00> : vector<8x32xf32>
    %27 = tpu.matmul %24, %1, %cst_22 {dimension_numbers = #tpu.dot_dimension_numbers<[1], [0], [0], [1], [0, 0, 1, 1], [], []>} : vector<8x32xf32>, vector<32x32xf32>, vector<8x32xf32> -> vector<8x32xf32>
    %28 = arith.addf %27, %6 : vector<8x32xf32>
    %29 = math.tanh %28 : vector<8x32xf32>
    %30 = arith.subf %24, %29 : vector<8x32xf32>
    %31 = arith.mulf %29, %26 : vector<8x32xf32>
    %32 = arith.addf %30, %31 : vector<8x32xf32>
    %cst_23 = arith.constant dense<0.000000e+00> : vector<8x128xf32>
    %33 = tpu.matmul %23, %0, %cst_23 {dimension_numbers = #tpu.dot_dimension_numbers<[1], [0], [0], [1], [0, 0, 1, 1], [], []>} : vector<8x32xf32>, vector<32x128xf32>, vector<8x128xf32> -> vector<8x128xf32>
    %34 = arith.addf %25, %33 : vector<8x128xf32>
    %35 = arith.negf %34 : vector<8x128xf32>
    %36 = math.exp %35 : vector<8x128xf32>
    %cst_24 = arith.constant 1.000000e+00 : f32
    %37 = vector.broadcast %cst_24 : f32 to vector<8x128xf32>
    %38 = arith.addf %37, %36 : vector<8x128xf32>
    %39 = arith.divf %37, %38 : vector<8x128xf32>
    %40 = vector.extract_strided_slice %39 {offsets = [0, 0], sizes = [8, 32], strides = [1, 1]} : vector<8x128xf32> to vector<8x32xf32>
    %41 = vector.extract_strided_slice %39 {offsets = [0, 32], sizes = [8, 32], strides = [1, 1]} : vector<8x128xf32> to vector<8x32xf32>
    %42 = vector.extract_strided_slice %39 {offsets = [0, 64], sizes = [8, 32], strides = [1, 1]} : vector<8x128xf32> to vector<8x32xf32>
    %43 = vector.extract_strided_slice %34 {offsets = [0, 96], sizes = [8, 32], strides = [1, 1]} : vector<8x128xf32> to vector<8x32xf32>
    %44 = math.tanh %43 : vector<8x32xf32>
    %45 = arith.mulf %41, %32 : vector<8x32xf32>
    %46 = arith.mulf %40, %44 : vector<8x32xf32>
    %47 = arith.addf %45, %46 : vector<8x32xf32>
    %48 = math.tanh %47 : vector<8x32xf32>
    %49 = arith.mulf %42, %48 : vector<8x32xf32>
    %50 = vector.extract_strided_slice %22 {offsets = [8, 0], sizes = [8, 128], strides = [1, 1]} : vector<64x128xf32> to vector<8x128xf32>
    %51 = vector.extract_strided_slice %16 {offsets = [8, 0], sizes = [8, 32], strides = [1, 1]} : vector<64x32xf32> to vector<8x32xf32>
    %cst_25 = arith.constant dense<0.000000e+00> : vector<8x32xf32>
    %52 = tpu.matmul %47, %1, %cst_25 {dimension_numbers = #tpu.dot_dimension_numbers<[1], [0], [0], [1], [0, 0, 1, 1], [], []>} : vector<8x32xf32>, vector<32x32xf32>, vector<8x32xf32> -> vector<8x32xf32>
    %53 = arith.addf %52, %6 : vector<8x32xf32>
    %54 = math.tanh %53 : vector<8x32xf32>
    %55 = arith.subf %47, %54 : vector<8x32xf32>
    %56 = arith.mulf %54, %51 : vector<8x32xf32>
    %57 = arith.addf %55, %56 : vector<8x32xf32>
    %cst_26 = arith.constant dense<0.000000e+00> : vector<8x128xf32>
    %58 = tpu.matmul %49, %0, %cst_26 {dimension_numbers = #tpu.dot_dimension_numbers<[1], [0], [0], [1], [0, 0, 1, 1], [], []>} : vector<8x32xf32>, vector<32x128xf32>, vector<8x128xf32> -> vector<8x128xf32>
    %59 = arith.addf %50, %58 : vector<8x128xf32>
    %60 = arith.negf %59 : vector<8x128xf32>
    %61 = math.exp %60 : vector<8x128xf32>
    %cst_27 = arith.constant 1.000000e+00 : f32
    %62 = vector.broadcast %cst_27 : f32 to vector<8x128xf32>
    %63 = arith.addf %62, %61 : vector<8x128xf32>
    %64 = arith.divf %62, %63 : vector<8x128xf32>
    %65 = vector.extract_strided_slice %64 {offsets = [0, 0], sizes = [8, 32], strides = [1, 1]} : vector<8x128xf32> to vector<8x32xf32>
    %66 = vector.extract_strided_slice %64 {offsets = [0, 32], sizes = [8, 32], strides = [1, 1]} : vector<8x128xf32> to vector<8x32xf32>
    %67 = vector.extract_strided_slice %64 {offsets = [0, 64], sizes = [8, 32], strides = [1, 1]} : vector<8x128xf32> to vector<8x32xf32>
    %68 = vector.extract_strided_slice %59 {offsets = [0, 96], sizes = [8, 32], strides = [1, 1]} : vector<8x128xf32> to vector<8x32xf32>
    %69 = math.tanh %68 : vector<8x32xf32>
    %70 = arith.mulf %66, %57 : vector<8x32xf32>
    %71 = arith.mulf %65, %69 : vector<8x32xf32>
    %72 = arith.addf %70, %71 : vector<8x32xf32>
    %73 = math.tanh %72 : vector<8x32xf32>
    %74 = arith.mulf %67, %73 : vector<8x32xf32>
    %75 = vector.extract_strided_slice %22 {offsets = [16, 0], sizes = [8, 128], strides = [1, 1]} : vector<64x128xf32> to vector<8x128xf32>
    %76 = vector.extract_strided_slice %16 {offsets = [16, 0], sizes = [8, 32], strides = [1, 1]} : vector<64x32xf32> to vector<8x32xf32>
    %cst_28 = arith.constant dense<0.000000e+00> : vector<8x32xf32>
    %77 = tpu.matmul %72, %1, %cst_28 {dimension_numbers = #tpu.dot_dimension_numbers<[1], [0], [0], [1], [0, 0, 1, 1], [], []>} : vector<8x32xf32>, vector<32x32xf32>, vector<8x32xf32> -> vector<8x32xf32>
    %78 = arith.addf %77, %6 : vector<8x32xf32>
    %79 = math.tanh %78 : vector<8x32xf32>
    %80 = arith.subf %72, %79 : vector<8x32xf32>
    %81 = arith.mulf %79, %76 : vector<8x32xf32>
    %82 = arith.addf %80, %81 : vector<8x32xf32>
    %cst_29 = arith.constant dense<0.000000e+00> : vector<8x128xf32>
    %83 = tpu.matmul %74, %0, %cst_29 {dimension_numbers = #tpu.dot_dimension_numbers<[1], [0], [0], [1], [0, 0, 1, 1], [], []>} : vector<8x32xf32>, vector<32x128xf32>, vector<8x128xf32> -> vector<8x128xf32>
    %84 = arith.addf %75, %83 : vector<8x128xf32>
    %85 = arith.negf %84 : vector<8x128xf32>
    %86 = math.exp %85 : vector<8x128xf32>
    %cst_30 = arith.constant 1.000000e+00 : f32
    %87 = vector.broadcast %cst_30 : f32 to vector<8x128xf32>
    %88 = arith.addf %87, %86 : vector<8x128xf32>
    %89 = arith.divf %87, %88 : vector<8x128xf32>
    %90 = vector.extract_strided_slice %89 {offsets = [0, 0], sizes = [8, 32], strides = [1, 1]} : vector<8x128xf32> to vector<8x32xf32>
    %91 = vector.extract_strided_slice %89 {offsets = [0, 32], sizes = [8, 32], strides = [1, 1]} : vector<8x128xf32> to vector<8x32xf32>
    %92 = vector.extract_strided_slice %89 {offsets = [0, 64], sizes = [8, 32], strides = [1, 1]} : vector<8x128xf32> to vector<8x32xf32>
    %93 = vector.extract_strided_slice %84 {offsets = [0, 96], sizes = [8, 32], strides = [1, 1]} : vector<8x128xf32> to vector<8x32xf32>
    %94 = math.tanh %93 : vector<8x32xf32>
    %95 = arith.mulf %91, %82 : vector<8x32xf32>
    %96 = arith.mulf %90, %94 : vector<8x32xf32>
    %97 = arith.addf %95, %96 : vector<8x32xf32>
    %98 = math.tanh %97 : vector<8x32xf32>
    %99 = arith.mulf %92, %98 : vector<8x32xf32>
    %100 = vector.extract_strided_slice %22 {offsets = [24, 0], sizes = [8, 128], strides = [1, 1]} : vector<64x128xf32> to vector<8x128xf32>
    %101 = vector.extract_strided_slice %16 {offsets = [24, 0], sizes = [8, 32], strides = [1, 1]} : vector<64x32xf32> to vector<8x32xf32>
    %cst_31 = arith.constant dense<0.000000e+00> : vector<8x32xf32>
    %102 = tpu.matmul %97, %1, %cst_31 {dimension_numbers = #tpu.dot_dimension_numbers<[1], [0], [0], [1], [0, 0, 1, 1], [], []>} : vector<8x32xf32>, vector<32x32xf32>, vector<8x32xf32> -> vector<8x32xf32>
    %103 = arith.addf %102, %6 : vector<8x32xf32>
    %104 = math.tanh %103 : vector<8x32xf32>
    %105 = arith.subf %97, %104 : vector<8x32xf32>
    %106 = arith.mulf %104, %101 : vector<8x32xf32>
    %107 = arith.addf %105, %106 : vector<8x32xf32>
    %cst_32 = arith.constant dense<0.000000e+00> : vector<8x128xf32>
    %108 = tpu.matmul %99, %0, %cst_32 {dimension_numbers = #tpu.dot_dimension_numbers<[1], [0], [0], [1], [0, 0, 1, 1], [], []>} : vector<8x32xf32>, vector<32x128xf32>, vector<8x128xf32> -> vector<8x128xf32>
    %109 = arith.addf %100, %108 : vector<8x128xf32>
    %110 = arith.negf %109 : vector<8x128xf32>
    %111 = math.exp %110 : vector<8x128xf32>
    %cst_33 = arith.constant 1.000000e+00 : f32
    %112 = vector.broadcast %cst_33 : f32 to vector<8x128xf32>
    %113 = arith.addf %112, %111 : vector<8x128xf32>
    %114 = arith.divf %112, %113 : vector<8x128xf32>
    %115 = vector.extract_strided_slice %114 {offsets = [0, 0], sizes = [8, 32], strides = [1, 1]} : vector<8x128xf32> to vector<8x32xf32>
    %116 = vector.extract_strided_slice %114 {offsets = [0, 32], sizes = [8, 32], strides = [1, 1]} : vector<8x128xf32> to vector<8x32xf32>
    %117 = vector.extract_strided_slice %114 {offsets = [0, 64], sizes = [8, 32], strides = [1, 1]} : vector<8x128xf32> to vector<8x32xf32>
    %118 = vector.extract_strided_slice %109 {offsets = [0, 96], sizes = [8, 32], strides = [1, 1]} : vector<8x128xf32> to vector<8x32xf32>
    %119 = math.tanh %118 : vector<8x32xf32>
    %120 = arith.mulf %116, %107 : vector<8x32xf32>
    %121 = arith.mulf %115, %119 : vector<8x32xf32>
    %122 = arith.addf %120, %121 : vector<8x32xf32>
    %123 = math.tanh %122 : vector<8x32xf32>
    %124 = arith.mulf %117, %123 : vector<8x32xf32>
    %125 = vector.extract_strided_slice %22 {offsets = [32, 0], sizes = [8, 128], strides = [1, 1]} : vector<64x128xf32> to vector<8x128xf32>
    %126 = vector.extract_strided_slice %16 {offsets = [32, 0], sizes = [8, 32], strides = [1, 1]} : vector<64x32xf32> to vector<8x32xf32>
    %cst_34 = arith.constant dense<0.000000e+00> : vector<8x32xf32>
    %127 = tpu.matmul %122, %1, %cst_34 {dimension_numbers = #tpu.dot_dimension_numbers<[1], [0], [0], [1], [0, 0, 1, 1], [], []>} : vector<8x32xf32>, vector<32x32xf32>, vector<8x32xf32> -> vector<8x32xf32>
    %128 = arith.addf %127, %6 : vector<8x32xf32>
    %129 = math.tanh %128 : vector<8x32xf32>
    %130 = arith.subf %122, %129 : vector<8x32xf32>
    %131 = arith.mulf %129, %126 : vector<8x32xf32>
    %132 = arith.addf %130, %131 : vector<8x32xf32>
    %cst_35 = arith.constant dense<0.000000e+00> : vector<8x128xf32>
    %133 = tpu.matmul %124, %0, %cst_35 {dimension_numbers = #tpu.dot_dimension_numbers<[1], [0], [0], [1], [0, 0, 1, 1], [], []>} : vector<8x32xf32>, vector<32x128xf32>, vector<8x128xf32> -> vector<8x128xf32>
    %134 = arith.addf %125, %133 : vector<8x128xf32>
    %135 = arith.negf %134 : vector<8x128xf32>
    %136 = math.exp %135 : vector<8x128xf32>
    %cst_36 = arith.constant 1.000000e+00 : f32
    %137 = vector.broadcast %cst_36 : f32 to vector<8x128xf32>
    %138 = arith.addf %137, %136 : vector<8x128xf32>
    %139 = arith.divf %137, %138 : vector<8x128xf32>
    %140 = vector.extract_strided_slice %139 {offsets = [0, 0], sizes = [8, 32], strides = [1, 1]} : vector<8x128xf32> to vector<8x32xf32>
    %141 = vector.extract_strided_slice %139 {offsets = [0, 32], sizes = [8, 32], strides = [1, 1]} : vector<8x128xf32> to vector<8x32xf32>
    %142 = vector.extract_strided_slice %139 {offsets = [0, 64], sizes = [8, 32], strides = [1, 1]} : vector<8x128xf32> to vector<8x32xf32>
    %143 = vector.extract_strided_slice %134 {offsets = [0, 96], sizes = [8, 32], strides = [1, 1]} : vector<8x128xf32> to vector<8x32xf32>
    %144 = math.tanh %143 : vector<8x32xf32>
    %145 = arith.mulf %141, %132 : vector<8x32xf32>
    %146 = arith.mulf %140, %144 : vector<8x32xf32>
    %147 = arith.addf %145, %146 : vector<8x32xf32>
    %148 = math.tanh %147 : vector<8x32xf32>
    %149 = arith.mulf %142, %148 : vector<8x32xf32>
    %150 = vector.extract_strided_slice %22 {offsets = [40, 0], sizes = [8, 128], strides = [1, 1]} : vector<64x128xf32> to vector<8x128xf32>
    %151 = vector.extract_strided_slice %16 {offsets = [40, 0], sizes = [8, 32], strides = [1, 1]} : vector<64x32xf32> to vector<8x32xf32>
    %cst_37 = arith.constant dense<0.000000e+00> : vector<8x32xf32>
    %152 = tpu.matmul %147, %1, %cst_37 {dimension_numbers = #tpu.dot_dimension_numbers<[1], [0], [0], [1], [0, 0, 1, 1], [], []>} : vector<8x32xf32>, vector<32x32xf32>, vector<8x32xf32> -> vector<8x32xf32>
    %153 = arith.addf %152, %6 : vector<8x32xf32>
    %154 = math.tanh %153 : vector<8x32xf32>
    %155 = arith.subf %147, %154 : vector<8x32xf32>
    %156 = arith.mulf %154, %151 : vector<8x32xf32>
    %157 = arith.addf %155, %156 : vector<8x32xf32>
    %cst_38 = arith.constant dense<0.000000e+00> : vector<8x128xf32>
    %158 = tpu.matmul %149, %0, %cst_38 {dimension_numbers = #tpu.dot_dimension_numbers<[1], [0], [0], [1], [0, 0, 1, 1], [], []>} : vector<8x32xf32>, vector<32x128xf32>, vector<8x128xf32> -> vector<8x128xf32>
    %159 = arith.addf %150, %158 : vector<8x128xf32>
    %160 = arith.negf %159 : vector<8x128xf32>
    %161 = math.exp %160 : vector<8x128xf32>
    %cst_39 = arith.constant 1.000000e+00 : f32
    %162 = vector.broadcast %cst_39 : f32 to vector<8x128xf32>
    %163 = arith.addf %162, %161 : vector<8x128xf32>
    %164 = arith.divf %162, %163 : vector<8x128xf32>
    %165 = vector.extract_strided_slice %164 {offsets = [0, 0], sizes = [8, 32], strides = [1, 1]} : vector<8x128xf32> to vector<8x32xf32>
    %166 = vector.extract_strided_slice %164 {offsets = [0, 32], sizes = [8, 32], strides = [1, 1]} : vector<8x128xf32> to vector<8x32xf32>
    %167 = vector.extract_strided_slice %164 {offsets = [0, 64], sizes = [8, 32], strides = [1, 1]} : vector<8x128xf32> to vector<8x32xf32>
    %168 = vector.extract_strided_slice %159 {offsets = [0, 96], sizes = [8, 32], strides = [1, 1]} : vector<8x128xf32> to vector<8x32xf32>
    %169 = math.tanh %168 : vector<8x32xf32>
    %170 = arith.mulf %166, %157 : vector<8x32xf32>
    %171 = arith.mulf %165, %169 : vector<8x32xf32>
    %172 = arith.addf %170, %171 : vector<8x32xf32>
    %173 = math.tanh %172 : vector<8x32xf32>
    %174 = arith.mulf %167, %173 : vector<8x32xf32>
    %175 = vector.extract_strided_slice %22 {offsets = [48, 0], sizes = [8, 128], strides = [1, 1]} : vector<64x128xf32> to vector<8x128xf32>
    %176 = vector.extract_strided_slice %16 {offsets = [48, 0], sizes = [8, 32], strides = [1, 1]} : vector<64x32xf32> to vector<8x32xf32>
    %cst_40 = arith.constant dense<0.000000e+00> : vector<8x32xf32>
    %177 = tpu.matmul %172, %1, %cst_40 {dimension_numbers = #tpu.dot_dimension_numbers<[1], [0], [0], [1], [0, 0, 1, 1], [], []>} : vector<8x32xf32>, vector<32x32xf32>, vector<8x32xf32> -> vector<8x32xf32>
    %178 = arith.addf %177, %6 : vector<8x32xf32>
    %179 = math.tanh %178 : vector<8x32xf32>
    %180 = arith.subf %172, %179 : vector<8x32xf32>
    %181 = arith.mulf %179, %176 : vector<8x32xf32>
    %182 = arith.addf %180, %181 : vector<8x32xf32>
    %cst_41 = arith.constant dense<0.000000e+00> : vector<8x128xf32>
    %183 = tpu.matmul %174, %0, %cst_41 {dimension_numbers = #tpu.dot_dimension_numbers<[1], [0], [0], [1], [0, 0, 1, 1], [], []>} : vector<8x32xf32>, vector<32x128xf32>, vector<8x128xf32> -> vector<8x128xf32>
    %184 = arith.addf %175, %183 : vector<8x128xf32>
    %185 = arith.negf %184 : vector<8x128xf32>
    %186 = math.exp %185 : vector<8x128xf32>
    %cst_42 = arith.constant 1.000000e+00 : f32
    %187 = vector.broadcast %cst_42 : f32 to vector<8x128xf32>
    %188 = arith.addf %187, %186 : vector<8x128xf32>
    %189 = arith.divf %187, %188 : vector<8x128xf32>
    %190 = vector.extract_strided_slice %189 {offsets = [0, 0], sizes = [8, 32], strides = [1, 1]} : vector<8x128xf32> to vector<8x32xf32>
    %191 = vector.extract_strided_slice %189 {offsets = [0, 32], sizes = [8, 32], strides = [1, 1]} : vector<8x128xf32> to vector<8x32xf32>
    %192 = vector.extract_strided_slice %189 {offsets = [0, 64], sizes = [8, 32], strides = [1, 1]} : vector<8x128xf32> to vector<8x32xf32>
    %193 = vector.extract_strided_slice %184 {offsets = [0, 96], sizes = [8, 32], strides = [1, 1]} : vector<8x128xf32> to vector<8x32xf32>
    %194 = math.tanh %193 : vector<8x32xf32>
    %195 = arith.mulf %191, %182 : vector<8x32xf32>
    %196 = arith.mulf %190, %194 : vector<8x32xf32>
    %197 = arith.addf %195, %196 : vector<8x32xf32>
    %198 = math.tanh %197 : vector<8x32xf32>
    %199 = arith.mulf %192, %198 : vector<8x32xf32>
    %200 = vector.extract_strided_slice %22 {offsets = [56, 0], sizes = [8, 128], strides = [1, 1]} : vector<64x128xf32> to vector<8x128xf32>
    %201 = vector.extract_strided_slice %16 {offsets = [56, 0], sizes = [8, 32], strides = [1, 1]} : vector<64x32xf32> to vector<8x32xf32>
    %cst_43 = arith.constant dense<0.000000e+00> : vector<8x32xf32>
    %202 = tpu.matmul %197, %1, %cst_43 {dimension_numbers = #tpu.dot_dimension_numbers<[1], [0], [0], [1], [0, 0, 1, 1], [], []>} : vector<8x32xf32>, vector<32x32xf32>, vector<8x32xf32> -> vector<8x32xf32>
    %203 = arith.addf %202, %6 : vector<8x32xf32>
    %204 = math.tanh %203 : vector<8x32xf32>
    %205 = arith.subf %197, %204 : vector<8x32xf32>
    %206 = arith.mulf %204, %201 : vector<8x32xf32>
    %207 = arith.addf %205, %206 : vector<8x32xf32>
    %cst_44 = arith.constant dense<0.000000e+00> : vector<8x128xf32>
    %208 = tpu.matmul %199, %0, %cst_44 {dimension_numbers = #tpu.dot_dimension_numbers<[1], [0], [0], [1], [0, 0, 1, 1], [], []>} : vector<8x32xf32>, vector<32x128xf32>, vector<8x128xf32> -> vector<8x128xf32>
    %209 = arith.addf %200, %208 : vector<8x128xf32>
    %210 = arith.negf %209 : vector<8x128xf32>
    %211 = math.exp %210 : vector<8x128xf32>
    %cst_45 = arith.constant 1.000000e+00 : f32
    %212 = vector.broadcast %cst_45 : f32 to vector<8x128xf32>
    %213 = arith.addf %212, %211 : vector<8x128xf32>
    %214 = arith.divf %212, %213 : vector<8x128xf32>
    %215 = vector.extract_strided_slice %214 {offsets = [0, 0], sizes = [8, 32], strides = [1, 1]} : vector<8x128xf32> to vector<8x32xf32>
    %216 = vector.extract_strided_slice %214 {offsets = [0, 32], sizes = [8, 32], strides = [1, 1]} : vector<8x128xf32> to vector<8x32xf32>
    %217 = vector.extract_strided_slice %214 {offsets = [0, 64], sizes = [8, 32], strides = [1, 1]} : vector<8x128xf32> to vector<8x32xf32>
    %218 = vector.extract_strided_slice %209 {offsets = [0, 96], sizes = [8, 32], strides = [1, 1]} : vector<8x128xf32> to vector<8x32xf32>
    %219 = math.tanh %218 : vector<8x32xf32>
    %220 = arith.mulf %216, %207 : vector<8x32xf32>
    %221 = arith.mulf %215, %219 : vector<8x32xf32>
    %222 = arith.addf %220, %221 : vector<8x32xf32>
    %223 = math.tanh %222 : vector<8x32xf32>
    %224 = arith.mulf %217, %223 : vector<8x32xf32>
    %c0_46 = arith.constant 0 : index
    %c0_47 = arith.constant 0 : index
    %225 = vector.load %arg7[%c0_46, %c0_47] : memref<32x16xf32, #tpu.memory_space<vmem>>, vector<32x16xf32>
    %cst_48 = arith.constant dense<0.000000e+00> : vector<8x16xf32>
    %226 = tpu.matmul %224, %225, %cst_48 {dimension_numbers = #tpu.dot_dimension_numbers<[1], [0], [0], [1], [0, 0, 1, 1], [], []>} : vector<8x32xf32>, vector<32x16xf32>, vector<8x16xf32> -> vector<8x16xf32>
    %c0_49 = arith.constant 0 : index
    %c0_50 = arith.constant 0 : index
    %227 = vector.load %arg8[%c0_49, %c0_50] : memref<1x16xf32, #tpu.memory_space<vmem>>, vector<1x16xf32>
    %228 = vector.broadcast %227 : vector<1x16xf32> to vector<8x16xf32>
    %229 = arith.addf %226, %228 : vector<8x16xf32>
    %cst_51 = arith.constant 0.000000e+00 : f32
    %230 = vector.broadcast %cst_51 : f32 to vector<8x16xf32>
    %231 = arith.maximumf %229, %230 : vector<8x16xf32>
    %c0_52 = arith.constant 0 : index
    %c0_53 = arith.constant 0 : index
    %232 = vector.load %arg17[%c0_52, %c0_53] : memref<8x16xf32, #tpu.memory_space<vmem>>, vector<8x16xf32>
    tpu.vector_store %arg17[%c0_52, %c0_53], %231 {strides = array<i32>} : memref<8x16xf32, #tpu.memory_space<vmem>>, vector<8x16xf32>,
    %c0_54 = arith.constant 0 : index
    %c0_55 = arith.constant 0 : index
    %233 = vector.load %arg9[%c0_54, %c0_55] : memref<16x128xf32, #tpu.memory_space<vmem>>, vector<16x128xf32>
    %cst_56 = arith.constant dense<0.000000e+00> : vector<8x128xf32>
    %234 = tpu.matmul %231, %233, %cst_56 {dimension_numbers = #tpu.dot_dimension_numbers<[1], [0], [0], [1], [0, 0, 1, 1], [], []>} : vector<8x16xf32>, vector<16x128xf32>, vector<8x128xf32> -> vector<8x128xf32>
    %c0_57 = arith.constant 0 : index
    %c0_58 = arith.constant 0 : index
    %235 = vector.load %arg10[%c0_57, %c0_58] : memref<1x128xf32, #tpu.memory_space<vmem>>, vector<1x128xf32>
    %236 = vector.broadcast %235 : vector<1x128xf32> to vector<8x128xf32>
    %237 = arith.addf %234, %236 : vector<8x128xf32>
    %cst_59 = arith.constant 0.000000e+00 : f32
    %238 = vector.broadcast %cst_59 : f32 to vector<8x32xf32>
    %cst_60 = arith.constant 0.000000e+00 : f32
    %239 = vector.broadcast %cst_60 : f32 to vector<8x32xf32>
    %240 = vector.extract_strided_slice %16 {offsets = [0, 0], sizes = [8, 32], strides = [1, 1]} : vector<64x32xf32> to vector<8x32xf32>
    %cst_61 = arith.constant dense<0.000000e+00> : vector<8x32xf32>
    %241 = tpu.matmul %239, %3, %cst_61 {dimension_numbers = #tpu.dot_dimension_numbers<[1], [0], [0], [1], [0, 0, 1, 1], [], []>} : vector<8x32xf32>, vector<32x32xf32>, vector<8x32xf32> -> vector<8x32xf32>
    %242 = arith.addf %241, %9 : vector<8x32xf32>
    %243 = math.tanh %242 : vector<8x32xf32>
    %244 = arith.subf %239, %243 : vector<8x32xf32>
    %245 = arith.mulf %243, %240 : vector<8x32xf32>
    %246 = arith.addf %244, %245 : vector<8x32xf32>
    %cst_62 = arith.constant dense<0.000000e+00> : vector<8x128xf32>
    %247 = tpu.matmul %238, %2, %cst_62 {dimension_numbers = #tpu.dot_dimension_numbers<[1], [0], [0], [1], [0, 0, 1, 1], [], []>} : vector<8x32xf32>, vector<32x128xf32>, vector<8x128xf32> -> vector<8x128xf32>
    %248 = arith.addf %237, %247 : vector<8x128xf32>
    %249 = arith.negf %248 : vector<8x128xf32>
    %250 = math.exp %249 : vector<8x128xf32>
    %cst_63 = arith.constant 1.000000e+00 : f32
    %251 = vector.broadcast %cst_63 : f32 to vector<8x128xf32>
    %252 = arith.addf %251, %250 : vector<8x128xf32>
    %253 = arith.divf %251, %252 : vector<8x128xf32>
    %254 = vector.extract_strided_slice %253 {offsets = [0, 0], sizes = [8, 32], strides = [1, 1]} : vector<8x128xf32> to vector<8x32xf32>
    %255 = vector.extract_strided_slice %253 {offsets = [0, 32], sizes = [8, 32], strides = [1, 1]} : vector<8x128xf32> to vector<8x32xf32>
    %256 = vector.extract_strided_slice %253 {offsets = [0, 64], sizes = [8, 32], strides = [1, 1]} : vector<8x128xf32> to vector<8x32xf32>
    %257 = vector.extract_strided_slice %248 {offsets = [0, 96], sizes = [8, 32], strides = [1, 1]} : vector<8x128xf32> to vector<8x32xf32>
    %258 = math.tanh %257 : vector<8x32xf32>
    %259 = arith.mulf %255, %246 : vector<8x32xf32>
    %260 = arith.mulf %254, %258 : vector<8x32xf32>
    %261 = arith.addf %259, %260 : vector<8x32xf32>
    %262 = math.tanh %261 : vector<8x32xf32>
    %263 = arith.mulf %256, %262 : vector<8x32xf32>
    %264 = vector.extract_strided_slice %16 {offsets = [8, 0], sizes = [8, 32], strides = [1, 1]} : vector<64x32xf32> to vector<8x32xf32>
    %cst_64 = arith.constant dense<0.000000e+00> : vector<8x32xf32>
    %265 = tpu.matmul %261, %3, %cst_64 {dimension_numbers = #tpu.dot_dimension_numbers<[1], [0], [0], [1], [0, 0, 1, 1], [], []>} : vector<8x32xf32>, vector<32x32xf32>, vector<8x32xf32> -> vector<8x32xf32>
    %266 = arith.addf %265, %9 : vector<8x32xf32>
    %267 = math.tanh %266 : vector<8x32xf32>
    %268 = arith.subf %261, %267 : vector<8x32xf32>
    %269 = arith.mulf %267, %264 : vector<8x32xf32>
    %270 = arith.addf %268, %269 : vector<8x32xf32>
    %cst_65 = arith.constant dense<0.000000e+00> : vector<8x128xf32>
    %271 = tpu.matmul %263, %2, %cst_65 {dimension_numbers = #tpu.dot_dimension_numbers<[1], [0], [0], [1], [0, 0, 1, 1], [], []>} : vector<8x32xf32>, vector<32x128xf32>, vector<8x128xf32> -> vector<8x128xf32>
    %272 = arith.addf %237, %271 : vector<8x128xf32>
    %273 = arith.negf %272 : vector<8x128xf32>
    %274 = math.exp %273 : vector<8x128xf32>
    %cst_66 = arith.constant 1.000000e+00 : f32
    %275 = vector.broadcast %cst_66 : f32 to vector<8x128xf32>
    %276 = arith.addf %275, %274 : vector<8x128xf32>
    %277 = arith.divf %275, %276 : vector<8x128xf32>
    %278 = vector.extract_strided_slice %277 {offsets = [0, 0], sizes = [8, 32], strides = [1, 1]} : vector<8x128xf32> to vector<8x32xf32>
    %279 = vector.extract_strided_slice %277 {offsets = [0, 32], sizes = [8, 32], strides = [1, 1]} : vector<8x128xf32> to vector<8x32xf32>
    %280 = vector.extract_strided_slice %277 {offsets = [0, 64], sizes = [8, 32], strides = [1, 1]} : vector<8x128xf32> to vector<8x32xf32>
    %281 = vector.extract_strided_slice %272 {offsets = [0, 96], sizes = [8, 32], strides = [1, 1]} : vector<8x128xf32> to vector<8x32xf32>
    %282 = math.tanh %281 : vector<8x32xf32>
    %283 = arith.mulf %279, %270 : vector<8x32xf32>
    %284 = arith.mulf %278, %282 : vector<8x32xf32>
    %285 = arith.addf %283, %284 : vector<8x32xf32>
    %286 = math.tanh %285 : vector<8x32xf32>
    %287 = arith.mulf %280, %286 : vector<8x32xf32>
    %288 = vector.extract_strided_slice %16 {offsets = [16, 0], sizes = [8, 32], strides = [1, 1]} : vector<64x32xf32> to vector<8x32xf32>
    %cst_67 = arith.constant dense<0.000000e+00> : vector<8x32xf32>
    %289 = tpu.matmul %285, %3, %cst_67 {dimension_numbers = #tpu.dot_dimension_numbers<[1], [0], [0], [1], [0, 0, 1, 1], [], []>} : vector<8x32xf32>, vector<32x32xf32>, vector<8x32xf32> -> vector<8x32xf32>
    %290 = arith.addf %289, %9 : vector<8x32xf32>
    %291 = math.tanh %290 : vector<8x32xf32>
    %292 = arith.subf %285, %291 : vector<8x32xf32>
    %293 = arith.mulf %291, %288 : vector<8x32xf32>
    %294 = arith.addf %292, %293 : vector<8x32xf32>
    %cst_68 = arith.constant dense<0.000000e+00> : vector<8x128xf32>
    %295 = tpu.matmul %287, %2, %cst_68 {dimension_numbers = #tpu.dot_dimension_numbers<[1], [0], [0], [1], [0, 0, 1, 1], [], []>} : vector<8x32xf32>, vector<32x128xf32>, vector<8x128xf32> -> vector<8x128xf32>
    %296 = arith.addf %237, %295 : vector<8x128xf32>
    %297 = arith.negf %296 : vector<8x128xf32>
    %298 = math.exp %297 : vector<8x128xf32>
    %cst_69 = arith.constant 1.000000e+00 : f32
    %299 = vector.broadcast %cst_69 : f32 to vector<8x128xf32>
    %300 = arith.addf %299, %298 : vector<8x128xf32>
    %301 = arith.divf %299, %300 : vector<8x128xf32>
    %302 = vector.extract_strided_slice %301 {offsets = [0, 0], sizes = [8, 32], strides = [1, 1]} : vector<8x128xf32> to vector<8x32xf32>
    %303 = vector.extract_strided_slice %301 {offsets = [0, 32], sizes = [8, 32], strides = [1, 1]} : vector<8x128xf32> to vector<8x32xf32>
    %304 = vector.extract_strided_slice %301 {offsets = [0, 64], sizes = [8, 32], strides = [1, 1]} : vector<8x128xf32> to vector<8x32xf32>
    %305 = vector.extract_strided_slice %296 {offsets = [0, 96], sizes = [8, 32], strides = [1, 1]} : vector<8x128xf32> to vector<8x32xf32>
    %306 = math.tanh %305 : vector<8x32xf32>
    %307 = arith.mulf %303, %294 : vector<8x32xf32>
    %308 = arith.mulf %302, %306 : vector<8x32xf32>
    %309 = arith.addf %307, %308 : vector<8x32xf32>
    %310 = math.tanh %309 : vector<8x32xf32>
    %311 = arith.mulf %304, %310 : vector<8x32xf32>
    %312 = vector.extract_strided_slice %16 {offsets = [24, 0], sizes = [8, 32], strides = [1, 1]} : vector<64x32xf32> to vector<8x32xf32>
    %cst_70 = arith.constant dense<0.000000e+00> : vector<8x32xf32>
    %313 = tpu.matmul %309, %3, %cst_70 {dimension_numbers = #tpu.dot_dimension_numbers<[1], [0], [0], [1], [0, 0, 1, 1], [], []>} : vector<8x32xf32>, vector<32x32xf32>, vector<8x32xf32> -> vector<8x32xf32>
    %314 = arith.addf %313, %9 : vector<8x32xf32>
    %315 = math.tanh %314 : vector<8x32xf32>
    %316 = arith.subf %309, %315 : vector<8x32xf32>
    %317 = arith.mulf %315, %312 : vector<8x32xf32>
    %318 = arith.addf %316, %317 : vector<8x32xf32>
    %cst_71 = arith.constant dense<0.000000e+00> : vector<8x128xf32>
    %319 = tpu.matmul %311, %2, %cst_71 {dimension_numbers = #tpu.dot_dimension_numbers<[1], [0], [0], [1], [0, 0, 1, 1], [], []>} : vector<8x32xf32>, vector<32x128xf32>, vector<8x128xf32> -> vector<8x128xf32>
    %320 = arith.addf %237, %319 : vector<8x128xf32>
    %321 = arith.negf %320 : vector<8x128xf32>
    %322 = math.exp %321 : vector<8x128xf32>
    %cst_72 = arith.constant 1.000000e+00 : f32
    %323 = vector.broadcast %cst_72 : f32 to vector<8x128xf32>
    %324 = arith.addf %323, %322 : vector<8x128xf32>
    %325 = arith.divf %323, %324 : vector<8x128xf32>
    %326 = vector.extract_strided_slice %325 {offsets = [0, 0], sizes = [8, 32], strides = [1, 1]} : vector<8x128xf32> to vector<8x32xf32>
    %327 = vector.extract_strided_slice %325 {offsets = [0, 32], sizes = [8, 32], strides = [1, 1]} : vector<8x128xf32> to vector<8x32xf32>
    %328 = vector.extract_strided_slice %325 {offsets = [0, 64], sizes = [8, 32], strides = [1, 1]} : vector<8x128xf32> to vector<8x32xf32>
    %329 = vector.extract_strided_slice %320 {offsets = [0, 96], sizes = [8, 32], strides = [1, 1]} : vector<8x128xf32> to vector<8x32xf32>
    %330 = math.tanh %329 : vector<8x32xf32>
    %331 = arith.mulf %327, %318 : vector<8x32xf32>
    %332 = arith.mulf %326, %330 : vector<8x32xf32>
    %333 = arith.addf %331, %332 : vector<8x32xf32>
    %334 = math.tanh %333 : vector<8x32xf32>
    %335 = arith.mulf %328, %334 : vector<8x32xf32>
    %336 = vector.extract_strided_slice %16 {offsets = [32, 0], sizes = [8, 32], strides = [1, 1]} : vector<64x32xf32> to vector<8x32xf32>
    %cst_73 = arith.constant dense<0.000000e+00> : vector<8x32xf32>
    %337 = tpu.matmul %333, %3, %cst_73 {dimension_numbers = #tpu.dot_dimension_numbers<[1], [0], [0], [1], [0, 0, 1, 1], [], []>} : vector<8x32xf32>, vector<32x32xf32>, vector<8x32xf32> -> vector<8x32xf32>
    %338 = arith.addf %337, %9 : vector<8x32xf32>
    %339 = math.tanh %338 : vector<8x32xf32>
    %340 = arith.subf %333, %339 : vector<8x32xf32>
    %341 = arith.mulf %339, %336 : vector<8x32xf32>
    %342 = arith.addf %340, %341 : vector<8x32xf32>
    %cst_74 = arith.constant dense<0.000000e+00> : vector<8x128xf32>
    %343 = tpu.matmul %335, %2, %cst_74 {dimension_numbers = #tpu.dot_dimension_numbers<[1], [0], [0], [1], [0, 0, 1, 1], [], []>} : vector<8x32xf32>, vector<32x128xf32>, vector<8x128xf32> -> vector<8x128xf32>
    %344 = arith.addf %237, %343 : vector<8x128xf32>
    %345 = arith.negf %344 : vector<8x128xf32>
    %346 = math.exp %345 : vector<8x128xf32>
    %cst_75 = arith.constant 1.000000e+00 : f32
    %347 = vector.broadcast %cst_75 : f32 to vector<8x128xf32>
    %348 = arith.addf %347, %346 : vector<8x128xf32>
    %349 = arith.divf %347, %348 : vector<8x128xf32>
    %350 = vector.extract_strided_slice %349 {offsets = [0, 0], sizes = [8, 32], strides = [1, 1]} : vector<8x128xf32> to vector<8x32xf32>
    %351 = vector.extract_strided_slice %349 {offsets = [0, 32], sizes = [8, 32], strides = [1, 1]} : vector<8x128xf32> to vector<8x32xf32>
    %352 = vector.extract_strided_slice %349 {offsets = [0, 64], sizes = [8, 32], strides = [1, 1]} : vector<8x128xf32> to vector<8x32xf32>
    %353 = vector.extract_strided_slice %344 {offsets = [0, 96], sizes = [8, 32], strides = [1, 1]} : vector<8x128xf32> to vector<8x32xf32>
    %354 = math.tanh %353 : vector<8x32xf32>
    %355 = arith.mulf %351, %342 : vector<8x32xf32>
    %356 = arith.mulf %350, %354 : vector<8x32xf32>
    %357 = arith.addf %355, %356 : vector<8x32xf32>
    %358 = math.tanh %357 : vector<8x32xf32>
    %359 = arith.mulf %352, %358 : vector<8x32xf32>
    %360 = vector.extract_strided_slice %16 {offsets = [40, 0], sizes = [8, 32], strides = [1, 1]} : vector<64x32xf32> to vector<8x32xf32>
    %cst_76 = arith.constant dense<0.000000e+00> : vector<8x32xf32>
    %361 = tpu.matmul %357, %3, %cst_76 {dimension_numbers = #tpu.dot_dimension_numbers<[1], [0], [0], [1], [0, 0, 1, 1], [], []>} : vector<8x32xf32>, vector<32x32xf32>, vector<8x32xf32> -> vector<8x32xf32>
    %362 = arith.addf %361, %9 : vector<8x32xf32>
    %363 = math.tanh %362 : vector<8x32xf32>
    %364 = arith.subf %357, %363 : vector<8x32xf32>
    %365 = arith.mulf %363, %360 : vector<8x32xf32>
    %366 = arith.addf %364, %365 : vector<8x32xf32>
    %cst_77 = arith.constant dense<0.000000e+00> : vector<8x128xf32>
    %367 = tpu.matmul %359, %2, %cst_77 {dimension_numbers = #tpu.dot_dimension_numbers<[1], [0], [0], [1], [0, 0, 1, 1], [], []>} : vector<8x32xf32>, vector<32x128xf32>, vector<8x128xf32> -> vector<8x128xf32>
    %368 = arith.addf %237, %367 : vector<8x128xf32>
    %369 = arith.negf %368 : vector<8x128xf32>
    %370 = math.exp %369 : vector<8x128xf32>
    %cst_78 = arith.constant 1.000000e+00 : f32
    %371 = vector.broadcast %cst_78 : f32 to vector<8x128xf32>
    %372 = arith.addf %371, %370 : vector<8x128xf32>
    %373 = arith.divf %371, %372 : vector<8x128xf32>
    %374 = vector.extract_strided_slice %373 {offsets = [0, 0], sizes = [8, 32], strides = [1, 1]} : vector<8x128xf32> to vector<8x32xf32>
    %375 = vector.extract_strided_slice %373 {offsets = [0, 32], sizes = [8, 32], strides = [1, 1]} : vector<8x128xf32> to vector<8x32xf32>
    %376 = vector.extract_strided_slice %373 {offsets = [0, 64], sizes = [8, 32], strides = [1, 1]} : vector<8x128xf32> to vector<8x32xf32>
    %377 = vector.extract_strided_slice %368 {offsets = [0, 96], sizes = [8, 32], strides = [1, 1]} : vector<8x128xf32> to vector<8x32xf32>
    %378 = math.tanh %377 : vector<8x32xf32>
    %379 = arith.mulf %375, %366 : vector<8x32xf32>
    %380 = arith.mulf %374, %378 : vector<8x32xf32>
    %381 = arith.addf %379, %380 : vector<8x32xf32>
    %382 = math.tanh %381 : vector<8x32xf32>
    %383 = arith.mulf %376, %382 : vector<8x32xf32>
    %384 = vector.extract_strided_slice %16 {offsets = [48, 0], sizes = [8, 32], strides = [1, 1]} : vector<64x32xf32> to vector<8x32xf32>
    %cst_79 = arith.constant dense<0.000000e+00> : vector<8x32xf32>
    %385 = tpu.matmul %381, %3, %cst_79 {dimension_numbers = #tpu.dot_dimension_numbers<[1], [0], [0], [1], [0, 0, 1, 1], [], []>} : vector<8x32xf32>, vector<32x32xf32>, vector<8x32xf32> -> vector<8x32xf32>
    %386 = arith.addf %385, %9 : vector<8x32xf32>
    %387 = math.tanh %386 : vector<8x32xf32>
    %388 = arith.subf %381, %387 : vector<8x32xf32>
    %389 = arith.mulf %387, %384 : vector<8x32xf32>
    %390 = arith.addf %388, %389 : vector<8x32xf32>
    %cst_80 = arith.constant dense<0.000000e+00> : vector<8x128xf32>
    %391 = tpu.matmul %383, %2, %cst_80 {dimension_numbers = #tpu.dot_dimension_numbers<[1], [0], [0], [1], [0, 0, 1, 1], [], []>} : vector<8x32xf32>, vector<32x128xf32>, vector<8x128xf32> -> vector<8x128xf32>
    %392 = arith.addf %237, %391 : vector<8x128xf32>
    %393 = arith.negf %392 : vector<8x128xf32>
    %394 = math.exp %393 : vector<8x128xf32>
    %cst_81 = arith.constant 1.000000e+00 : f32
    %395 = vector.broadcast %cst_81 : f32 to vector<8x128xf32>
    %396 = arith.addf %395, %394 : vector<8x128xf32>
    %397 = arith.divf %395, %396 : vector<8x128xf32>
    %398 = vector.extract_strided_slice %397 {offsets = [0, 0], sizes = [8, 32], strides = [1, 1]} : vector<8x128xf32> to vector<8x32xf32>
    %399 = vector.extract_strided_slice %397 {offsets = [0, 32], sizes = [8, 32], strides = [1, 1]} : vector<8x128xf32> to vector<8x32xf32>
    %400 = vector.extract_strided_slice %397 {offsets = [0, 64], sizes = [8, 32], strides = [1, 1]} : vector<8x128xf32> to vector<8x32xf32>
    %401 = vector.extract_strided_slice %392 {offsets = [0, 96], sizes = [8, 32], strides = [1, 1]} : vector<8x128xf32> to vector<8x32xf32>
    %402 = math.tanh %401 : vector<8x32xf32>
    %403 = arith.mulf %399, %390 : vector<8x32xf32>
    %404 = arith.mulf %398, %402 : vector<8x32xf32>
    %405 = arith.addf %403, %404 : vector<8x32xf32>
    %406 = math.tanh %405 : vector<8x32xf32>
    %407 = arith.mulf %400, %406 : vector<8x32xf32>
    %408 = vector.extract_strided_slice %16 {offsets = [56, 0], sizes = [8, 32], strides = [1, 1]} : vector<64x32xf32> to vector<8x32xf32>
    %cst_82 = arith.constant dense<0.000000e+00> : vector<8x32xf32>
    %409 = tpu.matmul %405, %3, %cst_82 {dimension_numbers = #tpu.dot_dimension_numbers<[1], [0], [0], [1], [0, 0, 1, 1], [], []>} : vector<8x32xf32>, vector<32x32xf32>, vector<8x32xf32> -> vector<8x32xf32>
    %410 = arith.addf %409, %9 : vector<8x32xf32>
    %411 = math.tanh %410 : vector<8x32xf32>
    %412 = arith.subf %405, %411 : vector<8x32xf32>
    %413 = arith.mulf %411, %408 : vector<8x32xf32>
    %414 = arith.addf %412, %413 : vector<8x32xf32>
    %cst_83 = arith.constant dense<0.000000e+00> : vector<8x128xf32>
    %415 = tpu.matmul %407, %2, %cst_83 {dimension_numbers = #tpu.dot_dimension_numbers<[1], [0], [0], [1], [0, 0, 1, 1], [], []>} : vector<8x32xf32>, vector<32x128xf32>, vector<8x128xf32> -> vector<8x128xf32>
    %416 = arith.addf %237, %415 : vector<8x128xf32>
    %417 = arith.negf %416 : vector<8x128xf32>
    %418 = math.exp %417 : vector<8x128xf32>
    %cst_84 = arith.constant 1.000000e+00 : f32
    %419 = vector.broadcast %cst_84 : f32 to vector<8x128xf32>
    %420 = arith.addf %419, %418 : vector<8x128xf32>
    %421 = arith.divf %419, %420 : vector<8x128xf32>
    %422 = vector.extract_strided_slice %421 {offsets = [0, 0], sizes = [8, 32], strides = [1, 1]} : vector<8x128xf32> to vector<8x32xf32>
    %423 = vector.extract_strided_slice %421 {offsets = [0, 32], sizes = [8, 32], strides = [1, 1]} : vector<8x128xf32> to vector<8x32xf32>
    %424 = vector.extract_strided_slice %421 {offsets = [0, 64], sizes = [8, 32], strides = [1, 1]} : vector<8x128xf32> to vector<8x32xf32>
    %425 = vector.extract_strided_slice %416 {offsets = [0, 96], sizes = [8, 32], strides = [1, 1]} : vector<8x128xf32> to vector<8x32xf32>
    %426 = math.tanh %425 : vector<8x32xf32>
    %427 = arith.mulf %423, %414 : vector<8x32xf32>
    %428 = arith.mulf %422, %426 : vector<8x32xf32>
    %429 = arith.addf %427, %428 : vector<8x32xf32>
    %430 = math.tanh %429 : vector<8x32xf32>
    %431 = arith.mulf %424, %430 : vector<8x32xf32>
    %432 = tpu.concatenate %263, %287, %311, %335, %359, %383, %407, %431 in 0 : vector<8x32xf32>, vector<8x32xf32>, vector<8x32xf32>, vector<8x32xf32>, vector<8x32xf32>, vector<8x32xf32>, vector<8x32xf32>, vector<8x32xf32> -> vector<64x32xf32>
    %c0_85 = arith.constant 0 : index
    %c0_86 = arith.constant 0 : index
    %433 = vector.load %arg14[%c0_85, %c0_86] : memref<32x8xf32, #tpu.memory_space<vmem>>, vector<32x8xf32>
    %cst_87 = arith.constant dense<0.000000e+00> : vector<64x8xf32>
    %434 = tpu.matmul %432, %433, %cst_87 {dimension_numbers = #tpu.dot_dimension_numbers<[1], [0], [0], [1], [0, 0, 1, 1], [], []>} : vector<64x32xf32>, vector<32x8xf32>, vector<64x8xf32> -> vector<64x8xf32>
    %c0_88 = arith.constant 0 : index
    %c0_89 = arith.constant 0 : index
    %435 = vector.load %arg15[%c0_88, %c0_89] : memref<1x8xf32, #tpu.memory_space<vmem>>, vector<1x8xf32>
    %436 = vector.broadcast %435 : vector<1x8xf32> to vector<64x8xf32>
    %437 = arith.addf %434, %436 : vector<64x8xf32>
    %c0_90 = arith.constant 0 : index
    %c0_91 = arith.constant 0 : index
    %438 = vector.load %arg16[%c0_90, %c0_91] : memref<64x8xf32, #tpu.memory_space<vmem>>, vector<64x8xf32>
    tpu.vector_store %arg16[%c0_90, %c0_91], %437 {strides = array<i32>} : memref<64x8xf32, #tpu.memory_space<vmem>>, vector<64x8xf32>,
    return
  }
}

</mosaic_0001>

<llo_original>
// kernel: tlstm_generator_forward.1
$region0: #{tlstm_generator_forward.1}
  #allocation0 [shape = 'u32[]', space=smem, size = 0x4, offset = 0x4, fixed_abs, tag = 'smem constant byte address 0x4 - core index']
  #allocation1 [shape = 'u32[144,128]{1,0:T(1,128)}', space=vmem, size = 0x12000, scoped, tag = 'internal scratch']
  %s0 = inlined_call_operand.vmem [shape: f32[64,8], index: 0, kind: input, shape index: {}]
  %s1 = inlined_call_operand.vmem [shape: f32[64,1], index: 1, kind: input, shape index: {}]
  %s2 = inlined_call_operand.vmem [shape: f32[8,128], index: 2, kind: input, shape index: {}]
  %s3 = inlined_call_operand.vmem [shape: f32[1,128], index: 3, kind: input, shape index: {}]
  %s4 = inlined_call_operand.vmem [shape: f32[32,128], index: 4, kind: input, shape index: {}]
  %s5 = inlined_call_operand.vmem [shape: f32[32,32], index: 5, kind: input, shape index: {}]
  %s6 = inlined_call_operand.vmem [shape: f32[1,32], index: 6, kind: input, shape index: {}]
  %s7 = inlined_call_operand.vmem [shape: f32[32,16], index: 7, kind: input, shape index: {}]
  %s8 = inlined_call_operand.vmem [shape: f32[1,16], index: 8, kind: input, shape index: {}]
  %s9 = inlined_call_operand.vmem [shape: f32[16,128], index: 9, kind: input, shape index: {}]
  %s10 = inlined_call_operand.vmem [shape: f32[1,128], index: 10, kind: input, shape index: {}]
  %s11 = inlined_call_operand.vmem [shape: f32[32,128], index: 11, kind: input, shape index: {}]
  %s12 = inlined_call_operand.vmem [shape: f32[32,32], index: 12, kind: input, shape index: {}]
  %s13 = inlined_call_operand.vmem [shape: f32[1,32], index: 13, kind: input, shape index: {}]
  %s14 = inlined_call_operand.vmem [shape: f32[32,8], index: 14, kind: input, shape index: {}]
  %s15 = inlined_call_operand.vmem [shape: f32[1,8], index: 15, kind: input, shape index: {}]
  %s16 = inlined_call_operand.vmem [shape: f32[64,8], index: 16, kind: output, shape index: {0}]
  %s17 = inlined_call_operand.vmem [shape: f32[8,16], index: 17, kind: output, shape index: {1}]
  %18 = xla_tuple %s16, %s17
  %s19 = sld [smem:[#allocation0]]
  $region82: #{tlstm_generator_forward.1} parent=0
    _
  %s21 = ssub.s32 1, %s19
  %s22 = scalar_select 0, %s21, %s19
  // Predicated region
  $region2: #{tlstm_generator_forward.1} parent=0 // pred_check
    _
  $region3: #{tlstm_generator_forward.1} parent=0 // pred_check_branch
    %24 = sbr.rel (0) target = $region5
  $region4: #{tlstm_generator_forward.1} parent=0 // pred_region
    _
  $region5: #{tlstm_generator_forward.1} parent=0 // pred_fallthru
    _
  // Predicated region
  $region6: #{tlstm_generator_forward.1} parent=0 // pred_check
    _
  $region7: #{tlstm_generator_forward.1} parent=0 // pred_check_branch
    %26 = sbr.rel (0) target = $region9
  $region8: #{tlstm_generator_forward.1} parent=0 // pred_region
    _
  $region9: #{tlstm_generator_forward.1} parent=0 // pred_fallthru
    _
  // Predicated region
  $region10: #{tlstm_generator_forward.1} parent=0 // pred_check
    _
  $region11: #{tlstm_generator_forward.1} parent=0 // pred_check_branch
    %28 = sbr.rel (0) target = $region13
  $region12: #{tlstm_generator_forward.1} parent=0 // pred_region
    _
  $region13: #{tlstm_generator_forward.1} parent=0 // pred_fallthru
    _
  // Predicated region
  $region14: #{tlstm_generator_forward.1} parent=0 // pred_check
    _
  $region15: #{tlstm_generator_forward.1} parent=0 // pred_check_branch
    %30 = sbr.rel (0) target = $region17
  $region16: #{tlstm_generator_forward.1} parent=0 // pred_region
    _
  $region17: #{tlstm_generator_forward.1} parent=0 // pred_fallthru
    _
  // Predicated region
  $region18: #{tlstm_generator_forward.1} parent=0 // pred_check
    _
  $region19: #{tlstm_generator_forward.1} parent=0 // pred_check_branch
    %32 = sbr.rel (0) target = $region21
  $region20: #{tlstm_generator_forward.1} parent=0 // pred_region
    _
  $region21: #{tlstm_generator_forward.1} parent=0 // pred_fallthru
    _
  // Predicated region
  $region22: #{tlstm_generator_forward.1} parent=0 // pred_check
    _
  $region23: #{tlstm_generator_forward.1} parent=0 // pred_check_branch
    %34 = sbr.rel (0) target = $region25
  $region24: #{tlstm_generator_forward.1} parent=0 // pred_region
    _
  $region25: #{tlstm_generator_forward.1} parent=0 // pred_fallthru
    _
  // Predicated region
  $region26: #{tlstm_generator_forward.1} parent=0 // pred_check
    _
  $region27: #{tlstm_generator_forward.1} parent=0 // pred_check_branch
    %36 = sbr.rel (0) target = $region29
  $region28: #{tlstm_generator_forward.1} parent=0 // pred_region
    _
  $region29: #{tlstm_generator_forward.1} parent=0 // pred_fallthru
    _
  // Predicated region
  $region30: #{tlstm_generator_forward.1} parent=0 // pred_check
    _
  $region31: #{tlstm_generator_forward.1} parent=0 // pred_check_branch
    %38 = sbr.rel (0) target = $region33
  $region32: #{tlstm_generator_forward.1} parent=0 // pred_region
    _
  $region33: #{tlstm_generator_forward.1} parent=0 // pred_fallthru
    _
  // Predicated region
  $region34: #{tlstm_generator_forward.1} parent=0 // pred_check
    _
  $region35: #{tlstm_generator_forward.1} parent=0 // pred_check_branch
    %40 = sbr.rel (0) target = $region37
  $region36: #{tlstm_generator_forward.1} parent=0 // pred_region
    _
  $region37: #{tlstm_generator_forward.1} parent=0 // pred_fallthru
    _
  // Predicated region
  $region38: #{tlstm_generator_forward.1} parent=0 // pred_check
    _
  $region39: #{tlstm_generator_forward.1} parent=0 // pred_check_branch
    %42 = sbr.rel (0) target = $region41
  $region40: #{tlstm_generator_forward.1} parent=0 // pred_region
    _
  $region41: #{tlstm_generator_forward.1} parent=0 // pred_fallthru
    _
  // Predicated region
  $region42: #{tlstm_generator_forward.1} parent=0 // pred_check
    _
  $region43: #{tlstm_generator_forward.1} parent=0 // pred_check_branch
    %44 = sbr.rel (0) target = $region45
  $region44: #{tlstm_generator_forward.1} parent=0 // pred_region
    _
  $region45: #{tlstm_generator_forward.1} parent=0 // pred_fallthru
    _
  // Predicated region
  $region46: #{tlstm_generator_forward.1} parent=0 // pred_check
    _
  $region47: #{tlstm_generator_forward.1} parent=0 // pred_check_branch
    %46 = sbr.rel (0) target = $region49
  $region48: #{tlstm_generator_forward.1} parent=0 // pred_region
    _
  $region49: #{tlstm_generator_forward.1} parent=0 // pred_fallthru
    _
  // Predicated region
  $region50: #{tlstm_generator_forward.1} parent=0 // pred_check
    _
  $region51: #{tlstm_generator_forward.1} parent=0 // pred_check_branch
    %48 = sbr.rel (0) target = $region53
  $region52: #{tlstm_generator_forward.1} parent=0 // pred_region
    _
  $region53: #{tlstm_generator_forward.1} parent=0 // pred_fallthru
    _
  // Predicated region
  $region54: #{tlstm_generator_forward.1} parent=0 // pred_check
    _
  $region55: #{tlstm_generator_forward.1} parent=0 // pred_check_branch
    %50 = sbr.rel (0) target = $region57
  $region56: #{tlstm_generator_forward.1} parent=0 // pred_region
    _
  $region57: #{tlstm_generator_forward.1} parent=0 // pred_fallthru
    _
  // Predicated region
  $region58: #{tlstm_generator_forward.1} parent=0 // pred_check
    _
  $region59: #{tlstm_generator_forward.1} parent=0 // pred_check_branch
    %52 = sbr.rel (0) target = $region61
  $region60: #{tlstm_generator_forward.1} parent=0 // pred_region
    _
  $region61: #{tlstm_generator_forward.1} parent=0 // pred_fallthru
    _
  // Predicated region
  $region62: #{tlstm_generator_forward.1} parent=0 // pred_check
    _
  $region63: #{tlstm_generator_forward.1} parent=0 // pred_check_branch
    %54 = sbr.rel (0) target = $region65
  $region64: #{tlstm_generator_forward.1} parent=0 // pred_region
    _
  $region65: #{tlstm_generator_forward.1} parent=0 // pred_fallthru
    _
  %v55 = vld [vmem:[%s4] sm:$0xff]
  %v56 = vld [vmem:[%s4 + $0x8] sm:$0xff]
  %v57 = vld [vmem:[%s4 + $0x10] sm:$0xff]
  %v58 = vld [vmem:[%s4 + $0x18] sm:$0xff]
  %v59 = vld [vmem:[%s5] sm:$0xff]
  %v60 = vld [vmem:[%s5 + $0x8] sm:$0xff]
  %v61 = vld [vmem:[%s5 + $0x10] sm:$0xff]
  %v62 = vld [vmem:[%s5 + $0x18] sm:$0xff]
  %v63 = vld [vmem:[%s11] sm:$0xff]
  %v64 = vld [vmem:[%s11 + $0x8] sm:$0xff]
  %v65 = vld [vmem:[%s11 + $0x10] sm:$0xff]
  %v66 = vld [vmem:[%s11 + $0x18] sm:$0xff]
  %v67 = vld [vmem:[%s12] sm:$0xff]
  %v68 = vld [vmem:[%s12 + $0x8] sm:$0xff]
  %v69 = vld [vmem:[%s12 + $0x10] sm:$0xff]
  %v70 = vld [vmem:[%s12 + $0x18] sm:$0xff]
  %v71 = vld [vmem:[%s6] sm:$0x1]
  %v73 = vlaneseq
  %v74 = vshrl.u32 %v73, 7
  %v75 = vsub.s32 0, %v74
  %v76 = vrot.slane %v71, %v75
  %v78 = vld [vmem:[%s13] sm:$0x1]
  %v80 = vlaneseq
  %v81 = vshrl.u32 %v80, 7
  %v82 = vsub.s32 0, %v81
  %v83 = vrot.slane %v78, %v82
  %v85 = vld [vmem:[%s1] sm:$0xff]
  %v86 = vld [vmem:[%s1 + $0x8] sm:$0xff]
  %v87 = vld [vmem:[%s1 + $0x10] sm:$0xff]
  %v88 = vld [vmem:[%s1 + $0x18] sm:$0xff]
  %v89 = vld [vmem:[%s1 + $0x20] sm:$0xff]
  %v90 = vld [vmem:[%s1 + $0x28] sm:$0xff]
  %v91 = vld [vmem:[%s1 + $0x30] sm:$0xff]
  %v92 = vld [vmem:[%s1 + $0x38] sm:$0xff]
  %v93 = vadd.f32 %v85, 2.7182817
  %v94 = vadd.f32 %v86, 2.7182817
  %v95 = vadd.f32 %v87, 2.7182817
  %v96 = vadd.f32 %v88, 2.7182817
  %v97 = vadd.f32 %v89, 2.7182817
  %v98 = vadd.f32 %v90, 2.7182817
  %v99 = vadd.f32 %v91, 2.7182817
  %v100 = vadd.f32 %v92, 2.7182817
  %v101 = vlog2.pop %v93
  %v102 = vmul.f32 %v101, 0.6931472
  %v103 = vlog2.pop %v94
  %v104 = vmul.f32 %v103, 0.6931472
  %v105 = vlog2.pop %v95
  %v106 = vmul.f32 %v105, 0.6931472
  %v107 = vlog2.pop %v96
  %v108 = vmul.f32 %v107, 0.6931472
  %v109 = vlog2.pop %v97
  %v110 = vmul.f32 %v109, 0.6931472
  %v111 = vlog2.pop %v98
  %v112 = vmul.f32 %v111, 0.6931472
  %v113 = vlog2.pop %v99
  %v114 = vmul.f32 %v113, 0.6931472
  %v115 = vlog2.pop %v100
  %v116 = vmul.f32 %v115, 0.6931472
  %v117 = vrcp.pop %v102
  %v118 = vrcp.pop %v104
  %v119 = vrcp.pop %v106
  %v120 = vrcp.pop %v108
  %v121 = vrcp.pop %v110
  %v122 = vrcp.pop %v112
  %v123 = vrcp.pop %v114
  %v124 = vrcp.pop %v116
  %v125 = vld [vmem:[%s0] sm:$0xff]
  %v126 = vld [vmem:[%s0 + $0x8] sm:$0xff]
  %v127 = vld [vmem:[%s0 + $0x10] sm:$0xff]
  %v128 = vld [vmem:[%s0 + $0x18] sm:$0xff]
  %v129 = vld [vmem:[%s0 + $0x20] sm:$0xff]
  %v130 = vld [vmem:[%s0 + $0x28] sm:$0xff]
  %v131 = vld [vmem:[%s0 + $0x30] sm:$0xff]
  %v132 = vld [vmem:[%s0 + $0x38] sm:$0xff]
  %v133 = vld [vmem:[%s2] sm:$0xff]
  %v134 = vld [vmem:[%s3] sm:$0x1]
  %v136 = vlaneseq
  %v137 = vshrl.u32 %v136, 7
  %v138 = vsub.s32 0, %v137
  %v139 = vrot.slane %v134, %v138
  %vm141 = vcmask 64512
  %v143 = vsel %vm141, %v125, 0
  %v146 = vsel %vm141, %v126, 0
  %v149 = vsel %vm141, %v127, 0
  %v152 = vsel %vm141, %v128, 0
  %v155 = vsel %vm141, %v129, 0
  %v158 = vsel %vm141, %v130, 0
  %v161 = vsel %vm141, %v131, 0
  %v164 = vsel %vm141, %v132, 0
  %166 = vmatprep.subr.mxu0 0.0
  %167 = vmatpush1.msra.mxu0 %v133
  %168 = vmatprep.subr.mxu0 0.0
  %169 = vmatpush1.msra.mxu0 0.0
  %170 = vmatprep.subr.mxu0 0.0
  %171 = vmatpush1.msra.mxu0 0.0
  %172 = vmatprep.subr.mxu0 0.0
  %173 = vmatpush1.msra.mxu0 0.0
  %174 = vmatprep.subr.mxu0 0.0
  %175 = vmatpush1.msra.mxu0 0.0
  %176 = vmatprep.subr.mxu0 0.0
  %177 = vmatpush1.msra.mxu0 0.0
  %178 = vmatprep.subr.mxu0 0.0
  %179 = vmatpush1.msra.mxu0 0.0
  %180 = vmatprep.subr.mxu0 0.0
  %181 = vmatpush1.msra.mxu0 0.0
  %182 = vmatprep.subr.mxu0 0.0
  %183 = vmatpush1.msra.mxu0 0.0
  %184 = vmatprep.subr.mxu0 0.0
  %185 = vmatpush1.msra.mxu0 0.0
  %186 = vmatprep.subr.mxu0 0.0
  %187 = vmatpush1.msra.mxu0 0.0
  %188 = vmatprep.subr.mxu0 0.0
  %189 = vmatpush1.msra.mxu0 0.0
  %190 = vmatprep.subr.mxu0 0.0
  %191 = vmatpush1.msra.mxu0 0.0
  %192 = vmatprep.subr.mxu0 0.0
  %193 = vmatpush1.msra.mxu0 0.0
  %194 = vmatprep.subr.mxu0 0.0
  %195 = vmatpush1.msra.mxu0 0.0
  %196 = vmatprep.subr.mxu0 0.0
  %197 = vmatpush1.msra.mxu0 0.0
  %198 = vmatprep.subr.mxu0 0.0
  %199 = vmatpush1.msra.mxu0 0.0
  %200 = vmatprep.subr.mxu0 0.0
  %201 = vmatpush1.msra.mxu0 0.0
  %202 = vmatprep.subr.mxu0 0.0
  %203 = vmatpush1.msra.mxu0 0.0
  %204 = vmatprep.subr.mxu0 0.0
  %205 = vmatpush1.msra.mxu0 0.0
  %206 = vmatprep.subr.mxu0 0.0
  %207 = vmatpush1.msra.mxu0 0.0
  %208 = vmatprep.subr.mxu0 0.0
  %209 = vmatpush1.msra.mxu0 0.0
  %210 = vmatprep.subr.mxu0 0.0
  %211 = vmatpush1.msra.mxu0 0.0
  %212 = vmatprep.subr.mxu0 0.0
  %213 = vmatpush1.msra.mxu0 0.0
  %214 = vmatprep.subr.mxu0 0.0
  %215 = vmatpush1.msra.mxu0 0.0
  %216 = vmatprep.subr.mxu0 0.0
  %217 = vmatpush1.msra.mxu0 0.0
  %218 = vmatprep.subr.mxu0 0.0
  %219 = vmatpush1.msra.mxu0 0.0
  %220 = vmatprep.subr.mxu0 0.0
  %221 = vmatpush1.msra.mxu0 0.0
  %222 = vmatprep.subr.mxu0 0.0
  %223 = vmatpush1.msra.mxu0 0.0
  %224 = vmatprep.subr.mxu0 0.0
  %225 = vmatpush1.msra.mxu0 0.0
  %226 = vmatprep.subr.mxu0 0.0
  %227 = vmatpush1.msra.mxu0 0.0
  %228 = vmatprep.subr.mxu0 0.0
  %229 = vmatpush1.msra.mxu0 0.0
  %230 = vmatprep.mubr.f32.mxu0 0.0
  %231 = vmatmul.mubr.f32.gmra.mrb[0].mxu0 %v143
  %v232 = vpop.f32.mrb[0].mxu0
  %v233 = vadd.f32 %v139, %v232
  %v234 = vpop.f32.mrb[0].mxu0
  %235 = vmatprep.mubr.f32.mxu0 0.0
  %236 = vmatmul.mubr.f32.gmra.mrb[0].mxu0 %v146
  %v237 = vpop.f32.mrb[0].mxu0
  %v238 = vadd.f32 %v139, %v237
  %v239 = vpop.f32.mrb[0].mxu0
  %240 = vmatprep.mubr.f32.mxu0 0.0
  %241 = vmatmul.mubr.f32.gmra.mrb[0].mxu0 %v149
  %v242 = vpop.f32.mrb[0].mxu0
  %v243 = vadd.f32 %v139, %v242
  %v244 = vpop.f32.mrb[0].mxu0
  %245 = vmatprep.mubr.f32.mxu0 0.0
  %246 = vmatmul.mubr.f32.gmra.mrb[0].mxu0 %v152
  %v247 = vpop.f32.mrb[0].mxu0
  %v248 = vadd.f32 %v139, %v247
  %v249 = vpop.f32.mrb[0].mxu0
  %250 = vmatprep.mubr.f32.mxu0 0.0
  %251 = vmatmul.mubr.f32.gmra.mrb[0].mxu0 %v155
  %v252 = vpop.f32.mrb[0].mxu0
  %v253 = vadd.f32 %v139, %v252
  %v254 = vpop.f32.mrb[0].mxu0
  %255 = vmatprep.mubr.f32.mxu0 0.0
  %256 = vmatmul.mubr.f32.gmra.mrb[0].mxu0 %v158
  %v257 = vpop.f32.mrb[0].mxu0
  %v258 = vadd.f32 %v139, %v257
  %v259 = vpop.f32.mrb[0].mxu0
  %260 = vmatprep.mubr.f32.mxu0 0.0
  %261 = vmatmul.mubr.f32.gmra.mrb[0].mxu0 %v161
  %v262 = vpop.f32.mrb[0].mxu0
  %v263 = vadd.f32 %v139, %v262
  %v264 = vpop.f32.mrb[0].mxu0
  %265 = vmatprep.mubr.f32.mxu0 0.0
  %266 = vmatmul.mubr.f32.gmra.mrb[0].mxu0 %v164
  %v267 = vpop.f32.mrb[0].mxu0
  %v268 = vadd.f32 %v139, %v267
  %v269 = vpop.f32.mrb[0].mxu0
  %270 = vdwg.mxu0
  %272 = vset.pattern.permute.xlu0 0
  %273 = vperm.xlu0 %272, %v117
  %v274 = vpop.permute.xlu0 %273
  %vm276 = vcmask 261120
  %v278 = vsel %vm276, 0.0, 0
  %280 = vmatprep.subr.mxu0 0.0
  %281 = vmatpush1.msra.mxu0 %v59
  %282 = vmatprep.subr.mxu0 0.0
  %283 = vmatpush1.msra.mxu0 %v60
  %284 = vmatprep.subr.mxu0 0.0
  %285 = vmatpush1.msra.mxu0 %v61
  %286 = vmatprep.subr.mxu0 0.0
  %287 = vmatpush1.msra.mxu0 %v62
  %288 = vmatprep.subr.mxu0 0.0
  %289 = vmatpush1.msra.mxu0 0.0
  %290 = vmatprep.subr.mxu0 0.0
  %291 = vmatpush1.msra.mxu0 0.0
  %292 = vmatprep.subr.mxu0 0.0
  %293 = vmatpush1.msra.mxu0 0.0
  %294 = vmatprep.subr.mxu0 0.0
  %295 = vmatpush1.msra.mxu0 0.0
  %296 = vmatprep.subr.mxu0 0.0
  %297 = vmatpush1.msra.mxu0 0.0
  %298 = vmatprep.subr.mxu0 0.0
  %299 = vmatpush1.msra.mxu0 0.0
  %300 = vmatprep.subr.mxu0 0.0
  %301 = vmatpush1.msra.mxu0 0.0
  %302 = vmatprep.subr.mxu0 0.0
  %303 = vmatpush1.msra.mxu0 0.0
  %304 = vmatprep.subr.mxu0 0.0
  %305 = vmatpush1.msra.mxu0 0.0
  %306 = vmatprep.subr.mxu0 0.0
  %307 = vmatpush1.msra.mxu0 0.0
  %308 = vmatprep.subr.mxu0 0.0
  %309 = vmatpush1.msra.mxu0 0.0
  %310 = vmatprep.subr.mxu0 0.0
  %311 = vmatpush1.msra.mxu0 0.0
  %312 = vmatprep.subr.mxu0 0.0
  %313 = vmatpush1.msra.mxu0 0.0
  %314 = vmatprep.subr.mxu0 0.0
  %315 = vmatpush1.msra.mxu0 0.0
  %316 = vmatprep.subr.mxu0 0.0
  %317 = vmatpush1.msra.mxu0 0.0
  %318 = vmatprep.subr.mxu0 0.0
  %319 = vmatpush1.msra.mxu0 0.0
  %320 = vmatprep.subr.mxu0 0.0
  %321 = vmatpush1.msra.mxu0 0.0
  %322 = vmatprep.subr.mxu0 0.0
  %323 = vmatpush1.msra.mxu0 0.0
  %324 = vmatprep.subr.mxu0 0.0
  %325 = vmatpush1.msra.mxu0 0.0
  %326 = vmatprep.subr.mxu0 0.0
  %327 = vmatpush1.msra.mxu0 0.0
  %328 = vmatprep.subr.mxu0 0.0
  %329 = vmatpush1.msra.mxu0 0.0
  %330 = vmatprep.subr.mxu0 0.0
  %331 = vmatpush1.msra.mxu0 0.0
  %332 = vmatprep.subr.mxu0 0.0
  %333 = vmatpush1.msra.mxu0 0.0
  %334 = vmatprep.subr.mxu0 0.0
  %335 = vmatpush1.msra.mxu0 0.0
  %336 = vmatprep.subr.mxu0 0.0
  %337 = vmatpush1.msra.mxu0 0.0
  %338 = vmatprep.subr.mxu0 0.0
  %339 = vmatpush1.msra.mxu0 0.0
  %340 = vmatprep.subr.mxu0 0.0
  %341 = vmatpush1.msra.mxu0 0.0
  %342 = vmatprep.subr.mxu0 0.0
  %343 = vmatpush1.msra.mxu0 0.0
  %344 = vmatprep.mubr.f32.mxu0 0.0
  %345 = vmatmul.mubr.f32.gmra.mrb[0].mxu0 %v278
  %v346 = vpop.f32.mrb[0].mxu0
  %v347 = vadd.f32 %v76, %v346
  %v348 = vpop.f32.mrb[0].mxu0
  %349 = vdwg.mxu0
  %v350 = vtanh.pop %v347
  %v351 = vsub.f32 0.0, %v350
  %v352 = vmul.f32 %v350, %v274
  %v353 = vadd.f32 %v351, %v352
  %354 = vmatprep.subr.mxu0 0.0
  %355 = vmatpush1.msra.mxu0 %v55
  %356 = vmatprep.subr.mxu0 0.0
  %357 = vmatpush1.msra.mxu0 %v56
  %358 = vmatprep.subr.mxu0 0.0
  %359 = vmatpush1.msra.mxu0 %v57
  %360 = vmatprep.subr.mxu0 0.0
  %361 = vmatpush1.msra.mxu0 %v58
  %362 = vmatprep.subr.mxu0 0.0
  %363 = vmatpush1.msra.mxu0 0.0
  %364 = vmatprep.subr.mxu0 0.0
  %365 = vmatpush1.msra.mxu0 0.0
  %366 = vmatprep.subr.mxu0 0.0
  %367 = vmatpush1.msra.mxu0 0.0
  %368 = vmatprep.subr.mxu0 0.0
  %369 = vmatpush1.msra.mxu0 0.0
  %370 = vmatprep.subr.mxu0 0.0
  %371 = vmatpush1.msra.mxu0 0.0
  %372 = vmatprep.subr.mxu0 0.0
  %373 = vmatpush1.msra.mxu0 0.0
  %374 = vmatprep.subr.mxu0 0.0
  %375 = vmatpush1.msra.mxu0 0.0
  %376 = vmatprep.subr.mxu0 0.0
  %377 = vmatpush1.msra.mxu0 0.0
  %378 = vmatprep.subr.mxu0 0.0
  %379 = vmatpush1.msra.mxu0 0.0
  %380 = vmatprep.subr.mxu0 0.0
  %381 = vmatpush1.msra.mxu0 0.0
  %382 = vmatprep.subr.mxu0 0.0
  %383 = vmatpush1.msra.mxu0 0.0
  %384 = vmatprep.subr.mxu0 0.0
  %385 = vmatpush1.msra.mxu0 0.0
  %386 = vmatprep.subr.mxu0 0.0
  %387 = vmatpush1.msra.mxu0 0.0
  %388 = vmatprep.subr.mxu0 0.0
  %389 = vmatpush1.msra.mxu0 0.0
  %390 = vmatprep.subr.mxu0 0.0
  %391 = vmatpush1.msra.mxu0 0.0
  %392 = vmatprep.subr.mxu0 0.0
  %393 = vmatpush1.msra.mxu0 0.0
  %394 = vmatprep.subr.mxu0 0.0
  %395 = vmatpush1.msra.mxu0 0.0
  %396 = vmatprep.subr.mxu0 0.0
  %397 = vmatpush1.msra.mxu0 0.0
  %398 = vmatprep.subr.mxu0 0.0
  %399 = vmatpush1.msra.mxu0 0.0
  %400 = vmatprep.subr.mxu0 0.0
  %401 = vmatpush1.msra.mxu0 0.0
  %402 = vmatprep.subr.mxu0 0.0
  %403 = vmatpush1.msra.mxu0 0.0
  %404 = vmatprep.subr.mxu0 0.0
  %405 = vmatpush1.msra.mxu0 0.0
  %406 = vmatprep.subr.mxu0 0.0
  %407 = vmatpush1.msra.mxu0 0.0
  %408 = vmatprep.subr.mxu0 0.0
  %409 = vmatpush1.msra.mxu0 0.0
  %410 = vmatprep.subr.mxu0 0.0
  %411 = vmatpush1.msra.mxu0 0.0
  %412 = vmatprep.subr.mxu0 0.0
  %413 = vmatpush1.msra.mxu0 0.0
  %414 = vmatprep.subr.mxu0 0.0
  %415 = vmatpush1.msra.mxu0 0.0
  %416 = vmatprep.subr.mxu0 0.0
  %417 = vmatpush1.msra.mxu0 0.0
  %418 = vmatprep.mubr.f32.mxu0 0.0
  %419 = vmatmul.mubr.f32.gmra.mrb[0].mxu0 %v278
  %v420 = vpop.f32.mrb[0].mxu0
  %v421 = vadd.f32 0.0, %v420
  %v422 = vpop.f32.mrb[0].mxu0
  %423 = vdwg.mxu0
  %v424 = vadd.f32 %v233, %v421
  %v425 = vxor.u32 %v424, 2147483648
  %v426 = vmul.f32 %v425, 1.442695
  %v427 = vpow.pop %v426
  %v428 = vadd.f32 %v427, 1.0
  %v429 = vrcp.pop %v428
  %v430 = vmul.f32 1.0, %v429
  %v431 = vtanh.pop %v424
  %433 = vrot.lane.b32.xlu0 %v353, 32
  %v434 = vpop.permute.xlu0 %433
  %v436 = vmul.f32 %v430, %v434
  %438 = vrot.lane.b32.xlu0 %v431, 32
  %v439 = vpop.permute.xlu0 %438
  %v441 = vmul.f32 %v430, %v439
  %443 = vrot.lane.b32.xlu0 %v441, 32
  %v444 = vpop.permute.xlu0 %443
  %v446 = vadd.f32 %v436, %v444
  %v447 = vtanh.pop %v446
  %449 = vrot.lane.b32.xlu0 %v447, 32
  %v450 = vpop.permute.xlu0 %449
  %v452 = vmul.f32 %v430, %v450
  %454 = vset.pattern.permute.xlu0 0
  %455 = vperm.xlu0 %454, %v118
  %v456 = vpop.permute.xlu0 %455
  %459 = vrot.lane.b32.xlu0 %v446, 96
  %v460 = vpop.permute.xlu0 %459
  %v461 = vsel %vm276, %v460, 0
  %463 = vmatprep.subr.mxu0 0.0
  %464 = vmatpush1.msra.mxu0 %v59
  %465 = vmatprep.subr.mxu0 0.0
  %466 = vmatpush1.msra.mxu0 %v60
  %467 = vmatprep.subr.mxu0 0.0
  %468 = vmatpush1.msra.mxu0 %v61
  %469 = vmatprep.subr.mxu0 0.0
  %470 = vmatpush1.msra.mxu0 %v62
  %471 = vmatprep.subr.mxu0 0.0
  %472 = vmatpush1.msra.mxu0 0.0
  %473 = vmatprep.subr.mxu0 0.0
  %474 = vmatpush1.msra.mxu0 0.0
  %475 = vmatprep.subr.mxu0 0.0
  %476 = vmatpush1.msra.mxu0 0.0
  %477 = vmatprep.subr.mxu0 0.0
  %478 = vmatpush1.msra.mxu0 0.0
  %479 = vmatprep.subr.mxu0 0.0
  %480 = vmatpush1.msra.mxu0 0.0
  %481 = vmatprep.subr.mxu0 0.0
  %482 = vmatpush1.msra.mxu0 0.0
  %483 = vmatprep.subr.mxu0 0.0
  %484 = vmatpush1.msra.mxu0 0.0
  %485 = vmatprep.subr.mxu0 0.0
  %486 = vmatpush1.msra.mxu0 0.0
  %487 = vmatprep.subr.mxu0 0.0
  %488 = vmatpush1.msra.mxu0 0.0
  %489 = vmatprep.subr.mxu0 0.0
  %490 = vmatpush1.msra.mxu0 0.0
  %491 = vmatprep.subr.mxu0 0.0
  %492 = vmatpush1.msra.mxu0 0.0
  %493 = vmatprep.subr.mxu0 0.0
  %494 = vmatpush1.msra.mxu0 0.0
  %495 = vmatprep.subr.mxu0 0.0
  %496 = vmatpush1.msra.mxu0 0.0
  %497 = vmatprep.subr.mxu0 0.0
  %498 = vmatpush1.msra.mxu0 0.0
  %499 = vmatprep.subr.mxu0 0.0
  %500 = vmatpush1.msra.mxu0 0.0
  %501 = vmatprep.subr.mxu0 0.0
  %502 = vmatpush1.msra.mxu0 0.0
  %503 = vmatprep.subr.mxu0 0.0
  %504 = vmatpush1.msra.mxu0 0.0
  %505 = vmatprep.subr.mxu0 0.0
  %506 = vmatpush1.msra.mxu0 0.0
  %507 = vmatprep.subr.mxu0 0.0
  %508 = vmatpush1.msra.mxu0 0.0
  %509 = vmatprep.subr.mxu0 0.0
  %510 = vmatpush1.msra.mxu0 0.0
  %511 = vmatprep.subr.mxu0 0.0
  %512 = vmatpush1.msra.mxu0 0.0
  %513 = vmatprep.subr.mxu0 0.0
  %514 = vmatpush1.msra.mxu0 0.0
  %515 = vmatprep.subr.mxu0 0.0
  %516 = vmatpush1.msra.mxu0 0.0
  %517 = vmatprep.subr.mxu0 0.0
  %518 = vmatpush1.msra.mxu0 0.0
  %519 = vmatprep.subr.mxu0 0.0
  %520 = vmatpush1.msra.mxu0 0.0
  %521 = vmatprep.subr.mxu0 0.0
  %522 = vmatpush1.msra.mxu0 0.0
  %523 = vmatprep.subr.mxu0 0.0
  %524 = vmatpush1.msra.mxu0 0.0
  %525 = vmatprep.subr.mxu0 0.0
  %526 = vmatpush1.msra.mxu0 0.0
  %527 = vmatprep.mubr.f32.mxu0 0.0
  %528 = vmatmul.mubr.f32.gmra.mrb[0].mxu0 %v461
  %v529 = vpop.f32.mrb[0].mxu0
  %v530 = vadd.f32 %v76, %v529
  %v531 = vpop.f32.mrb[0].mxu0
  %532 = vdwg.mxu0
  %v533 = vtanh.pop %v530
  %535 = vrot.lane.b32.xlu0 %v533, 32
  %v536 = vpop.permute.xlu0 %535
  %v538 = vsub.f32 %v446, %v536
  %v539 = vmul.f32 %v533, %v456
  %541 = vrot.lane.b32.xlu0 %v539, 32
  %v542 = vpop.permute.xlu0 %541
  %v544 = vadd.f32 %v538, %v542
  %546 = vrot.lane.b32.xlu0 %v452, 64
  %v547 = vpop.permute.xlu0 %546
  %v548 = vsel %vm276, %v547, 0
  %550 = vmatprep.subr.mxu0 0.0
  %551 = vmatpush1.msra.mxu0 %v55
  %552 = vmatprep.subr.mxu0 0.0
  %553 = vmatpush1.msra.mxu0 %v56
  %554 = vmatprep.subr.mxu0 0.0
  %555 = vmatpush1.msra.mxu0 %v57
  %556 = vmatprep.subr.mxu0 0.0
  %557 = vmatpush1.msra.mxu0 %v58
  %558 = vmatprep.subr.mxu0 0.0
  %559 = vmatpush1.msra.mxu0 0.0
  %560 = vmatprep.subr.mxu0 0.0
  %561 = vmatpush1.msra.mxu0 0.0
  %562 = vmatprep.subr.mxu0 0.0
  %563 = vmatpush1.msra.mxu0 0.0
  %564 = vmatprep.subr.mxu0 0.0
  %565 = vmatpush1.msra.mxu0 0.0
  %566 = vmatprep.subr.mxu0 0.0
  %567 = vmatpush1.msra.mxu0 0.0
  %568 = vmatprep.subr.mxu0 0.0
  %569 = vmatpush1.msra.mxu0 0.0
  %570 = vmatprep.subr.mxu0 0.0
  %571 = vmatpush1.msra.mxu0 0.0
  %572 = vmatprep.subr.mxu0 0.0
  %573 = vmatpush1.msra.mxu0 0.0
  %574 = vmatprep.subr.mxu0 0.0
  %575 = vmatpush1.msra.mxu0 0.0
  %576 = vmatprep.subr.mxu0 0.0
  %577 = vmatpush1.msra.mxu0 0.0
  %578 = vmatprep.subr.mxu0 0.0
  %579 = vmatpush1.msra.mxu0 0.0
  %580 = vmatprep.subr.mxu0 0.0
  %581 = vmatpush1.msra.mxu0 0.0
  %582 = vmatprep.subr.mxu0 0.0
  %583 = vmatpush1.msra.mxu0 0.0
  %584 = vmatprep.subr.mxu0 0.0
  %585 = vmatpush1.msra.mxu0 0.0
  %586 = vmatprep.subr.mxu0 0.0
  %587 = vmatpush1.msra.mxu0 0.0
  %588 = vmatprep.subr.mxu0 0.0
  %589 = vmatpush1.msra.mxu0 0.0
  %590 = vmatprep.subr.mxu0 0.0
  %591 = vmatpush1.msra.mxu0 0.0
  %592 = vmatprep.subr.mxu0 0.0
  %593 = vmatpush1.msra.mxu0 0.0
  %594 = vmatprep.subr.mxu0 0.0
  %595 = vmatpush1.msra.mxu0 0.0
  %596 = vmatprep.subr.mxu0 0.0
  %597 = vmatpush1.msra.mxu0 0.0
  %598 = vmatprep.subr.mxu0 0.0
  %599 = vmatpush1.msra.mxu0 0.0
  %600 = vmatprep.subr.mxu0 0.0
  %601 = vmatpush1.msra.mxu0 0.0
  %602 = vmatprep.subr.mxu0 0.0
  %603 = vmatpush1.msra.mxu0 0.0
  %604 = vmatprep.subr.mxu0 0.0
  %605 = vmatpush1.msra.mxu0 0.0
  %606 = vmatprep.subr.mxu0 0.0
  %607 = vmatpush1.msra.mxu0 0.0
  %608 = vmatprep.subr.mxu0 0.0
  %609 = vmatpush1.msra.mxu0 0.0
  %610 = vmatprep.subr.mxu0 0.0
  %611 = vmatpush1.msra.mxu0 0.0
  %612 = vmatprep.subr.mxu0 0.0
  %613 = vmatpush1.msra.mxu0 0.0
  %614 = vmatprep.mubr.f32.mxu0 0.0
  %615 = vmatmul.mubr.f32.gmra.mrb[0].mxu0 %v548
  %v616 = vpop.f32.mrb[0].mxu0
  %v617 = vadd.f32 0.0, %v616
  %v618 = vpop.f32.mrb[0].mxu0
  %619 = vdwg.mxu0
  %v620 = vadd.f32 %v238, %v617
  %v621 = vxor.u32 %v620, 2147483648
  %v622 = vmul.f32 %v621, 1.442695
  %v623 = vpow.pop %v622
  %v624 = vadd.f32 %v623, 1.0
  %v625 = vrcp.pop %v624
  %v626 = vmul.f32 1.0, %v625
  %v627 = vtanh.pop %v620
  %v628 = vmul.f32 %v626, %v544
  %630 = vrot.lane.b32.xlu0 %v627, 32
  %v631 = vpop.permute.xlu0 %630
  %v633 = vmul.f32 %v626, %v631
  %635 = vrot.lane.b32.xlu0 %v633, 32
  %v636 = vpop.permute.xlu0 %635
  %v638 = vadd.f32 %v628, %v636
  %v639 = vtanh.pop %v638
  %641 = vrot.lane.b32.xlu0 %v639, 32
  %v642 = vpop.permute.xlu0 %641
  %v644 = vmul.f32 %v626, %v642
  %646 = vset.pattern.permute.xlu0 0
  %647 = vperm.xlu0 %646, %v119
  %v648 = vpop.permute.xlu0 %647
  %651 = vrot.lane.b32.xlu0 %v638, 96
  %v652 = vpop.permute.xlu0 %651
  %v653 = vsel %vm276, %v652, 0
  %655 = vmatprep.subr.mxu0 0.0
  %656 = vmatpush1.msra.mxu0 %v59
  %657 = vmatprep.subr.mxu0 0.0
  %658 = vmatpush1.msra.mxu0 %v60
  %659 = vmatprep.subr.mxu0 0.0
  %660 = vmatpush1.msra.mxu0 %v61
  %661 = vmatprep.subr.mxu0 0.0
  %662 = vmatpush1.msra.mxu0 %v62
  %663 = vmatprep.subr.mxu0 0.0
  %664 = vmatpush1.msra.mxu0 0.0
  %665 = vmatprep.subr.mxu0 0.0
  %666 = vmatpush1.msra.mxu0 0.0
  %667 = vmatprep.subr.mxu0 0.0
  %668 = vmatpush1.msra.mxu0 0.0
  %669 = vmatprep.subr.mxu0 0.0
  %670 = vmatpush1.msra.mxu0 0.0
  %671 = vmatprep.subr.mxu0 0.0
  %672 = vmatpush1.msra.mxu0 0.0
  %673 = vmatprep.subr.mxu0 0.0
  %674 = vmatpush1.msra.mxu0 0.0
  %675 = vmatprep.subr.mxu0 0.0
  %676 = vmatpush1.msra.mxu0 0.0
  %677 = vmatprep.subr.mxu0 0.0
  %678 = vmatpush1.msra.mxu0 0.0
  %679 = vmatprep.subr.mxu0 0.0
  %680 = vmatpush1.msra.mxu0 0.0
  %681 = vmatprep.subr.mxu0 0.0
  %682 = vmatpush1.msra.mxu0 0.0
  %683 = vmatprep.subr.mxu0 0.0
  %684 = vmatpush1.msra.mxu0 0.0
  %685 = vmatprep.subr.mxu0 0.0
  %686 = vmatpush1.msra.mxu0 0.0
  %687 = vmatprep.subr.mxu0 0.0
  %688 = vmatpush1.msra.mxu0 0.0
  %689 = vmatprep.subr.mxu0 0.0
  %690 = vmatpush1.msra.mxu0 0.0
  %691 = vmatprep.subr.mxu0 0.0
  %692 = vmatpush1.msra.mxu0 0.0
  %693 = vmatprep.subr.mxu0 0.0
  %694 = vmatpush1.msra.mxu0 0.0
  %695 = vmatprep.subr.mxu0 0.0
  %696 = vmatpush1.msra.mxu0 0.0
  %697 = vmatprep.subr.mxu0 0.0
  %698 = vmatpush1.msra.mxu0 0.0
  %699 = vmatprep.subr.mxu0 0.0
  %700 = vmatpush1.msra.mxu0 0.0
  %701 = vmatprep.subr.mxu0 0.0
  %702 = vmatpush1.msra.mxu0 0.0
  %703 = vmatprep.subr.mxu0 0.0
  %704 = vmatpush1.msra.mxu0 0.0
  %705 = vmatprep.subr.mxu0 0.0
  %706 = vmatpush1.msra.mxu0 0.0
  %707 = vmatprep.subr.mxu0 0.0
  %708 = vmatpush1.msra.mxu0 0.0
  %709 = vmatprep.subr.mxu0 0.0
  %710 = vmatpush1.msra.mxu0 0.0
  %711 = vmatprep.subr.mxu0 0.0
  %712 = vmatpush1.msra.mxu0 0.0
  %713 = vmatprep.subr.mxu0 0.0
  %714 = vmatpush1.msra.mxu0 0.0
  %715 = vmatprep.subr.mxu0 0.0
  %716 = vmatpush1.msra.mxu0 0.0
  %717 = vmatprep.subr.mxu0 0.0
  %718 = vmatpush1.msra.mxu0 0.0
  %719 = vmatprep.mubr.f32.mxu0 0.0
  %720 = vmatmul.mubr.f32.gmra.mrb[0].mxu0 %v653
  %v721 = vpop.f32.mrb[0].mxu0
  %v722 = vadd.f32 %v76, %v721
  %v723 = vpop.f32.mrb[0].mxu0
  %724 = vdwg.mxu0
  %v725 = vtanh.pop %v722
  %727 = vrot.lane.b32.xlu0 %v725, 32
  %v728 = vpop.permute.xlu0 %727
  %v730 = vsub.f32 %v638, %v728
  %v731 = vmul.f32 %v725, %v648
  %733 = vrot.lane.b32.xlu0 %v731, 32
  %v734 = vpop.permute.xlu0 %733
  %v736 = vadd.f32 %v730, %v734
  %738 = vrot.lane.b32.xlu0 %v644, 64
  %v739 = vpop.permute.xlu0 %738
  %v740 = vsel %vm276, %v739, 0
  %742 = vmatprep.subr.mxu0 0.0
  %743 = vmatpush1.msra.mxu0 %v55
  %744 = vmatprep.subr.mxu0 0.0
  %745 = vmatpush1.msra.mxu0 %v56
  %746 = vmatprep.subr.mxu0 0.0
  %747 = vmatpush1.msra.mxu0 %v57
  %748 = vmatprep.subr.mxu0 0.0
  %749 = vmatpush1.msra.mxu0 %v58
  %750 = vmatprep.subr.mxu0 0.0
  %751 = vmatpush1.msra.mxu0 0.0
  %752 = vmatprep.subr.mxu0 0.0
  %753 = vmatpush1.msra.mxu0 0.0
  %754 = vmatprep.subr.mxu0 0.0
  %755 = vmatpush1.msra.mxu0 0.0
  %756 = vmatprep.subr.mxu0 0.0
  %757 = vmatpush1.msra.mxu0 0.0
  %758 = vmatprep.subr.mxu0 0.0
  %759 = vmatpush1.msra.mxu0 0.0
  %760 = vmatprep.subr.mxu0 0.0
  %761 = vmatpush1.msra.mxu0 0.0
  %762 = vmatprep.subr.mxu0 0.0
  %763 = vmatpush1.msra.mxu0 0.0
  %764 = vmatprep.subr.mxu0 0.0
  %765 = vmatpush1.msra.mxu0 0.0
  %766 = vmatprep.subr.mxu0 0.0
  %767 = vmatpush1.msra.mxu0 0.0
  %768 = vmatprep.subr.mxu0 0.0
  %769 = vmatpush1.msra.mxu0 0.0
  %770 = vmatprep.subr.mxu0 0.0
  %771 = vmatpush1.msra.mxu0 0.0
  %772 = vmatprep.subr.mxu0 0.0
  %773 = vmatpush1.msra.mxu0 0.0
  %774 = vmatprep.subr.mxu0 0.0
  %775 = vmatpush1.msra.mxu0 0.0
  %776 = vmatprep.subr.mxu0 0.0
  %777 = vmatpush1.msra.mxu0 0.0
  %778 = vmatprep.subr.mxu0 0.0
  %779 = vmatpush1.msra.mxu0 0.0
  %780 = vmatprep.subr.mxu0 0.0
  %781 = vmatpush1.msra.mxu0 0.0
  %782 = vmatprep.subr.mxu0 0.0
  %783 = vmatpush1.msra.mxu0 0.0
  %784 = vmatprep.subr.mxu0 0.0
  %785 = vmatpush1.msra.mxu0 0.0
  %786 = vmatprep.subr.mxu0 0.0
  %787 = vmatpush1.msra.mxu0 0.0
  %788 = vmatprep.subr.mxu0 0.0
  %789 = vmatpush1.msra.mxu0 0.0
  %790 = vmatprep.subr.mxu0 0.0
  %791 = vmatpush1.msra.mxu0 0.0
  %792 = vmatprep.subr.mxu0 0.0
  %793 = vmatpush1.msra.mxu0 0.0
  %794 = vmatprep.subr.mxu0 0.0
  %795 = vmatpush1.msra.mxu0 0.0
  %796 = vmatprep.subr.mxu0 0.0
  %797 = vmatpush1.msra.mxu0 0.0
  %798 = vmatprep.subr.mxu0 0.0
  %799 = vmatpush1.msra.mxu0 0.0
  %800 = vmatprep.subr.mxu0 0.0
  %801 = vmatpush1.msra.mxu0 0.0
  %802 = vmatprep.subr.mxu0 0.0
  %803 = vmatpush1.msra.mxu0 0.0
  %804 = vmatprep.subr.mxu0 0.0
  %805 = vmatpush1.msra.mxu0 0.0
  %806 = vmatprep.mubr.f32.mxu0 0.0
  %807 = vmatmul.mubr.f32.gmra.mrb[0].mxu0 %v740
  %v808 = vpop.f32.mrb[0].mxu0
  %v809 = vadd.f32 0.0, %v808
  %v810 = vpop.f32.mrb[0].mxu0
  %811 = vdwg.mxu0
  %v812 = vadd.f32 %v243, %v809
  %v813 = vxor.u32 %v812, 2147483648
  %v814 = vmul.f32 %v813, 1.442695
  %v815 = vpow.pop %v814
  %v816 = vadd.f32 %v815, 1.0
  %v817 = vrcp.pop %v816
  %v818 = vmul.f32 1.0, %v817
  %v819 = vtanh.pop %v812
  %v820 = vmul.f32 %v818, %v736
  %822 = vrot.lane.b32.xlu0 %v819, 32
  %v823 = vpop.permute.xlu0 %822
  %v825 = vmul.f32 %v818, %v823
  %827 = vrot.lane.b32.xlu0 %v825, 32
  %v828 = vpop.permute.xlu0 %827
  %v830 = vadd.f32 %v820, %v828
  %v831 = vtanh.pop %v830
  %833 = vrot.lane.b32.xlu0 %v831, 32
  %v834 = vpop.permute.xlu0 %833
  %v836 = vmul.f32 %v818, %v834
  %838 = vset.pattern.permute.xlu0 0
  %839 = vperm.xlu0 %838, %v120
  %v840 = vpop.permute.xlu0 %839
  %843 = vrot.lane.b32.xlu0 %v830, 96
  %v844 = vpop.permute.xlu0 %843
  %v845 = vsel %vm276, %v844, 0
  %847 = vmatprep.subr.mxu0 0.0
  %848 = vmatpush1.msra.mxu0 %v59
  %849 = vmatprep.subr.mxu0 0.0
  %850 = vmatpush1.msra.mxu0 %v60
  %851 = vmatprep.subr.mxu0 0.0
  %852 = vmatpush1.msra.mxu0 %v61
  %853 = vmatprep.subr.mxu0 0.0
  %854 = vmatpush1.msra.mxu0 %v62
  %855 = vmatprep.subr.mxu0 0.0
  %856 = vmatpush1.msra.mxu0 0.0
  %857 = vmatprep.subr.mxu0 0.0
  %858 = vmatpush1.msra.mxu0 0.0
  %859 = vmatprep.subr.mxu0 0.0
  %860 = vmatpush1.msra.mxu0 0.0
  %861 = vmatprep.subr.mxu0 0.0
  %862 = vmatpush1.msra.mxu0 0.0
  %863 = vmatprep.subr.mxu0 0.0
  %864 = vmatpush1.msra.mxu0 0.0
  %865 = vmatprep.subr.mxu0 0.0
  %866 = vmatpush1.msra.mxu0 0.0
  %867 = vmatprep.subr.mxu0 0.0
  %868 = vmatpush1.msra.mxu0 0.0
  %869 = vmatprep.subr.mxu0 0.0
  %870 = vmatpush1.msra.mxu0 0.0
  %871 = vmatprep.subr.mxu0 0.0
  %872 = vmatpush1.msra.mxu0 0.0
  %873 = vmatprep.subr.mxu0 0.0
  %874 = vmatpush1.msra.mxu0 0.0
  %875 = vmatprep.subr.mxu0 0.0
  %876 = vmatpush1.msra.mxu0 0.0
  %877 = vmatprep.subr.mxu0 0.0
  %878 = vmatpush1.msra.mxu0 0.0
  %879 = vmatprep.subr.mxu0 0.0
  %880 = vmatpush1.msra.mxu0 0.0
  %881 = vmatprep.subr.mxu0 0.0
  %882 = vmatpush1.msra.mxu0 0.0
  %883 = vmatprep.subr.mxu0 0.0
  %884 = vmatpush1.msra.mxu0 0.0
  %885 = vmatprep.subr.mxu0 0.0
  %886 = vmatpush1.msra.mxu0 0.0
  %887 = vmatprep.subr.mxu0 0.0
  %888 = vmatpush1.msra.mxu0 0.0
  %889 = vmatprep.subr.mxu0 0.0
  %890 = vmatpush1.msra.mxu0 0.0
  %891 = vmatprep.subr.mxu0 0.0
  %892 = vmatpush1.msra.mxu0 0.0
  %893 = vmatprep.subr.mxu0 0.0
  %894 = vmatpush1.msra.mxu0 0.0
  %895 = vmatprep.subr.mxu0 0.0
  %896 = vmatpush1.msra.mxu0 0.0
  %897 = vmatprep.subr.mxu0 0.0
  %898 = vmatpush1.msra.mxu0 0.0
  %899 = vmatprep.subr.mxu0 0.0
  %900 = vmatpush1.msra.mxu0 0.0
  %901 = vmatprep.subr.mxu0 0.0
  %902 = vmatpush1.msra.mxu0 0.0
  %903 = vmatprep.subr.mxu0 0.0
  %904 = vmatpush1.msra.mxu0 0.0
  %905 = vmatprep.subr.mxu0 0.0
  %906 = vmatpush1.msra.mxu0 0.0
  %907 = vmatprep.subr.mxu0 0.0
  %908 = vmatpush1.msra.mxu0 0.0
  %909 = vmatprep.subr.mxu0 0.0
  %910 = vmatpush1.msra.mxu0 0.0
  %911 = vmatprep.mubr.f32.mxu0 0.0
  %912 = vmatmul.mubr.f32.gmra.mrb[0].mxu0 %v845
  %v913 = vpop.f32.mrb[0].mxu0
  %v914 = vadd.f32 %v76, %v913
  %v915 = vpop.f32.mrb[0].mxu0
  %916 = vdwg.mxu0
  %v917 = vtanh.pop %v914
  %919 = vrot.lane.b32.xlu0 %v917, 32
  %v920 = vpop.permute.xlu0 %919
  %v922 = vsub.f32 %v830, %v920
  %v923 = vmul.f32 %v917, %v840
  %925 = vrot.lane.b32.xlu0 %v923, 32
  %v926 = vpop.permute.xlu0 %925
  %v928 = vadd.f32 %v922, %v926
  %930 = vrot.lane.b32.xlu0 %v836, 64
  %v931 = vpop.permute.xlu0 %930
  %v932 = vsel %vm276, %v931, 0
  %934 = vmatprep.subr.mxu0 0.0
  %935 = vmatpush1.msra.mxu0 %v55
  %936 = vmatprep.subr.mxu0 0.0
  %937 = vmatpush1.msra.mxu0 %v56
  %938 = vmatprep.subr.mxu0 0.0
  %939 = vmatpush1.msra.mxu0 %v57
  %940 = vmatprep.subr.mxu0 0.0
  %941 = vmatpush1.msra.mxu0 %v58
  %942 = vmatprep.subr.mxu0 0.0
  %943 = vmatpush1.msra.mxu0 0.0
  %944 = vmatprep.subr.mxu0 0.0
  %945 = vmatpush1.msra.mxu0 0.0
  %946 = vmatprep.subr.mxu0 0.0
  %947 = vmatpush1.msra.mxu0 0.0
  %948 = vmatprep.subr.mxu0 0.0
  %949 = vmatpush1.msra.mxu0 0.0
  %950 = vmatprep.subr.mxu0 0.0
  %951 = vmatpush1.msra.mxu0 0.0
  %952 = vmatprep.subr.mxu0 0.0
  %953 = vmatpush1.msra.mxu0 0.0
  %954 = vmatprep.subr.mxu0 0.0
  %955 = vmatpush1.msra.mxu0 0.0
  %956 = vmatprep.subr.mxu0 0.0
  %957 = vmatpush1.msra.mxu0 0.0
  %958 = vmatprep.subr.mxu0 0.0
  %959 = vmatpush1.msra.mxu0 0.0
  %960 = vmatprep.subr.mxu0 0.0
  %961 = vmatpush1.msra.mxu0 0.0
  %962 = vmatprep.subr.mxu0 0.0
  %963 = vmatpush1.msra.mxu0 0.0
  %964 = vmatprep.subr.mxu0 0.0
  %965 = vmatpush1.msra.mxu0 0.0
  %966 = vmatprep.subr.mxu0 0.0
  %967 = vmatpush1.msra.mxu0 0.0
  %968 = vmatprep.subr.mxu0 0.0
  %969 = vmatpush1.msra.mxu0 0.0
  %970 = vmatprep.subr.mxu0 0.0
  %971 = vmatpush1.msra.mxu0 0.0
  %972 = vmatprep.subr.mxu0 0.0
  %973 = vmatpush1.msra.mxu0 0.0
  %974 = vmatprep.subr.mxu0 0.0
  %975 = vmatpush1.msra.mxu0 0.0
  %976 = vmatprep.subr.mxu0 0.0
  %977 = vmatpush1.msra.mxu0 0.0
  %978 = vmatprep.subr.mxu0 0.0
  %979 = vmatpush1.msra.mxu0 0.0
  %980 = vmatprep.subr.mxu0 0.0
  %981 = vmatpush1.msra.mxu0 0.0
  %982 = vmatprep.subr.mxu0 0.0
  %983 = vmatpush1.msra.mxu0 0.0
  %984 = vmatprep.subr.mxu0 0.0
  %985 = vmatpush1.msra.mxu0 0.0
  %986 = vmatprep.subr.mxu0 0.0
  %987 = vmatpush1.msra.mxu0 0.0
  %988 = vmatprep.subr.mxu0 0.0
  %989 = vmatpush1.msra.mxu0 0.0
  %990 = vmatprep.subr.mxu0 0.0
  %991 = vmatpush1.msra.mxu0 0.0
  %992 = vmatprep.subr.mxu0 0.0
  %993 = vmatpush1.msra.mxu0 0.0
  %994 = vmatprep.subr.mxu0 0.0
  %995 = vmatpush1.msra.mxu0 0.0
  %996 = vmatprep.subr.mxu0 0.0
  %997 = vmatpush1.msra.mxu0 0.0
  %998 = vmatprep.mubr.f32.mxu0 0.0
  %999 = vmatmul.mubr.f32.gmra.mrb[0].mxu0 %v932
  %v1000 = vpop.f32.mrb[0].mxu0
  %v1001 = vadd.f32 0.0, %v1000
  %v1002 = vpop.f32.mrb[0].mxu0
  %1003 = vdwg.mxu0
  %v1004 = vadd.f32 %v248, %v1001
  %v1005 = vxor.u32 %v1004, 2147483648
  %v1006 = vmul.f32 %v1005, 1.442695
  %v1007 = vpow.pop %v1006
  %v1008 = vadd.f32 %v1007, 1.0
  %v1009 = vrcp.pop %v1008
  %v1010 = vmul.f32 1.0, %v1009
  %v1011 = vtanh.pop %v1004
  %v1012 = vmul.f32 %v1010, %v928
  %1014 = vrot.lane.b32.xlu0 %v1011, 32
  %v1015 = vpop.permute.xlu0 %1014
  %v1017 = vmul.f32 %v1010, %v1015
  %1019 = vrot.lane.b32.xlu0 %v1017, 32
  %v1020 = vpop.permute.xlu0 %1019
  %v1022 = vadd.f32 %v1012, %v1020
  %v1023 = vtanh.pop %v1022
  %1025 = vrot.lane.b32.xlu0 %v1023, 32
  %v1026 = vpop.permute.xlu0 %1025
  %v1028 = vmul.f32 %v1010, %v1026
  %1030 = vset.pattern.permute.xlu0 0
  %1031 = vperm.xlu0 %1030, %v121
  %v1032 = vpop.permute.xlu0 %1031
  %1035 = vrot.lane.b32.xlu0 %v1022, 96
  %v1036 = vpop.permute.xlu0 %1035
  %v1037 = vsel %vm276, %v1036, 0
  %1039 = vmatprep.subr.mxu0 0.0
  %1040 = vmatpush1.msra.mxu0 %v59
  %1041 = vmatprep.subr.mxu0 0.0
  %1042 = vmatpush1.msra.mxu0 %v60
  %1043 = vmatprep.subr.mxu0 0.0
  %1044 = vmatpush1.msra.mxu0 %v61
  %1045 = vmatprep.subr.mxu0 0.0
  %1046 = vmatpush1.msra.mxu0 %v62
  %1047 = vmatprep.subr.mxu0 0.0
  %1048 = vmatpush1.msra.mxu0 0.0
  %1049 = vmatprep.subr.mxu0 0.0
  %1050 = vmatpush1.msra.mxu0 0.0
  %1051 = vmatprep.subr.mxu0 0.0
  %1052 = vmatpush1.msra.mxu0 0.0
  %1053 = vmatprep.subr.mxu0 0.0
  %1054 = vmatpush1.msra.mxu0 0.0
  %1055 = vmatprep.subr.mxu0 0.0
  %1056 = vmatpush1.msra.mxu0 0.0
  %1057 = vmatprep.subr.mxu0 0.0
  %1058 = vmatpush1.msra.mxu0 0.0
  %1059 = vmatprep.subr.mxu0 0.0
  %1060 = vmatpush1.msra.mxu0 0.0
  %1061 = vmatprep.subr.mxu0 0.0
  %1062 = vmatpush1.msra.mxu0 0.0
  %1063 = vmatprep.subr.mxu0 0.0
  %1064 = vmatpush1.msra.mxu0 0.0
  %1065 = vmatprep.subr.mxu0 0.0
  %1066 = vmatpush1.msra.mxu0 0.0
  %1067 = vmatprep.subr.mxu0 0.0
  %1068 = vmatpush1.msra.mxu0 0.0
  %1069 = vmatprep.subr.mxu0 0.0
  %1070 = vmatpush1.msra.mxu0 0.0
  %1071 = vmatprep.subr.mxu0 0.0
  %1072 = vmatpush1.msra.mxu0 0.0
  %1073 = vmatprep.subr.mxu0 0.0
  %1074 = vmatpush1.msra.mxu0 0.0
  %1075 = vmatprep.subr.mxu0 0.0
  %1076 = vmatpush1.msra.mxu0 0.0
  %1077 = vmatprep.subr.mxu0 0.0
  %1078 = vmatpush1.msra.mxu0 0.0
  %1079 = vmatprep.subr.mxu0 0.0
  %1080 = vmatpush1.msra.mxu0 0.0
  %1081 = vmatprep.subr.mxu0 0.0
  %1082 = vmatpush1.msra.mxu0 0.0
  %1083 = vmatprep.subr.mxu0 0.0
  %1084 = vmatpush1.msra.mxu0 0.0
  %1085 = vmatprep.subr.mxu0 0.0
  %1086 = vmatpush1.msra.mxu0 0.0
  %1087 = vmatprep.subr.mxu0 0.0
  %1088 = vmatpush1.msra.mxu0 0.0
  %1089 = vmatprep.subr.mxu0 0.0
  %1090 = vmatpush1.msra.mxu0 0.0
  %1091 = vmatprep.subr.mxu0 0.0
  %1092 = vmatpush1.msra.mxu0 0.0
  %1093 = vmatprep.subr.mxu0 0.0
  %1094 = vmatpush1.msra.mxu0 0.0
  %1095 = vmatprep.subr.mxu0 0.0
  %1096 = vmatpush1.msra.mxu0 0.0
  %1097 = vmatprep.subr.mxu0 0.0
  %1098 = vmatpush1.msra.mxu0 0.0
  %1099 = vmatprep.subr.mxu0 0.0
  %1100 = vmatpush1.msra.mxu0 0.0
  %1101 = vmatprep.subr.mxu0 0.0
  %1102 = vmatpush1.msra.mxu0 0.0
  %1103 = vmatprep.mubr.f32.mxu0 0.0
  %1104 = vmatmul.mubr.f32.gmra.mrb[0].mxu0 %v1037
  %v1105 = vpop.f32.mrb[0].mxu0
  %v1106 = vadd.f32 %v76, %v1105
  %v1107 = vpop.f32.mrb[0].mxu0
  %1108 = vdwg.mxu0
  %v1109 = vtanh.pop %v1106
  %1111 = vrot.lane.b32.xlu0 %v1109, 32
  %v1112 = vpop.permute.xlu0 %1111
  %v1114 = vsub.f32 %v1022, %v1112
  %v1115 = vmul.f32 %v1109, %v1032
  %1117 = vrot.lane.b32.xlu0 %v1115, 32
  %v1118 = vpop.permute.xlu0 %1117
  %v1120 = vadd.f32 %v1114, %v1118
  %1122 = vrot.lane.b32.xlu0 %v1028, 64
  %v1123 = vpop.permute.xlu0 %1122
  %v1124 = vsel %vm276, %v1123, 0
  %1126 = vmatprep.subr.mxu0 0.0
  %1127 = vmatpush1.msra.mxu0 %v55
  %1128 = vmatprep.subr.mxu0 0.0
  %1129 = vmatpush1.msra.mxu0 %v56
  %1130 = vmatprep.subr.mxu0 0.0
  %1131 = vmatpush1.msra.mxu0 %v57
  %1132 = vmatprep.subr.mxu0 0.0
  %1133 = vmatpush1.msra.mxu0 %v58
  %1134 = vmatprep.subr.mxu0 0.0
  %1135 = vmatpush1.msra.mxu0 0.0
  %1136 = vmatprep.subr.mxu0 0.0
  %1137 = vmatpush1.msra.mxu0 0.0
  %1138 = vmatprep.subr.mxu0 0.0
  %1139 = vmatpush1.msra.mxu0 0.0
  %1140 = vmatprep.subr.mxu0 0.0
  %1141 = vmatpush1.msra.mxu0 0.0
  %1142 = vmatprep.subr.mxu0 0.0
  %1143 = vmatpush1.msra.mxu0 0.0
  %1144 = vmatprep.subr.mxu0 0.0
  %1145 = vmatpush1.msra.mxu0 0.0
  %1146 = vmatprep.subr.mxu0 0.0
  %1147 = vmatpush1.msra.mxu0 0.0
  %1148 = vmatprep.subr.mxu0 0.0
  %1149 = vmatpush1.msra.mxu0 0.0
  %1150 = vmatprep.subr.mxu0 0.0
  %1151 = vmatpush1.msra.mxu0 0.0
  %1152 = vmatprep.subr.mxu0 0.0
  %1153 = vmatpush1.msra.mxu0 0.0
  %1154 = vmatprep.subr.mxu0 0.0
  %1155 = vmatpush1.msra.mxu0 0.0
  %1156 = vmatprep.subr.mxu0 0.0
  %1157 = vmatpush1.msra.mxu0 0.0
  %1158 = vmatprep.subr.mxu0 0.0
  %1159 = vmatpush1.msra.mxu0 0.0
  %1160 = vmatprep.subr.mxu0 0.0
  %1161 = vmatpush1.msra.mxu0 0.0
  %1162 = vmatprep.subr.mxu0 0.0
  %1163 = vmatpush1.msra.mxu0 0.0
  %1164 = vmatprep.subr.mxu0 0.0
  %1165 = vmatpush1.msra.mxu0 0.0
  %1166 = vmatprep.subr.mxu0 0.0
  %1167 = vmatpush1.msra.mxu0 0.0
  %1168 = vmatprep.subr.mxu0 0.0
  %1169 = vmatpush1.msra.mxu0 0.0
  %1170 = vmatprep.subr.mxu0 0.0
  %1171 = vmatpush1.msra.mxu0 0.0
  %1172 = vmatprep.subr.mxu0 0.0
  %1173 = vmatpush1.msra.mxu0 0.0
  %1174 = vmatprep.subr.mxu0 0.0
  %1175 = vmatpush1.msra.mxu0 0.0
  %1176 = vmatprep.subr.mxu0 0.0
  %1177 = vmatpush1.msra.mxu0 0.0
  %1178 = vmatprep.subr.mxu0 0.0
  %1179 = vmatpush1.msra.mxu0 0.0
  %1180 = vmatprep.subr.mxu0 0.0
  %1181 = vmatpush1.msra.mxu0 0.0
  %1182 = vmatprep.subr.mxu0 0.0
  %1183 = vmatpush1.msra.mxu0 0.0
  %1184 = vmatprep.subr.mxu0 0.0
  %1185 = vmatpush1.msra.mxu0 0.0
  %1186 = vmatprep.subr.mxu0 0.0
  %1187 = vmatpush1.msra.mxu0 0.0
  %1188 = vmatprep.subr.mxu0 0.0
  %1189 = vmatpush1.msra.mxu0 0.0
  %1190 = vmatprep.mubr.f32.mxu0 0.0
  %1191 = vmatmul.mubr.f32.gmra.mrb[0].mxu0 %v1124
  %v1192 = vpop.f32.mrb[0].mxu0
  %v1193 = vadd.f32 0.0, %v1192
  %v1194 = vpop.f32.mrb[0].mxu0
  %1195 = vdwg.mxu0
  %v1196 = vadd.f32 %v253, %v1193
  %v1197 = vxor.u32 %v1196, 2147483648
  %v1198 = vmul.f32 %v1197, 1.442695
  %v1199 = vpow.pop %v1198
  %v1200 = vadd.f32 %v1199, 1.0
  %v1201 = vrcp.pop %v1200
  %v1202 = vmul.f32 1.0, %v1201
  %v1203 = vtanh.pop %v1196
  %v1204 = vmul.f32 %v1202, %v1120
  %1206 = vrot.lane.b32.xlu0 %v1203, 32
  %v1207 = vpop.permute.xlu0 %1206
  %v1209 = vmul.f32 %v1202, %v1207
  %1211 = vrot.lane.b32.xlu0 %v1209, 32
  %v1212 = vpop.permute.xlu0 %1211
  %v1214 = vadd.f32 %v1204, %v1212
  %v1215 = vtanh.pop %v1214
  %1217 = vrot.lane.b32.xlu0 %v1215, 32
  %v1218 = vpop.permute.xlu0 %1217
  %v1220 = vmul.f32 %v1202, %v1218
  %1222 = vset.pattern.permute.xlu0 0
  %1223 = vperm.xlu0 %1222, %v122
  %v1224 = vpop.permute.xlu0 %1223
  %1227 = vrot.lane.b32.xlu0 %v1214, 96
  %v1228 = vpop.permute.xlu0 %1227
  %v1229 = vsel %vm276, %v1228, 0
  %1231 = vmatprep.subr.mxu0 0.0
  %1232 = vmatpush1.msra.mxu0 %v59
  %1233 = vmatprep.subr.mxu0 0.0
  %1234 = vmatpush1.msra.mxu0 %v60
  %1235 = vmatprep.subr.mxu0 0.0
  %1236 = vmatpush1.msra.mxu0 %v61
  %1237 = vmatprep.subr.mxu0 0.0
  %1238 = vmatpush1.msra.mxu0 %v62
  %1239 = vmatprep.subr.mxu0 0.0
  %1240 = vmatpush1.msra.mxu0 0.0
  %1241 = vmatprep.subr.mxu0 0.0
  %1242 = vmatpush1.msra.mxu0 0.0
  %1243 = vmatprep.subr.mxu0 0.0
  %1244 = vmatpush1.msra.mxu0 0.0
  %1245 = vmatprep.subr.mxu0 0.0
  %1246 = vmatpush1.msra.mxu0 0.0
  %1247 = vmatprep.subr.mxu0 0.0
  %1248 = vmatpush1.msra.mxu0 0.0
  %1249 = vmatprep.subr.mxu0 0.0
  %1250 = vmatpush1.msra.mxu0 0.0
  %1251 = vmatprep.subr.mxu0 0.0
  %1252 = vmatpush1.msra.mxu0 0.0
  %1253 = vmatprep.subr.mxu0 0.0
  %1254 = vmatpush1.msra.mxu0 0.0
  %1255 = vmatprep.subr.mxu0 0.0
  %1256 = vmatpush1.msra.mxu0 0.0
  %1257 = vmatprep.subr.mxu0 0.0
  %1258 = vmatpush1.msra.mxu0 0.0
  %1259 = vmatprep.subr.mxu0 0.0
  %1260 = vmatpush1.msra.mxu0 0.0
  %1261 = vmatprep.subr.mxu0 0.0
  %1262 = vmatpush1.msra.mxu0 0.0
  %1263 = vmatprep.subr.mxu0 0.0
  %1264 = vmatpush1.msra.mxu0 0.0
  %1265 = vmatprep.subr.mxu0 0.0
  %1266 = vmatpush1.msra.mxu0 0.0
  %1267 = vmatprep.subr.mxu0 0.0
  %1268 = vmatpush1.msra.mxu0 0.0
  %1269 = vmatprep.subr.mxu0 0.0
  %1270 = vmatpush1.msra.mxu0 0.0
  %1271 = vmatprep.subr.mxu0 0.0
  %1272 = vmatpush1.msra.mxu0 0.0
  %1273 = vmatprep.subr.mxu0 0.0
  %1274 = vmatpush1.msra.mxu0 0.0
  %1275 = vmatprep.subr.mxu0 0.0
  %1276 = vmatpush1.msra.mxu0 0.0
  %1277 = vmatprep.subr.mxu0 0.0
  %1278 = vmatpush1.msra.mxu0 0.0
  %1279 = vmatprep.subr.mxu0 0.0
  %1280 = vmatpush1.msra.mxu0 0.0
  %1281 = vmatprep.subr.mxu0 0.0
  %1282 = vmatpush1.msra.mxu0 0.0
  %1283 = vmatprep.subr.mxu0 0.0
  %1284 = vmatpush1.msra.mxu0 0.0
  %1285 = vmatprep.subr.mxu0 0.0
  %1286 = vmatpush1.msra.mxu0 0.0
  %1287 = vmatprep.subr.mxu0 0.0
  %1288 = vmatpush1.msra.mxu0 0.0
  %1289 = vmatprep.subr.mxu0 0.0
  %1290 = vmatpush1.msra.mxu0 0.0
  %1291 = vmatprep.subr.mxu0 0.0
  %1292 = vmatpush1.msra.mxu0 0.0
  %1293 = vmatprep.subr.mxu0 0.0
  %1294 = vmatpush1.msra.mxu0 0.0
  %1295 = vmatprep.mubr.f32.mxu0 0.0
  %1296 = vmatmul.mubr.f32.gmra.mrb[0].mxu0 %v1229
  %v1297 = vpop.f32.mrb[0].mxu0
  %v1298 = vadd.f32 %v76, %v1297
  %v1299 = vpop.f32.mrb[0].mxu0
  %1300 = vdwg.mxu0
  %v1301 = vtanh.pop %v1298
  %1303 = vrot.lane.b32.xlu0 %v1301, 32
  %v1304 = vpop.permute.xlu0 %1303
  %v1306 = vsub.f32 %v1214, %v1304
  %v1307 = vmul.f32 %v1301, %v1224
  %1309 = vrot.lane.b32.xlu0 %v1307, 32
  %v1310 = vpop.permute.xlu0 %1309
  %v1312 = vadd.f32 %v1306, %v1310
  %1314 = vrot.lane.b32.xlu0 %v1220, 64
  %v1315 = vpop.permute.xlu0 %1314
  %v1316 = vsel %vm276, %v1315, 0
  %1318 = vmatprep.subr.mxu0 0.0
  %1319 = vmatpush1.msra.mxu0 %v55
  %1320 = vmatprep.subr.mxu0 0.0
  %1321 = vmatpush1.msra.mxu0 %v56
  %1322 = vmatprep.subr.mxu0 0.0
  %1323 = vmatpush1.msra.mxu0 %v57
  %1324 = vmatprep.subr.mxu0 0.0
  %1325 = vmatpush1.msra.mxu0 %v58
  %1326 = vmatprep.subr.mxu0 0.0
  %1327 = vmatpush1.msra.mxu0 0.0
  %1328 = vmatprep.subr.mxu0 0.0
  %1329 = vmatpush1.msra.mxu0 0.0
  %1330 = vmatprep.subr.mxu0 0.0
  %1331 = vmatpush1.msra.mxu0 0.0
  %1332 = vmatprep.subr.mxu0 0.0
  %1333 = vmatpush1.msra.mxu0 0.0
  %1334 = vmatprep.subr.mxu0 0.0
  %1335 = vmatpush1.msra.mxu0 0.0
  %1336 = vmatprep.subr.mxu0 0.0
  %1337 = vmatpush1.msra.mxu0 0.0
  %1338 = vmatprep.subr.mxu0 0.0
  %1339 = vmatpush1.msra.mxu0 0.0
  %1340 = vmatprep.subr.mxu0 0.0
  %1341 = vmatpush1.msra.mxu0 0.0
  %1342 = vmatprep.subr.mxu0 0.0
  %1343 = vmatpush1.msra.mxu0 0.0
  %1344 = vmatprep.subr.mxu0 0.0
  %1345 = vmatpush1.msra.mxu0 0.0
  %1346 = vmatprep.subr.mxu0 0.0
  %1347 = vmatpush1.msra.mxu0 0.0
  %1348 = vmatprep.subr.mxu0 0.0
  %1349 = vmatpush1.msra.mxu0 0.0
  %1350 = vmatprep.subr.mxu0 0.0
  %1351 = vmatpush1.msra.mxu0 0.0
  %1352 = vmatprep.subr.mxu0 0.0
  %1353 = vmatpush1.msra.mxu0 0.0
  %1354 = vmatprep.subr.mxu0 0.0
  %1355 = vmatpush1.msra.mxu0 0.0
  %1356 = vmatprep.subr.mxu0 0.0
  %1357 = vmatpush1.msra.mxu0 0.0
  %1358 = vmatprep.subr.mxu0 0.0
  %1359 = vmatpush1.msra.mxu0 0.0
  %1360 = vmatprep.subr.mxu0 0.0
  %1361 = vmatpush1.msra.mxu0 0.0
  %1362 = vmatprep.subr.mxu0 0.0
  %1363 = vmatpush1.msra.mxu0 0.0
  %1364 = vmatprep.subr.mxu0 0.0
  %1365 = vmatpush1.msra.mxu0 0.0
  %1366 = vmatprep.subr.mxu0 0.0
  %1367 = vmatpush1.msra.mxu0 0.0
  %1368 = vmatprep.subr.mxu0 0.0
  %1369 = vmatpush1.msra.mxu0 0.0
  %1370 = vmatprep.subr.mxu0 0.0
  %1371 = vmatpush1.msra.mxu0 0.0
  %1372 = vmatprep.subr.mxu0 0.0
  %1373 = vmatpush1.msra.mxu0 0.0
  %1374 = vmatprep.subr.mxu0 0.0
  %1375 = vmatpush1.msra.mxu0 0.0
  %1376 = vmatprep.subr.mxu0 0.0
  %1377 = vmatpush1.msra.mxu0 0.0
  %1378 = vmatprep.subr.mxu0 0.0
  %1379 = vmatpush1.msra.mxu0 0.0
  %1380 = vmatprep.subr.mxu0 0.0
  %1381 = vmatpush1.msra.mxu0 0.0
  %1382 = vmatprep.mubr.f32.mxu0 0.0
  %1383 = vmatmul.mubr.f32.gmra.mrb[0].mxu0 %v1316
  %v1384 = vpop.f32.mrb[0].mxu0
  %v1385 = vadd.f32 0.0, %v1384
  %v1386 = vpop.f32.mrb[0].mxu0
  %1387 = vdwg.mxu0
  %v1388 = vadd.f32 %v258, %v1385
  %v1389 = vxor.u32 %v1388, 2147483648
  %v1390 = vmul.f32 %v1389, 1.442695
  %v1391 = vpow.pop %v1390
  %v1392 = vadd.f32 %v1391, 1.0
  %v1393 = vrcp.pop %v1392
  %v1394 = vmul.f32 1.0, %v1393
  %v1395 = vtanh.pop %v1388
  %v1396 = vmul.f32 %v1394, %v1312
  %1398 = vrot.lane.b32.xlu0 %v1395, 32
  %v1399 = vpop.permute.xlu0 %1398
  %v1401 = vmul.f32 %v1394, %v1399
  %1403 = vrot.lane.b32.xlu0 %v1401, 32
  %v1404 = vpop.permute.xlu0 %1403
  %v1406 = vadd.f32 %v1396, %v1404
  %v1407 = vtanh.pop %v1406
  %1409 = vrot.lane.b32.xlu0 %v1407, 32
  %v1410 = vpop.permute.xlu0 %1409
  %v1412 = vmul.f32 %v1394, %v1410
  %1414 = vset.pattern.permute.xlu0 0
  %1415 = vperm.xlu0 %1414, %v123
  %v1416 = vpop.permute.xlu0 %1415
  %1419 = vrot.lane.b32.xlu0 %v1406, 96
  %v1420 = vpop.permute.xlu0 %1419
  %v1421 = vsel %vm276, %v1420, 0
  %1423 = vmatprep.subr.mxu0 0.0
  %1424 = vmatpush1.msra.mxu0 %v59
  %1425 = vmatprep.subr.mxu0 0.0
  %1426 = vmatpush1.msra.mxu0 %v60
  %1427 = vmatprep.subr.mxu0 0.0
  %1428 = vmatpush1.msra.mxu0 %v61
  %1429 = vmatprep.subr.mxu0 0.0
  %1430 = vmatpush1.msra.mxu0 %v62
  %1431 = vmatprep.subr.mxu0 0.0
  %1432 = vmatpush1.msra.mxu0 0.0
  %1433 = vmatprep.subr.mxu0 0.0
  %1434 = vmatpush1.msra.mxu0 0.0
  %1435 = vmatprep.subr.mxu0 0.0
  %1436 = vmatpush1.msra.mxu0 0.0
  %1437 = vmatprep.subr.mxu0 0.0
  %1438 = vmatpush1.msra.mxu0 0.0
  %1439 = vmatprep.subr.mxu0 0.0
  %1440 = vmatpush1.msra.mxu0 0.0
  %1441 = vmatprep.subr.mxu0 0.0
  %1442 = vmatpush1.msra.mxu0 0.0
  %1443 = vmatprep.subr.mxu0 0.0
  %1444 = vmatpush1.msra.mxu0 0.0
  %1445 = vmatprep.subr.mxu0 0.0
  %1446 = vmatpush1.msra.mxu0 0.0
  %1447 = vmatprep.subr.mxu0 0.0
  %1448 = vmatpush1.msra.mxu0 0.0
  %1449 = vmatprep.subr.mxu0 0.0
  %1450 = vmatpush1.msra.mxu0 0.0
  %1451 = vmatprep.subr.mxu0 0.0
  %1452 = vmatpush1.msra.mxu0 0.0
  %1453 = vmatprep.subr.mxu0 0.0
  %1454 = vmatpush1.msra.mxu0 0.0
  %1455 = vmatprep.subr.mxu0 0.0
  %1456 = vmatpush1.msra.mxu0 0.0
  %1457 = vmatprep.subr.mxu0 0.0
  %1458 = vmatpush1.msra.mxu0 0.0
  %1459 = vmatprep.subr.mxu0 0.0
  %1460 = vmatpush1.msra.mxu0 0.0
  %1461 = vmatprep.subr.mxu0 0.0
  %1462 = vmatpush1.msra.mxu0 0.0
  %1463 = vmatprep.subr.mxu0 0.0
  %1464 = vmatpush1.msra.mxu0 0.0
  %1465 = vmatprep.subr.mxu0 0.0
  %1466 = vmatpush1.msra.mxu0 0.0
  %1467 = vmatprep.subr.mxu0 0.0
  %1468 = vmatpush1.msra.mxu0 0.0
  %1469 = vmatprep.subr.mxu0 0.0
  %1470 = vmatpush1.msra.mxu0 0.0
  %1471 = vmatprep.subr.mxu0 0.0
  %1472 = vmatpush1.msra.mxu0 0.0
  %1473 = vmatprep.subr.mxu0 0.0
  %1474 = vmatpush1.msra.mxu0 0.0
  %1475 = vmatprep.subr.mxu0 0.0
  %1476 = vmatpush1.msra.mxu0 0.0
  %1477 = vmatprep.subr.mxu0 0.0
  %1478 = vmatpush1.msra.mxu0 0.0
  %1479 = vmatprep.subr.mxu0 0.0
  %1480 = vmatpush1.msra.mxu0 0.0
  %1481 = vmatprep.subr.mxu0 0.0
  %1482 = vmatpush1.msra.mxu0 0.0
  %1483 = vmatprep.subr.mxu0 0.0
  %1484 = vmatpush1.msra.mxu0 0.0
  %1485 = vmatprep.subr.mxu0 0.0
  %1486 = vmatpush1.msra.mxu0 0.0
  %1487 = vmatprep.mubr.f32.mxu0 0.0
  %1488 = vmatmul.mubr.f32.gmra.mrb[0].mxu0 %v1421
  %v1489 = vpop.f32.mrb[0].mxu0
  %v1490 = vadd.f32 %v76, %v1489
  %v1491 = vpop.f32.mrb[0].mxu0
  %1492 = vdwg.mxu0
  %v1493 = vtanh.pop %v1490
  %1495 = vrot.lane.b32.xlu0 %v1493, 32
  %v1496 = vpop.permute.xlu0 %1495
  %v1498 = vsub.f32 %v1406, %v1496
  %v1499 = vmul.f32 %v1493, %v1416
  %1501 = vrot.lane.b32.xlu0 %v1499, 32
  %v1502 = vpop.permute.xlu0 %1501
  %v1504 = vadd.f32 %v1498, %v1502
  %1506 = vrot.lane.b32.xlu0 %v1412, 64
  %v1507 = vpop.permute.xlu0 %1506
  %v1508 = vsel %vm276, %v1507, 0
  %1510 = vmatprep.subr.mxu0 0.0
  %1511 = vmatpush1.msra.mxu0 %v55
  %1512 = vmatprep.subr.mxu0 0.0
  %1513 = vmatpush1.msra.mxu0 %v56
  %1514 = vmatprep.subr.mxu0 0.0
  %1515 = vmatpush1.msra.mxu0 %v57
  %1516 = vmatprep.subr.mxu0 0.0
  %1517 = vmatpush1.msra.mxu0 %v58
  %1518 = vmatprep.subr.mxu0 0.0
  %1519 = vmatpush1.msra.mxu0 0.0
  %1520 = vmatprep.subr.mxu0 0.0
  %1521 = vmatpush1.msra.mxu0 0.0
  %1522 = vmatprep.subr.mxu0 0.0
  %1523 = vmatpush1.msra.mxu0 0.0
  %1524 = vmatprep.subr.mxu0 0.0
  %1525 = vmatpush1.msra.mxu0 0.0
  %1526 = vmatprep.subr.mxu0 0.0
  %1527 = vmatpush1.msra.mxu0 0.0
  %1528 = vmatprep.subr.mxu0 0.0
  %1529 = vmatpush1.msra.mxu0 0.0
  %1530 = vmatprep.subr.mxu0 0.0
  %1531 = vmatpush1.msra.mxu0 0.0
  %1532 = vmatprep.subr.mxu0 0.0
  %1533 = vmatpush1.msra.mxu0 0.0
  %1534 = vmatprep.subr.mxu0 0.0
  %1535 = vmatpush1.msra.mxu0 0.0
  %1536 = vmatprep.subr.mxu0 0.0
  %1537 = vmatpush1.msra.mxu0 0.0
  %1538 = vmatprep.subr.mxu0 0.0
  %1539 = vmatpush1.msra.mxu0 0.0
  %1540 = vmatprep.subr.mxu0 0.0
  %1541 = vmatpush1.msra.mxu0 0.0
  %1542 = vmatprep.subr.mxu0 0.0
  %1543 = vmatpush1.msra.mxu0 0.0
  %1544 = vmatprep.subr.mxu0 0.0
  %1545 = vmatpush1.msra.mxu0 0.0
  %1546 = vmatprep.subr.mxu0 0.0
  %1547 = vmatpush1.msra.mxu0 0.0
  %1548 = vmatprep.subr.mxu0 0.0
  %1549 = vmatpush1.msra.mxu0 0.0
  %1550 = vmatprep.subr.mxu0 0.0
  %1551 = vmatpush1.msra.mxu0 0.0
  %1552 = vmatprep.subr.mxu0 0.0
  %1553 = vmatpush1.msra.mxu0 0.0
  %1554 = vmatprep.subr.mxu0 0.0
  %1555 = vmatpush1.msra.mxu0 0.0
  %1556 = vmatprep.subr.mxu0 0.0
  %1557 = vmatpush1.msra.mxu0 0.0
  %1558 = vmatprep.subr.mxu0 0.0
  %1559 = vmatpush1.msra.mxu0 0.0
  %1560 = vmatprep.subr.mxu0 0.0
  %1561 = vmatpush1.msra.mxu0 0.0
  %1562 = vmatprep.subr.mxu0 0.0
  %1563 = vmatpush1.msra.mxu0 0.0
  %1564 = vmatprep.subr.mxu0 0.0
  %1565 = vmatpush1.msra.mxu0 0.0
  %1566 = vmatprep.subr.mxu0 0.0
  %1567 = vmatpush1.msra.mxu0 0.0
  %1568 = vmatprep.subr.mxu0 0.0
  %1569 = vmatpush1.msra.mxu0 0.0
  %1570 = vmatprep.subr.mxu0 0.0
  %1571 = vmatpush1.msra.mxu0 0.0
  %1572 = vmatprep.subr.mxu0 0.0
  %1573 = vmatpush1.msra.mxu0 0.0
  %1574 = vmatprep.mubr.f32.mxu0 0.0
  %1575 = vmatmul.mubr.f32.gmra.mrb[0].mxu0 %v1508
  %v1576 = vpop.f32.mrb[0].mxu0
  %v1577 = vadd.f32 0.0, %v1576
  %v1578 = vpop.f32.mrb[0].mxu0
  %1579 = vdwg.mxu0
  %v1580 = vadd.f32 %v263, %v1577
  %v1581 = vxor.u32 %v1580, 2147483648
  %v1582 = vmul.f32 %v1581, 1.442695
  %v1583 = vpow.pop %v1582
  %v1584 = vadd.f32 %v1583, 1.0
  %v1585 = vrcp.pop %v1584
  %v1586 = vmul.f32 1.0, %v1585
  %v1587 = vtanh.pop %v1580
  %v1588 = vmul.f32 %v1586, %v1504
  %1590 = vrot.lane.b32.xlu0 %v1587, 32
  %v1591 = vpop.permute.xlu0 %1590
  %v1593 = vmul.f32 %v1586, %v1591
  %1595 = vrot.lane.b32.xlu0 %v1593, 32
  %v1596 = vpop.permute.xlu0 %1595
  %v1598 = vadd.f32 %v1588, %v1596
  %v1599 = vtanh.pop %v1598
  %1601 = vrot.lane.b32.xlu0 %v1599, 32
  %v1602 = vpop.permute.xlu0 %1601
  %v1604 = vmul.f32 %v1586, %v1602
  %1606 = vset.pattern.permute.xlu0 0
  %1607 = vperm.xlu0 %1606, %v124
  %v1608 = vpop.permute.xlu0 %1607
  %1611 = vrot.lane.b32.xlu0 %v1598, 96
  %v1612 = vpop.permute.xlu0 %1611
  %v1613 = vsel %vm276, %v1612, 0
  %1615 = vmatprep.subr.mxu0 0.0
  %1616 = vmatpush1.msra.mxu0 %v59
  %1617 = vmatprep.subr.mxu0 0.0
  %1618 = vmatpush1.msra.mxu0 %v60
  %1619 = vmatprep.subr.mxu0 0.0
  %1620 = vmatpush1.msra.mxu0 %v61
  %1621 = vmatprep.subr.mxu0 0.0
  %1622 = vmatpush1.msra.mxu0 %v62
  %1623 = vmatprep.subr.mxu0 0.0
  %1624 = vmatpush1.msra.mxu0 0.0
  %1625 = vmatprep.subr.mxu0 0.0
  %1626 = vmatpush1.msra.mxu0 0.0
  %1627 = vmatprep.subr.mxu0 0.0
  %1628 = vmatpush1.msra.mxu0 0.0
  %1629 = vmatprep.subr.mxu0 0.0
  %1630 = vmatpush1.msra.mxu0 0.0
  %1631 = vmatprep.subr.mxu0 0.0
  %1632 = vmatpush1.msra.mxu0 0.0
  %1633 = vmatprep.subr.mxu0 0.0
  %1634 = vmatpush1.msra.mxu0 0.0
  %1635 = vmatprep.subr.mxu0 0.0
  %1636 = vmatpush1.msra.mxu0 0.0
  %1637 = vmatprep.subr.mxu0 0.0
  %1638 = vmatpush1.msra.mxu0 0.0
  %1639 = vmatprep.subr.mxu0 0.0
  %1640 = vmatpush1.msra.mxu0 0.0
  %1641 = vmatprep.subr.mxu0 0.0
  %1642 = vmatpush1.msra.mxu0 0.0
  %1643 = vmatprep.subr.mxu0 0.0
  %1644 = vmatpush1.msra.mxu0 0.0
  %1645 = vmatprep.subr.mxu0 0.0
  %1646 = vmatpush1.msra.mxu0 0.0
  %1647 = vmatprep.subr.mxu0 0.0
  %1648 = vmatpush1.msra.mxu0 0.0
  %1649 = vmatprep.subr.mxu0 0.0
  %1650 = vmatpush1.msra.mxu0 0.0
  %1651 = vmatprep.subr.mxu0 0.0
  %1652 = vmatpush1.msra.mxu0 0.0
  %1653 = vmatprep.subr.mxu0 0.0
  %1654 = vmatpush1.msra.mxu0 0.0
  %1655 = vmatprep.subr.mxu0 0.0
  %1656 = vmatpush1.msra.mxu0 0.0
  %1657 = vmatprep.subr.mxu0 0.0
  %1658 = vmatpush1.msra.mxu0 0.0
  %1659 = vmatprep.subr.mxu0 0.0
  %1660 = vmatpush1.msra.mxu0 0.0
  %1661 = vmatprep.subr.mxu0 0.0
  %1662 = vmatpush1.msra.mxu0 0.0
  %1663 = vmatprep.subr.mxu0 0.0
  %1664 = vmatpush1.msra.mxu0 0.0
  %1665 = vmatprep.subr.mxu0 0.0
  %1666 = vmatpush1.msra.mxu0 0.0
  %1667 = vmatprep.subr.mxu0 0.0
  %1668 = vmatpush1.msra.mxu0 0.0
  %1669 = vmatprep.subr.mxu0 0.0
  %1670 = vmatpush1.msra.mxu0 0.0
  %1671 = vmatprep.subr.mxu0 0.0
  %1672 = vmatpush1.msra.mxu0 0.0
  %1673 = vmatprep.subr.mxu0 0.0
  %1674 = vmatpush1.msra.mxu0 0.0
  %1675 = vmatprep.subr.mxu0 0.0
  %1676 = vmatpush1.msra.mxu0 0.0
  %1677 = vmatprep.subr.mxu0 0.0
  %1678 = vmatpush1.msra.mxu0 0.0
  %1679 = vmatprep.mubr.f32.mxu0 0.0
  %1680 = vmatmul.mubr.f32.gmra.mrb[0].mxu0 %v1613
  %v1681 = vpop.f32.mrb[0].mxu0
  %v1682 = vadd.f32 %v76, %v1681
  %v1683 = vpop.f32.mrb[0].mxu0
  %1684 = vdwg.mxu0
  %v1685 = vtanh.pop %v1682
  %1687 = vrot.lane.b32.xlu0 %v1685, 32
  %v1688 = vpop.permute.xlu0 %1687
  %v1690 = vsub.f32 %v1598, %v1688
  %v1691 = vmul.f32 %v1685, %v1608
  %1693 = vrot.lane.b32.xlu0 %v1691, 32
  %v1694 = vpop.permute.xlu0 %1693
  %v1696 = vadd.f32 %v1690, %v1694
  %1698 = vrot.lane.b32.xlu0 %v1604, 64
  %v1699 = vpop.permute.xlu0 %1698
  %v1700 = vsel %vm276, %v1699, 0
  %1702 = vmatprep.subr.mxu0 0.0
  %1703 = vmatpush1.msra.mxu0 %v55
  %1704 = vmatprep.subr.mxu0 0.0
  %1705 = vmatpush1.msra.mxu0 %v56
  %1706 = vmatprep.subr.mxu0 0.0
  %1707 = vmatpush1.msra.mxu0 %v57
  %1708 = vmatprep.subr.mxu0 0.0
  %1709 = vmatpush1.msra.mxu0 %v58
  %1710 = vmatprep.subr.mxu0 0.0
  %1711 = vmatpush1.msra.mxu0 0.0
  %1712 = vmatprep.subr.mxu0 0.0
  %1713 = vmatpush1.msra.mxu0 0.0
  %1714 = vmatprep.subr.mxu0 0.0
  %1715 = vmatpush1.msra.mxu0 0.0
  %1716 = vmatprep.subr.mxu0 0.0
  %1717 = vmatpush1.msra.mxu0 0.0
  %1718 = vmatprep.subr.mxu0 0.0
  %1719 = vmatpush1.msra.mxu0 0.0
  %1720 = vmatprep.subr.mxu0 0.0
  %1721 = vmatpush1.msra.mxu0 0.0
  %1722 = vmatprep.subr.mxu0 0.0
  %1723 = vmatpush1.msra.mxu0 0.0
  %1724 = vmatprep.subr.mxu0 0.0
  %1725 = vmatpush1.msra.mxu0 0.0
  %1726 = vmatprep.subr.mxu0 0.0
  %1727 = vmatpush1.msra.mxu0 0.0
  %1728 = vmatprep.subr.mxu0 0.0
  %1729 = vmatpush1.msra.mxu0 0.0
  %1730 = vmatprep.subr.mxu0 0.0
  %1731 = vmatpush1.msra.mxu0 0.0
  %1732 = vmatprep.subr.mxu0 0.0
  %1733 = vmatpush1.msra.mxu0 0.0
  %1734 = vmatprep.subr.mxu0 0.0
  %1735 = vmatpush1.msra.mxu0 0.0
  %1736 = vmatprep.subr.mxu0 0.0
  %1737 = vmatpush1.msra.mxu0 0.0
  %1738 = vmatprep.subr.mxu0 0.0
  %1739 = vmatpush1.msra.mxu0 0.0
  %1740 = vmatprep.subr.mxu0 0.0
  %1741 = vmatpush1.msra.mxu0 0.0
  %1742 = vmatprep.subr.mxu0 0.0
  %1743 = vmatpush1.msra.mxu0 0.0
  %1744 = vmatprep.subr.mxu0 0.0
  %1745 = vmatpush1.msra.mxu0 0.0
  %1746 = vmatprep.subr.mxu0 0.0
  %1747 = vmatpush1.msra.mxu0 0.0
  %1748 = vmatprep.subr.mxu0 0.0
  %1749 = vmatpush1.msra.mxu0 0.0
  %1750 = vmatprep.subr.mxu0 0.0
  %1751 = vmatpush1.msra.mxu0 0.0
  %1752 = vmatprep.subr.mxu0 0.0
  %1753 = vmatpush1.msra.mxu0 0.0
  %1754 = vmatprep.subr.mxu0 0.0
  %1755 = vmatpush1.msra.mxu0 0.0
  %1756 = vmatprep.subr.mxu0 0.0
  %1757 = vmatpush1.msra.mxu0 0.0
  %1758 = vmatprep.subr.mxu0 0.0
  %1759 = vmatpush1.msra.mxu0 0.0
  %1760 = vmatprep.subr.mxu0 0.0
  %1761 = vmatpush1.msra.mxu0 0.0
  %1762 = vmatprep.subr.mxu0 0.0
  %1763 = vmatpush1.msra.mxu0 0.0
  %1764 = vmatprep.subr.mxu0 0.0
  %1765 = vmatpush1.msra.mxu0 0.0
  %1766 = vmatprep.mubr.f32.mxu0 0.0
  %1767 = vmatmul.mubr.f32.gmra.mrb[0].mxu0 %v1700
  %v1768 = vpop.f32.mrb[0].mxu0
  %v1769 = vadd.f32 0.0, %v1768
  %v1770 = vpop.f32.mrb[0].mxu0
  %1771 = vdwg.mxu0
  %v1772 = vadd.f32 %v268, %v1769
  %v1773 = vxor.u32 %v1772, 2147483648
  %v1774 = vmul.f32 %v1773, 1.442695
  %v1775 = vpow.pop %v1774
  %v1776 = vadd.f32 %v1775, 1.0
  %v1777 = vrcp.pop %v1776
  %v1778 = vmul.f32 1.0, %v1777
  %v1779 = vtanh.pop %v1772
  %v1780 = vmul.f32 %v1778, %v1696
  %1782 = vrot.lane.b32.xlu0 %v1779, 32
  %v1783 = vpop.permute.xlu0 %1782
  %v1785 = vmul.f32 %v1778, %v1783
  %1787 = vrot.lane.b32.xlu0 %v1785, 32
  %v1788 = vpop.permute.xlu0 %1787
  %v1790 = vadd.f32 %v1780, %v1788
  %v1791 = vtanh.pop %v1790
  %1793 = vrot.lane.b32.xlu0 %v1791, 32
  %v1794 = vpop.permute.xlu0 %1793
  %v1796 = vmul.f32 %v1778, %v1794
  %v1797 = vld [vmem:[%s7] sm:$0xff]
  %v1798 = vld [vmem:[%s7 + $0x8] sm:$0xff]
  %v1799 = vld [vmem:[%s7 + $0x10] sm:$0xff]
  %v1800 = vld [vmem:[%s7 + $0x18] sm:$0xff]
  %v1801 = vld [vmem:[%s8] sm:$0x1]
  %v1803 = vlaneseq
  %v1804 = vshrl.u32 %v1803, 7
  %v1805 = vsub.s32 0, %v1804
  %v1806 = vrot.slane %v1801, %v1805
  %1809 = vrot.lane.b32.xlu0 %v1796, 64
  %v1810 = vpop.permute.xlu0 %1809
  %v1811 = vsel %vm276, %v1810, 0
  %1813 = vmatprep.subr.mxu0 0.0
  %1814 = vmatpush1.msra.mxu0 %v1797
  %1815 = vmatprep.subr.mxu0 0.0
  %1816 = vmatpush1.msra.mxu0 %v1798
  %1817 = vmatprep.subr.mxu0 0.0
  %1818 = vmatpush1.msra.mxu0 %v1799
  %1819 = vmatprep.subr.mxu0 0.0
  %1820 = vmatpush1.msra.mxu0 %v1800
  %1821 = vmatprep.subr.mxu0 0.0
  %1822 = vmatpush1.msra.mxu0 0.0
  %1823 = vmatprep.subr.mxu0 0.0
  %1824 = vmatpush1.msra.mxu0 0.0
  %1825 = vmatprep.subr.mxu0 0.0
  %1826 = vmatpush1.msra.mxu0 0.0
  %1827 = vmatprep.subr.mxu0 0.0
  %1828 = vmatpush1.msra.mxu0 0.0
  %1829 = vmatprep.subr.mxu0 0.0
  %1830 = vmatpush1.msra.mxu0 0.0
  %1831 = vmatprep.subr.mxu0 0.0
  %1832 = vmatpush1.msra.mxu0 0.0
  %1833 = vmatprep.subr.mxu0 0.0
  %1834 = vmatpush1.msra.mxu0 0.0
  %1835 = vmatprep.subr.mxu0 0.0
  %1836 = vmatpush1.msra.mxu0 0.0
  %1837 = vmatprep.subr.mxu0 0.0
  %1838 = vmatpush1.msra.mxu0 0.0
  %1839 = vmatprep.subr.mxu0 0.0
  %1840 = vmatpush1.msra.mxu0 0.0
  %1841 = vmatprep.subr.mxu0 0.0
  %1842 = vmatpush1.msra.mxu0 0.0
  %1843 = vmatprep.subr.mxu0 0.0
  %1844 = vmatpush1.msra.mxu0 0.0
  %1845 = vmatprep.subr.mxu0 0.0
  %1846 = vmatpush1.msra.mxu0 0.0
  %1847 = vmatprep.subr.mxu0 0.0
  %1848 = vmatpush1.msra.mxu0 0.0
  %1849 = vmatprep.subr.mxu0 0.0
  %1850 = vmatpush1.msra.mxu0 0.0
  %1851 = vmatprep.subr.mxu0 0.0
  %1852 = vmatpush1.msra.mxu0 0.0
  %1853 = vmatprep.subr.mxu0 0.0
  %1854 = vmatpush1.msra.mxu0 0.0
  %1855 = vmatprep.subr.mxu0 0.0
  %1856 = vmatpush1.msra.mxu0 0.0
  %1857 = vmatprep.subr.mxu0 0.0
  %1858 = vmatpush1.msra.mxu0 0.0
  %1859 = vmatprep.subr.mxu0 0.0
  %1860 = vmatpush1.msra.mxu0 0.0
  %1861 = vmatprep.subr.mxu0 0.0
  %1862 = vmatpush1.msra.mxu0 0.0
  %1863 = vmatprep.subr.mxu0 0.0
  %1864 = vmatpush1.msra.mxu0 0.0
  %1865 = vmatprep.subr.mxu0 0.0
  %1866 = vmatpush1.msra.mxu0 0.0
  %1867 = vmatprep.subr.mxu0 0.0
  %1868 = vmatpush1.msra.mxu0 0.0
  %1869 = vmatprep.subr.mxu0 0.0
  %1870 = vmatpush1.msra.mxu0 0.0
  %1871 = vmatprep.subr.mxu0 0.0
  %1872 = vmatpush1.msra.mxu0 0.0
  %1873 = vmatprep.subr.mxu0 0.0
  %1874 = vmatpush1.msra.mxu0 0.0
  %1875 = vmatprep.subr.mxu0 0.0
  %1876 = vmatpush1.msra.mxu0 0.0
  %1877 = vmatprep.mubr.f32.mxu0 0.0
  %1878 = vmatmul.mubr.f32.gmra.mrb[0].mxu0 %v1811
  %v1879 = vpop.f32.mrb[0].mxu0
  %v1880 = vadd.f32 %v1806, %v1879
  %v1881 = vpop.f32.mrb[0].mxu0
  %1882 = vdwg.mxu0
  %v1883 = vmax.f32 %v1880, 0.0
  %vm1884 = vcmask 130048
  %1885 = vst.msk [vmem:[%s17] sm:$0xff] %vm1884, %v1883
  %v1886 = vld [vmem:[%s9] sm:$0xff]
  %v1887 = vld [vmem:[%s9 + $0x8] sm:$0xff]
  %v1888 = vld [vmem:[%s10] sm:$0x1]
  %v1890 = vlaneseq
  %v1891 = vshrl.u32 %v1890, 7
  %v1892 = vsub.s32 0, %v1891
  %v1893 = vrot.slane %v1888, %v1892
  %v1896 = vsel %vm1884, %v1883, 0
  %1898 = vmatprep.subr.mxu0 0.0
  %1899 = vmatpush1.msra.mxu0 %v1886
  %1900 = vmatprep.subr.mxu0 0.0
  %1901 = vmatpush1.msra.mxu0 %v1887
  %1902 = vmatprep.subr.mxu0 0.0
  %1903 = vmatpush1.msra.mxu0 0.0
  %1904 = vmatprep.subr.mxu0 0.0
  %1905 = vmatpush1.msra.mxu0 0.0
  %1906 = vmatprep.subr.mxu0 0.0
  %1907 = vmatpush1.msra.mxu0 0.0
  %1908 = vmatprep.subr.mxu0 0.0
  %1909 = vmatpush1.msra.mxu0 0.0
  %1910 = vmatprep.subr.mxu0 0.0
  %1911 = vmatpush1.msra.mxu0 0.0
  %1912 = vmatprep.subr.mxu0 0.0
  %1913 = vmatpush1.msra.mxu0 0.0
  %1914 = vmatprep.subr.mxu0 0.0
  %1915 = vmatpush1.msra.mxu0 0.0
  %1916 = vmatprep.subr.mxu0 0.0
  %1917 = vmatpush1.msra.mxu0 0.0
  %1918 = vmatprep.subr.mxu0 0.0
  %1919 = vmatpush1.msra.mxu0 0.0
  %1920 = vmatprep.subr.mxu0 0.0
  %1921 = vmatpush1.msra.mxu0 0.0
  %1922 = vmatprep.subr.mxu0 0.0
  %1923 = vmatpush1.msra.mxu0 0.0
  %1924 = vmatprep.subr.mxu0 0.0
  %1925 = vmatpush1.msra.mxu0 0.0
  %1926 = vmatprep.subr.mxu0 0.0
  %1927 = vmatpush1.msra.mxu0 0.0
  %1928 = vmatprep.subr.mxu0 0.0
  %1929 = vmatpush1.msra.mxu0 0.0
  %1930 = vmatprep.subr.mxu0 0.0
  %1931 = vmatpush1.msra.mxu0 0.0
  %1932 = vmatprep.subr.mxu0 0.0
  %1933 = vmatpush1.msra.mxu0 0.0
  %1934 = vmatprep.subr.mxu0 0.0
  %1935 = vmatpush1.msra.mxu0 0.0
  %1936 = vmatprep.subr.mxu0 0.0
  %1937 = vmatpush1.msra.mxu0 0.0
  %1938 = vmatprep.subr.mxu0 0.0
  %1939 = vmatpush1.msra.mxu0 0.0
  %1940 = vmatprep.subr.mxu0 0.0
  %1941 = vmatpush1.msra.mxu0 0.0
  %1942 = vmatprep.subr.mxu0 0.0
  %1943 = vmatpush1.msra.mxu0 0.0
  %1944 = vmatprep.subr.mxu0 0.0
  %1945 = vmatpush1.msra.mxu0 0.0
  %1946 = vmatprep.subr.mxu0 0.0
  %1947 = vmatpush1.msra.mxu0 0.0
  %1948 = vmatprep.subr.mxu0 0.0
  %1949 = vmatpush1.msra.mxu0 0.0
  %1950 = vmatprep.subr.mxu0 0.0
  %1951 = vmatpush1.msra.mxu0 0.0
  %1952 = vmatprep.subr.mxu0 0.0
  %1953 = vmatpush1.msra.mxu0 0.0
  %1954 = vmatprep.subr.mxu0 0.0
  %1955 = vmatpush1.msra.mxu0 0.0
  %1956 = vmatprep.subr.mxu0 0.0
  %1957 = vmatpush1.msra.mxu0 0.0
  %1958 = vmatprep.subr.mxu0 0.0
  %1959 = vmatpush1.msra.mxu0 0.0
  %1960 = vmatprep.subr.mxu0 0.0
  %1961 = vmatpush1.msra.mxu0 0.0
  %1962 = vmatprep.mubr.f32.mxu0 0.0
  %1963 = vmatmul.mubr.f32.gmra.mrb[0].mxu0 %v1896
  %v1964 = vpop.f32.mrb[0].mxu0
  %v1965 = vadd.f32 %v1893, %v1964
  %v1966 = vpop.f32.mrb[0].mxu0
  %1967 = vdwg.mxu0
  %1968 = vmatprep.subr.mxu0 0.0
  %1969 = vmatpush1.msra.mxu0 %v67
  %1970 = vmatprep.subr.mxu0 0.0
  %1971 = vmatpush1.msra.mxu0 %v68
  %1972 = vmatprep.subr.mxu0 0.0
  %1973 = vmatpush1.msra.mxu0 %v69
  %1974 = vmatprep.subr.mxu0 0.0
  %1975 = vmatpush1.msra.mxu0 %v70
  %1976 = vmatprep.subr.mxu0 0.0
  %1977 = vmatpush1.msra.mxu0 0.0
  %1978 = vmatprep.subr.mxu0 0.0
  %1979 = vmatpush1.msra.mxu0 0.0
  %1980 = vmatprep.subr.mxu0 0.0
  %1981 = vmatpush1.msra.mxu0 0.0
  %1982 = vmatprep.subr.mxu0 0.0
  %1983 = vmatpush1.msra.mxu0 0.0
  %1984 = vmatprep.subr.mxu0 0.0
  %1985 = vmatpush1.msra.mxu0 0.0
  %1986 = vmatprep.subr.mxu0 0.0
  %1987 = vmatpush1.msra.mxu0 0.0
  %1988 = vmatprep.subr.mxu0 0.0
  %1989 = vmatpush1.msra.mxu0 0.0
  %1990 = vmatprep.subr.mxu0 0.0
  %1991 = vmatpush1.msra.mxu0 0.0
  %1992 = vmatprep.subr.mxu0 0.0
  %1993 = vmatpush1.msra.mxu0 0.0
  %1994 = vmatprep.subr.mxu0 0.0
  %1995 = vmatpush1.msra.mxu0 0.0
  %1996 = vmatprep.subr.mxu0 0.0
  %1997 = vmatpush1.msra.mxu0 0.0
  %1998 = vmatprep.subr.mxu0 0.0
  %1999 = vmatpush1.msra.mxu0 0.0
  %2000 = vmatprep.subr.mxu0 0.0
  %2001 = vmatpush1.msra.mxu0 0.0
  %2002 = vmatprep.subr.mxu0 0.0
  %2003 = vmatpush1.msra.mxu0 0.0
  %2004 = vmatprep.subr.mxu0 0.0
  %2005 = vmatpush1.msra.mxu0 0.0
  %2006 = vmatprep.subr.mxu0 0.0
  %2007 = vmatpush1.msra.mxu0 0.0
  %2008 = vmatprep.subr.mxu0 0.0
  %2009 = vmatpush1.msra.mxu0 0.0
  %2010 = vmatprep.subr.mxu0 0.0
  %2011 = vmatpush1.msra.mxu0 0.0
  %2012 = vmatprep.subr.mxu0 0.0
  %2013 = vmatpush1.msra.mxu0 0.0
  %2014 = vmatprep.subr.mxu0 0.0
  %2015 = vmatpush1.msra.mxu0 0.0
  %2016 = vmatprep.subr.mxu0 0.0
  %2017 = vmatpush1.msra.mxu0 0.0
  %2018 = vmatprep.subr.mxu0 0.0
  %2019 = vmatpush1.msra.mxu0 0.0
  %2020 = vmatprep.subr.mxu0 0.0
  %2021 = vmatpush1.msra.mxu0 0.0
  %2022 = vmatprep.subr.mxu0 0.0
  %2023 = vmatpush1.msra.mxu0 0.0
  %2024 = vmatprep.subr.mxu0 0.0
  %2025 = vmatpush1.msra.mxu0 0.0
  %2026 = vmatprep.subr.mxu0 0.0
  %2027 = vmatpush1.msra.mxu0 0.0
  %2028 = vmatprep.subr.mxu0 0.0
  %2029 = vmatpush1.msra.mxu0 0.0
  %2030 = vmatprep.subr.mxu0 0.0
  %2031 = vmatpush1.msra.mxu0 0.0
  %2032 = vmatprep.mubr.f32.mxu0 0.0
  %2033 = vmatmul.mubr.f32.gmra.mrb[0].mxu0 %v278
  %v2034 = vpop.f32.mrb[0].mxu0
  %v2035 = vadd.f32 %v83, %v2034
  %v2036 = vpop.f32.mrb[0].mxu0
  %2037 = vdwg.mxu0
  %v2038 = vtanh.pop %v2035
  %v2039 = vsub.f32 0.0, %v2038
  %v2040 = vmul.f32 %v2038, %v274
  %v2041 = vadd.f32 %v2039, %v2040
  %2042 = vmatprep.subr.mxu0 0.0
  %2043 = vmatpush1.msra.mxu0 %v63
  %2044 = vmatprep.subr.mxu0 0.0
  %2045 = vmatpush1.msra.mxu0 %v64
  %2046 = vmatprep.subr.mxu0 0.0
  %2047 = vmatpush1.msra.mxu0 %v65
  %2048 = vmatprep.subr.mxu0 0.0
  %2049 = vmatpush1.msra.mxu0 %v66
  %2050 = vmatprep.subr.mxu0 0.0
  %2051 = vmatpush1.msra.mxu0 0.0
  %2052 = vmatprep.subr.mxu0 0.0
  %2053 = vmatpush1.msra.mxu0 0.0
  %2054 = vmatprep.subr.mxu0 0.0
  %2055 = vmatpush1.msra.mxu0 0.0
  %2056 = vmatprep.subr.mxu0 0.0
  %2057 = vmatpush1.msra.mxu0 0.0
  %2058 = vmatprep.subr.mxu0 0.0
  %2059 = vmatpush1.msra.mxu0 0.0
  %2060 = vmatprep.subr.mxu0 0.0
  %2061 = vmatpush1.msra.mxu0 0.0
  %2062 = vmatprep.subr.mxu0 0.0
  %2063 = vmatpush1.msra.mxu0 0.0
  %2064 = vmatprep.subr.mxu0 0.0
  %2065 = vmatpush1.msra.mxu0 0.0
  %2066 = vmatprep.subr.mxu0 0.0
  %2067 = vmatpush1.msra.mxu0 0.0
  %2068 = vmatprep.subr.mxu0 0.0
  %2069 = vmatpush1.msra.mxu0 0.0
  %2070 = vmatprep.subr.mxu0 0.0
  %2071 = vmatpush1.msra.mxu0 0.0
  %2072 = vmatprep.subr.mxu0 0.0
  %2073 = vmatpush1.msra.mxu0 0.0
  %2074 = vmatprep.subr.mxu0 0.0
  %2075 = vmatpush1.msra.mxu0 0.0
  %2076 = vmatprep.subr.mxu0 0.0
  %2077 = vmatpush1.msra.mxu0 0.0
  %2078 = vmatprep.subr.mxu0 0.0
  %2079 = vmatpush1.msra.mxu0 0.0
  %2080 = vmatprep.subr.mxu0 0.0
  %2081 = vmatpush1.msra.mxu0 0.0
  %2082 = vmatprep.subr.mxu0 0.0
  %2083 = vmatpush1.msra.mxu0 0.0
  %2084 = vmatprep.subr.mxu0 0.0
  %2085 = vmatpush1.msra.mxu0 0.0
  %2086 = vmatprep.subr.mxu0 0.0
  %2087 = vmatpush1.msra.mxu0 0.0
  %2088 = vmatprep.subr.mxu0 0.0
  %2089 = vmatpush1.msra.mxu0 0.0
  %2090 = vmatprep.subr.mxu0 0.0
  %2091 = vmatpush1.msra.mxu0 0.0
  %2092 = vmatprep.subr.mxu0 0.0
  %2093 = vmatpush1.msra.mxu0 0.0
  %2094 = vmatprep.subr.mxu0 0.0
  %2095 = vmatpush1.msra.mxu0 0.0
  %2096 = vmatprep.subr.mxu0 0.0
  %2097 = vmatpush1.msra.mxu0 0.0
  %2098 = vmatprep.subr.mxu0 0.0
  %2099 = vmatpush1.msra.mxu0 0.0
  %2100 = vmatprep.subr.mxu0 0.0
  %2101 = vmatpush1.msra.mxu0 0.0
  %2102 = vmatprep.subr.mxu0 0.0
  %2103 = vmatpush1.msra.mxu0 0.0
  %2104 = vmatprep.subr.mxu0 0.0
  %2105 = vmatpush1.msra.mxu0 0.0
  %2106 = vmatprep.mubr.f32.mxu0 0.0
  %2107 = vmatmul.mubr.f32.gmra.mrb[0].mxu0 %v278
  %v2108 = vpop.f32.mrb[0].mxu0
  %v2109 = vadd.f32 0.0, %v2108
  %v2110 = vpop.f32.mrb[0].mxu0
  %2111 = vdwg.mxu0
  %v2112 = vadd.f32 %v1965, %v2109
  %v2113 = vxor.u32 %v2112, 2147483648
  %v2114 = vmul.f32 %v2113, 1.442695
  %v2115 = vpow.pop %v2114
  %v2116 = vadd.f32 %v2115, 1.0
  %v2117 = vrcp.pop %v2116
  %v2118 = vmul.f32 1.0, %v2117
  %v2119 = vtanh.pop %v2112
  %2121 = vrot.lane.b32.xlu0 %v2041, 32
  %v2122 = vpop.permute.xlu0 %2121
  %v2124 = vmul.f32 %v2118, %v2122
  %2126 = vrot.lane.b32.xlu0 %v2119, 32
  %v2127 = vpop.permute.xlu0 %2126
  %v2129 = vmul.f32 %v2118, %v2127
  %2131 = vrot.lane.b32.xlu0 %v2129, 32
  %v2132 = vpop.permute.xlu0 %2131
  %v2134 = vadd.f32 %v2124, %v2132
  %v2135 = vtanh.pop %v2134
  %2137 = vrot.lane.b32.xlu0 %v2135, 32
  %v2138 = vpop.permute.xlu0 %2137
  %v2140 = vmul.f32 %v2118, %v2138
  %2142 = vrot.lane.b32.xlu0 %v2134, 96
  %v2143 = vpop.permute.xlu0 %2142
  %v2144 = vsel %vm276, %v2143, 0
  %2146 = vmatprep.subr.mxu0 0.0
  %2147 = vmatpush1.msra.mxu0 %v67
  %2148 = vmatprep.subr.mxu0 0.0
  %2149 = vmatpush1.msra.mxu0 %v68
  %2150 = vmatprep.subr.mxu0 0.0
  %2151 = vmatpush1.msra.mxu0 %v69
  %2152 = vmatprep.subr.mxu0 0.0
  %2153 = vmatpush1.msra.mxu0 %v70
  %2154 = vmatprep.subr.mxu0 0.0
  %2155 = vmatpush1.msra.mxu0 0.0
  %2156 = vmatprep.subr.mxu0 0.0
  %2157 = vmatpush1.msra.mxu0 0.0
  %2158 = vmatprep.subr.mxu0 0.0
  %2159 = vmatpush1.msra.mxu0 0.0
  %2160 = vmatprep.subr.mxu0 0.0
  %2161 = vmatpush1.msra.mxu0 0.0
  %2162 = vmatprep.subr.mxu0 0.0
  %2163 = vmatpush1.msra.mxu0 0.0
  %2164 = vmatprep.subr.mxu0 0.0
  %2165 = vmatpush1.msra.mxu0 0.0
  %2166 = vmatprep.subr.mxu0 0.0
  %2167 = vmatpush1.msra.mxu0 0.0
  %2168 = vmatprep.subr.mxu0 0.0
  %2169 = vmatpush1.msra.mxu0 0.0
  %2170 = vmatprep.subr.mxu0 0.0
  %2171 = vmatpush1.msra.mxu0 0.0
  %2172 = vmatprep.subr.mxu0 0.0
  %2173 = vmatpush1.msra.mxu0 0.0
  %2174 = vmatprep.subr.mxu0 0.0
  %2175 = vmatpush1.msra.mxu0 0.0
  %2176 = vmatprep.subr.mxu0 0.0
  %2177 = vmatpush1.msra.mxu0 0.0
  %2178 = vmatprep.subr.mxu0 0.0
  %2179 = vmatpush1.msra.mxu0 0.0
  %2180 = vmatprep.subr.mxu0 0.0
  %2181 = vmatpush1.msra.mxu0 0.0
  %2182 = vmatprep.subr.mxu0 0.0
  %2183 = vmatpush1.msra.mxu0 0.0
  %2184 = vmatprep.subr.mxu0 0.0
  %2185 = vmatpush1.msra.mxu0 0.0
  %2186 = vmatprep.subr.mxu0 0.0
  %2187 = vmatpush1.msra.mxu0 0.0
  %2188 = vmatprep.subr.mxu0 0.0
  %2189 = vmatpush1.msra.mxu0 0.0
  %2190 = vmatprep.subr.mxu0 0.0
  %2191 = vmatpush1.msra.mxu0 0.0
  %2192 = vmatprep.subr.mxu0 0.0
  %2193 = vmatpush1.msra.mxu0 0.0
  %2194 = vmatprep.subr.mxu0 0.0
  %2195 = vmatpush1.msra.mxu0 0.0
  %2196 = vmatprep.subr.mxu0 0.0
  %2197 = vmatpush1.msra.mxu0 0.0
  %2198 = vmatprep.subr.mxu0 0.0
  %2199 = vmatpush1.msra.mxu0 0.0
  %2200 = vmatprep.subr.mxu0 0.0
  %2201 = vmatpush1.msra.mxu0 0.0
  %2202 = vmatprep.subr.mxu0 0.0
  %2203 = vmatpush1.msra.mxu0 0.0
  %2204 = vmatprep.subr.mxu0 0.0
  %2205 = vmatpush1.msra.mxu0 0.0
  %2206 = vmatprep.subr.mxu0 0.0
  %2207 = vmatpush1.msra.mxu0 0.0
  %2208 = vmatprep.subr.mxu0 0.0
  %2209 = vmatpush1.msra.mxu0 0.0
  %2210 = vmatprep.mubr.f32.mxu0 0.0
  %2211 = vmatmul.mubr.f32.gmra.mrb[0].mxu0 %v2144
  %v2212 = vpop.f32.mrb[0].mxu0
  %v2213 = vadd.f32 %v83, %v2212
  %v2214 = vpop.f32.mrb[0].mxu0
  %2215 = vdwg.mxu0
  %v2216 = vtanh.pop %v2213
  %2218 = vrot.lane.b32.xlu0 %v2216, 32
  %v2219 = vpop.permute.xlu0 %2218
  %v2221 = vsub.f32 %v2134, %v2219
  %v2222 = vmul.f32 %v2216, %v456
  %2224 = vrot.lane.b32.xlu0 %v2222, 32
  %v2225 = vpop.permute.xlu0 %2224
  %v2227 = vadd.f32 %v2221, %v2225
  %2229 = vrot.lane.b32.xlu0 %v2140, 64
  %v2230 = vpop.permute.xlu0 %2229
  %v2231 = vsel %vm276, %v2230, 0
  %2233 = vmatprep.subr.mxu0 0.0
  %2234 = vmatpush1.msra.mxu0 %v63
  %2235 = vmatprep.subr.mxu0 0.0
  %2236 = vmatpush1.msra.mxu0 %v64
  %2237 = vmatprep.subr.mxu0 0.0
  %2238 = vmatpush1.msra.mxu0 %v65
  %2239 = vmatprep.subr.mxu0 0.0
  %2240 = vmatpush1.msra.mxu0 %v66
  %2241 = vmatprep.subr.mxu0 0.0
  %2242 = vmatpush1.msra.mxu0 0.0
  %2243 = vmatprep.subr.mxu0 0.0
  %2244 = vmatpush1.msra.mxu0 0.0
  %2245 = vmatprep.subr.mxu0 0.0
  %2246 = vmatpush1.msra.mxu0 0.0
  %2247 = vmatprep.subr.mxu0 0.0
  %2248 = vmatpush1.msra.mxu0 0.0
  %2249 = vmatprep.subr.mxu0 0.0
  %2250 = vmatpush1.msra.mxu0 0.0
  %2251 = vmatprep.subr.mxu0 0.0
  %2252 = vmatpush1.msra.mxu0 0.0
  %2253 = vmatprep.subr.mxu0 0.0
  %2254 = vmatpush1.msra.mxu0 0.0
  %2255 = vmatprep.subr.mxu0 0.0
  %2256 = vmatpush1.msra.mxu0 0.0
  %2257 = vmatprep.subr.mxu0 0.0
  %2258 = vmatpush1.msra.mxu0 0.0
  %2259 = vmatprep.subr.mxu0 0.0
  %2260 = vmatpush1.msra.mxu0 0.0
  %2261 = vmatprep.subr.mxu0 0.0
  %2262 = vmatpush1.msra.mxu0 0.0
  %2263 = vmatprep.subr.mxu0 0.0
  %2264 = vmatpush1.msra.mxu0 0.0
  %2265 = vmatprep.subr.mxu0 0.0
  %2266 = vmatpush1.msra.mxu0 0.0
  %2267 = vmatprep.subr.mxu0 0.0
  %2268 = vmatpush1.msra.mxu0 0.0
  %2269 = vmatprep.subr.mxu0 0.0
  %2270 = vmatpush1.msra.mxu0 0.0
  %2271 = vmatprep.subr.mxu0 0.0
  %2272 = vmatpush1.msra.mxu0 0.0
  %2273 = vmatprep.subr.mxu0 0.0
  %2274 = vmatpush1.msra.mxu0 0.0
  %2275 = vmatprep.subr.mxu0 0.0
  %2276 = vmatpush1.msra.mxu0 0.0
  %2277 = vmatprep.subr.mxu0 0.0
  %2278 = vmatpush1.msra.mxu0 0.0
  %2279 = vmatprep.subr.mxu0 0.0
  %2280 = vmatpush1.msra.mxu0 0.0
  %2281 = vmatprep.subr.mxu0 0.0
  %2282 = vmatpush1.msra.mxu0 0.0
  %2283 = vmatprep.subr.mxu0 0.0
  %2284 = vmatpush1.msra.mxu0 0.0
  %2285 = vmatprep.subr.mxu0 0.0
  %2286 = vmatpush1.msra.mxu0 0.0
  %2287 = vmatprep.subr.mxu0 0.0
  %2288 = vmatpush1.msra.mxu0 0.0
  %2289 = vmatprep.subr.mxu0 0.0
  %2290 = vmatpush1.msra.mxu0 0.0
  %2291 = vmatprep.subr.mxu0 0.0
  %2292 = vmatpush1.msra.mxu0 0.0
  %2293 = vmatprep.subr.mxu0 0.0
  %2294 = vmatpush1.msra.mxu0 0.0
  %2295 = vmatprep.subr.mxu0 0.0
  %2296 = vmatpush1.msra.mxu0 0.0
  %2297 = vmatprep.mubr.f32.mxu0 0.0
  %2298 = vmatmul.mubr.f32.gmra.mrb[0].mxu0 %v2231
  %v2299 = vpop.f32.mrb[0].mxu0
  %v2300 = vadd.f32 0.0, %v2299
  %v2301 = vpop.f32.mrb[0].mxu0
  %2302 = vdwg.mxu0
  %v2303 = vadd.f32 %v1965, %v2300
  %v2304 = vxor.u32 %v2303, 2147483648
  %v2305 = vmul.f32 %v2304, 1.442695
  %v2306 = vpow.pop %v2305
  %v2307 = vadd.f32 %v2306, 1.0
  %v2308 = vrcp.pop %v2307
  %v2309 = vmul.f32 1.0, %v2308
  %v2310 = vtanh.pop %v2303
  %v2311 = vmul.f32 %v2309, %v2227
  %2313 = vrot.lane.b32.xlu0 %v2310, 32
  %v2314 = vpop.permute.xlu0 %2313
  %v2316 = vmul.f32 %v2309, %v2314
  %2318 = vrot.lane.b32.xlu0 %v2316, 32
  %v2319 = vpop.permute.xlu0 %2318
  %v2321 = vadd.f32 %v2311, %v2319
  %v2322 = vtanh.pop %v2321
  %2324 = vrot.lane.b32.xlu0 %v2322, 32
  %v2325 = vpop.permute.xlu0 %2324
  %v2327 = vmul.f32 %v2309, %v2325
  %2329 = vrot.lane.b32.xlu0 %v2321, 96
  %v2330 = vpop.permute.xlu0 %2329
  %v2331 = vsel %vm276, %v2330, 0
  %2333 = vmatprep.subr.mxu0 0.0
  %2334 = vmatpush1.msra.mxu0 %v67
  %2335 = vmatprep.subr.mxu0 0.0
  %2336 = vmatpush1.msra.mxu0 %v68
  %2337 = vmatprep.subr.mxu0 0.0
  %2338 = vmatpush1.msra.mxu0 %v69
  %2339 = vmatprep.subr.mxu0 0.0
  %2340 = vmatpush1.msra.mxu0 %v70
  %2341 = vmatprep.subr.mxu0 0.0
  %2342 = vmatpush1.msra.mxu0 0.0
  %2343 = vmatprep.subr.mxu0 0.0
  %2344 = vmatpush1.msra.mxu0 0.0
  %2345 = vmatprep.subr.mxu0 0.0
  %2346 = vmatpush1.msra.mxu0 0.0
  %2347 = vmatprep.subr.mxu0 0.0
  %2348 = vmatpush1.msra.mxu0 0.0
  %2349 = vmatprep.subr.mxu0 0.0
  %2350 = vmatpush1.msra.mxu0 0.0
  %2351 = vmatprep.subr.mxu0 0.0
  %2352 = vmatpush1.msra.mxu0 0.0
  %2353 = vmatprep.subr.mxu0 0.0
  %2354 = vmatpush1.msra.mxu0 0.0
  %2355 = vmatprep.subr.mxu0 0.0
  %2356 = vmatpush1.msra.mxu0 0.0
  %2357 = vmatprep.subr.mxu0 0.0
  %2358 = vmatpush1.msra.mxu0 0.0
  %2359 = vmatprep.subr.mxu0 0.0
  %2360 = vmatpush1.msra.mxu0 0.0
  %2361 = vmatprep.subr.mxu0 0.0
  %2362 = vmatpush1.msra.mxu0 0.0
  %2363 = vmatprep.subr.mxu0 0.0
  %2364 = vmatpush1.msra.mxu0 0.0
  %2365 = vmatprep.subr.mxu0 0.0
  %2366 = vmatpush1.msra.mxu0 0.0
  %2367 = vmatprep.subr.mxu0 0.0
  %2368 = vmatpush1.msra.mxu0 0.0
  %2369 = vmatprep.subr.mxu0 0.0
  %2370 = vmatpush1.msra.mxu0 0.0
  %2371 = vmatprep.subr.mxu0 0.0
  %2372 = vmatpush1.msra.mxu0 0.0
  %2373 = vmatprep.subr.mxu0 0.0
  %2374 = vmatpush1.msra.mxu0 0.0
  %2375 = vmatprep.subr.mxu0 0.0
  %2376 = vmatpush1.msra.mxu0 0.0
  %2377 = vmatprep.subr.mxu0 0.0
  %2378 = vmatpush1.msra.mxu0 0.0
  %2379 = vmatprep.subr.mxu0 0.0
  %2380 = vmatpush1.msra.mxu0 0.0
  %2381 = vmatprep.subr.mxu0 0.0
  %2382 = vmatpush1.msra.mxu0 0.0
  %2383 = vmatprep.subr.mxu0 0.0
  %2384 = vmatpush1.msra.mxu0 0.0
  %2385 = vmatprep.subr.mxu0 0.0
  %2386 = vmatpush1.msra.mxu0 0.0
  %2387 = vmatprep.subr.mxu0 0.0
  %2388 = vmatpush1.msra.mxu0 0.0
  %2389 = vmatprep.subr.mxu0 0.0
  %2390 = vmatpush1.msra.mxu0 0.0
  %2391 = vmatprep.subr.mxu0 0.0
  %2392 = vmatpush1.msra.mxu0 0.0
  %2393 = vmatprep.subr.mxu0 0.0
  %2394 = vmatpush1.msra.mxu0 0.0
  %2395 = vmatprep.subr.mxu0 0.0
  %2396 = vmatpush1.msra.mxu0 0.0
  %2397 = vmatprep.mubr.f32.mxu0 0.0
  %2398 = vmatmul.mubr.f32.gmra.mrb[0].mxu0 %v2331
  %v2399 = vpop.f32.mrb[0].mxu0
  %v2400 = vadd.f32 %v83, %v2399
  %v2401 = vpop.f32.mrb[0].mxu0
  %2402 = vdwg.mxu0
  %v2403 = vtanh.pop %v2400
  %2405 = vrot.lane.b32.xlu0 %v2403, 32
  %v2406 = vpop.permute.xlu0 %2405
  %v2408 = vsub.f32 %v2321, %v2406
  %v2409 = vmul.f32 %v2403, %v648
  %2411 = vrot.lane.b32.xlu0 %v2409, 32
  %v2412 = vpop.permute.xlu0 %2411
  %v2414 = vadd.f32 %v2408, %v2412
  %2416 = vrot.lane.b32.xlu0 %v2327, 64
  %v2417 = vpop.permute.xlu0 %2416
  %v2418 = vsel %vm276, %v2417, 0
  %2420 = vmatprep.subr.mxu0 0.0
  %2421 = vmatpush1.msra.mxu0 %v63
  %2422 = vmatprep.subr.mxu0 0.0
  %2423 = vmatpush1.msra.mxu0 %v64
  %2424 = vmatprep.subr.mxu0 0.0
  %2425 = vmatpush1.msra.mxu0 %v65
  %2426 = vmatprep.subr.mxu0 0.0
  %2427 = vmatpush1.msra.mxu0 %v66
  %2428 = vmatprep.subr.mxu0 0.0
  %2429 = vmatpush1.msra.mxu0 0.0
  %2430 = vmatprep.subr.mxu0 0.0
  %2431 = vmatpush1.msra.mxu0 0.0
  %2432 = vmatprep.subr.mxu0 0.0
  %2433 = vmatpush1.msra.mxu0 0.0
  %2434 = vmatprep.subr.mxu0 0.0
  %2435 = vmatpush1.msra.mxu0 0.0
  %2436 = vmatprep.subr.mxu0 0.0
  %2437 = vmatpush1.msra.mxu0 0.0
  %2438 = vmatprep.subr.mxu0 0.0
  %2439 = vmatpush1.msra.mxu0 0.0
  %2440 = vmatprep.subr.mxu0 0.0
  %2441 = vmatpush1.msra.mxu0 0.0
  %2442 = vmatprep.subr.mxu0 0.0
  %2443 = vmatpush1.msra.mxu0 0.0
  %2444 = vmatprep.subr.mxu0 0.0
  %2445 = vmatpush1.msra.mxu0 0.0
  %2446 = vmatprep.subr.mxu0 0.0
  %2447 = vmatpush1.msra.mxu0 0.0
  %2448 = vmatprep.subr.mxu0 0.0
  %2449 = vmatpush1.msra.mxu0 0.0
  %2450 = vmatprep.subr.mxu0 0.0
  %2451 = vmatpush1.msra.mxu0 0.0
  %2452 = vmatprep.subr.mxu0 0.0
  %2453 = vmatpush1.msra.mxu0 0.0
  %2454 = vmatprep.subr.mxu0 0.0
  %2455 = vmatpush1.msra.mxu0 0.0
  %2456 = vmatprep.subr.mxu0 0.0
  %2457 = vmatpush1.msra.mxu0 0.0
  %2458 = vmatprep.subr.mxu0 0.0
  %2459 = vmatpush1.msra.mxu0 0.0
  %2460 = vmatprep.subr.mxu0 0.0
  %2461 = vmatpush1.msra.mxu0 0.0
  %2462 = vmatprep.subr.mxu0 0.0
  %2463 = vmatpush1.msra.mxu0 0.0
  %2464 = vmatprep.subr.mxu0 0.0
  %2465 = vmatpush1.msra.mxu0 0.0
  %2466 = vmatprep.subr.mxu0 0.0
  %2467 = vmatpush1.msra.mxu0 0.0
  %2468 = vmatprep.subr.mxu0 0.0
  %2469 = vmatpush1.msra.mxu0 0.0
  %2470 = vmatprep.subr.mxu0 0.0
  %2471 = vmatpush1.msra.mxu0 0.0
  %2472 = vmatprep.subr.mxu0 0.0
  %2473 = vmatpush1.msra.mxu0 0.0
  %2474 = vmatprep.subr.mxu0 0.0
  %2475 = vmatpush1.msra.mxu0 0.0
  %2476 = vmatprep.subr.mxu0 0.0
  %2477 = vmatpush1.msra.mxu0 0.0
  %2478 = vmatprep.subr.mxu0 0.0
  %2479 = vmatpush1.msra.mxu0 0.0
  %2480 = vmatprep.subr.mxu0 0.0
  %2481 = vmatpush1.msra.mxu0 0.0
  %2482 = vmatprep.subr.mxu0 0.0
  %2483 = vmatpush1.msra.mxu0 0.0
  %2484 = vmatprep.mubr.f32.mxu0 0.0
  %2485 = vmatmul.mubr.f32.gmra.mrb[0].mxu0 %v2418
  %v2486 = vpop.f32.mrb[0].mxu0
  %v2487 = vadd.f32 0.0, %v2486
  %v2488 = vpop.f32.mrb[0].mxu0
  %2489 = vdwg.mxu0
  %v2490 = vadd.f32 %v1965, %v2487
  %v2491 = vxor.u32 %v2490, 2147483648
  %v2492 = vmul.f32 %v2491, 1.442695
  %v2493 = vpow.pop %v2492
  %v2494 = vadd.f32 %v2493, 1.0
  %v2495 = vrcp.pop %v2494
  %v2496 = vmul.f32 1.0, %v2495
  %v2497 = vtanh.pop %v2490
  %v2498 = vmul.f32 %v2496, %v2414
  %2500 = vrot.lane.b32.xlu0 %v2497, 32
  %v2501 = vpop.permute.xlu0 %2500
  %v2503 = vmul.f32 %v2496, %v2501
  %2505 = vrot.lane.b32.xlu0 %v2503, 32
  %v2506 = vpop.permute.xlu0 %2505
  %v2508 = vadd.f32 %v2498, %v2506
  %v2509 = vtanh.pop %v2508
  %2511 = vrot.lane.b32.xlu0 %v2509, 32
  %v2512 = vpop.permute.xlu0 %2511
  %v2514 = vmul.f32 %v2496, %v2512
  %2516 = vrot.lane.b32.xlu0 %v2508, 96
  %v2517 = vpop.permute.xlu0 %2516
  %v2518 = vsel %vm276, %v2517, 0
  %2520 = vmatprep.subr.mxu0 0.0
  %2521 = vmatpush1.msra.mxu0 %v67
  %2522 = vmatprep.subr.mxu0 0.0
  %2523 = vmatpush1.msra.mxu0 %v68
  %2524 = vmatprep.subr.mxu0 0.0
  %2525 = vmatpush1.msra.mxu0 %v69
  %2526 = vmatprep.subr.mxu0 0.0
  %2527 = vmatpush1.msra.mxu0 %v70
  %2528 = vmatprep.subr.mxu0 0.0
  %2529 = vmatpush1.msra.mxu0 0.0
  %2530 = vmatprep.subr.mxu0 0.0
  %2531 = vmatpush1.msra.mxu0 0.0
  %2532 = vmatprep.subr.mxu0 0.0
  %2533 = vmatpush1.msra.mxu0 0.0
  %2534 = vmatprep.subr.mxu0 0.0
  %2535 = vmatpush1.msra.mxu0 0.0
  %2536 = vmatprep.subr.mxu0 0.0
  %2537 = vmatpush1.msra.mxu0 0.0
  %2538 = vmatprep.subr.mxu0 0.0
  %2539 = vmatpush1.msra.mxu0 0.0
  %2540 = vmatprep.subr.mxu0 0.0
  %2541 = vmatpush1.msra.mxu0 0.0
  %2542 = vmatprep.subr.mxu0 0.0
  %2543 = vmatpush1.msra.mxu0 0.0
  %2544 = vmatprep.subr.mxu0 0.0
  %2545 = vmatpush1.msra.mxu0 0.0
  %2546 = vmatprep.subr.mxu0 0.0
  %2547 = vmatpush1.msra.mxu0 0.0
  %2548 = vmatprep.subr.mxu0 0.0
  %2549 = vmatpush1.msra.mxu0 0.0
  %2550 = vmatprep.subr.mxu0 0.0
  %2551 = vmatpush1.msra.mxu0 0.0
  %2552 = vmatprep.subr.mxu0 0.0
  %2553 = vmatpush1.msra.mxu0 0.0
  %2554 = vmatprep.subr.mxu0 0.0
  %2555 = vmatpush1.msra.mxu0 0.0
  %2556 = vmatprep.subr.mxu0 0.0
  %2557 = vmatpush1.msra.mxu0 0.0
  %2558 = vmatprep.subr.mxu0 0.0
  %2559 = vmatpush1.msra.mxu0 0.0
  %2560 = vmatprep.subr.mxu0 0.0
  %2561 = vmatpush1.msra.mxu0 0.0
  %2562 = vmatprep.subr.mxu0 0.0
  %2563 = vmatpush1.msra.mxu0 0.0
  %2564 = vmatprep.subr.mxu0 0.0
  %2565 = vmatpush1.msra.mxu0 0.0
  %2566 = vmatprep.subr.mxu0 0.0
  %2567 = vmatpush1.msra.mxu0 0.0
  %2568 = vmatprep.subr.mxu0 0.0
  %2569 = vmatpush1.msra.mxu0 0.0
  %2570 = vmatprep.subr.mxu0 0.0
  %2571 = vmatpush1.msra.mxu0 0.0
  %2572 = vmatprep.subr.mxu0 0.0
  %2573 = vmatpush1.msra.mxu0 0.0
  %2574 = vmatprep.subr.mxu0 0.0
  %2575 = vmatpush1.msra.mxu0 0.0
  %2576 = vmatprep.subr.mxu0 0.0
  %2577 = vmatpush1.msra.mxu0 0.0
  %2578 = vmatprep.subr.mxu0 0.0
  %2579 = vmatpush1.msra.mxu0 0.0
  %2580 = vmatprep.subr.mxu0 0.0
  %2581 = vmatpush1.msra.mxu0 0.0
  %2582 = vmatprep.subr.mxu0 0.0
  %2583 = vmatpush1.msra.mxu0 0.0
  %2584 = vmatprep.mubr.f32.mxu0 0.0
  %2585 = vmatmul.mubr.f32.gmra.mrb[0].mxu0 %v2518
  %v2586 = vpop.f32.mrb[0].mxu0
  %v2587 = vadd.f32 %v83, %v2586
  %v2588 = vpop.f32.mrb[0].mxu0
  %2589 = vdwg.mxu0
  %v2590 = vtanh.pop %v2587
  %2592 = vrot.lane.b32.xlu0 %v2590, 32
  %v2593 = vpop.permute.xlu0 %2592
  %v2595 = vsub.f32 %v2508, %v2593
  %v2596 = vmul.f32 %v2590, %v840
  %2598 = vrot.lane.b32.xlu0 %v2596, 32
  %v2599 = vpop.permute.xlu0 %2598
  %v2601 = vadd.f32 %v2595, %v2599
  %2603 = vrot.lane.b32.xlu0 %v2514, 64
  %v2604 = vpop.permute.xlu0 %2603
  %v2605 = vsel %vm276, %v2604, 0
  %2607 = vmatprep.subr.mxu0 0.0
  %2608 = vmatpush1.msra.mxu0 %v63
  %2609 = vmatprep.subr.mxu0 0.0
  %2610 = vmatpush1.msra.mxu0 %v64
  %2611 = vmatprep.subr.mxu0 0.0
  %2612 = vmatpush1.msra.mxu0 %v65
  %2613 = vmatprep.subr.mxu0 0.0
  %2614 = vmatpush1.msra.mxu0 %v66
  %2615 = vmatprep.subr.mxu0 0.0
  %2616 = vmatpush1.msra.mxu0 0.0
  %2617 = vmatprep.subr.mxu0 0.0
  %2618 = vmatpush1.msra.mxu0 0.0
  %2619 = vmatprep.subr.mxu0 0.0
  %2620 = vmatpush1.msra.mxu0 0.0
  %2621 = vmatprep.subr.mxu0 0.0
  %2622 = vmatpush1.msra.mxu0 0.0
  %2623 = vmatprep.subr.mxu0 0.0
  %2624 = vmatpush1.msra.mxu0 0.0
  %2625 = vmatprep.subr.mxu0 0.0
  %2626 = vmatpush1.msra.mxu0 0.0
  %2627 = vmatprep.subr.mxu0 0.0
  %2628 = vmatpush1.msra.mxu0 0.0
  %2629 = vmatprep.subr.mxu0 0.0
  %2630 = vmatpush1.msra.mxu0 0.0
  %2631 = vmatprep.subr.mxu0 0.0
  %2632 = vmatpush1.msra.mxu0 0.0
  %2633 = vmatprep.subr.mxu0 0.0
  %2634 = vmatpush1.msra.mxu0 0.0
  %2635 = vmatprep.subr.mxu0 0.0
  %2636 = vmatpush1.msra.mxu0 0.0
  %2637 = vmatprep.subr.mxu0 0.0
  %2638 = vmatpush1.msra.mxu0 0.0
  %2639 = vmatprep.subr.mxu0 0.0
  %2640 = vmatpush1.msra.mxu0 0.0
  %2641 = vmatprep.subr.mxu0 0.0
  %2642 = vmatpush1.msra.mxu0 0.0
  %2643 = vmatprep.subr.mxu0 0.0
  %2644 = vmatpush1.msra.mxu0 0.0
  %2645 = vmatprep.subr.mxu0 0.0
  %2646 = vmatpush1.msra.mxu0 0.0
  %2647 = vmatprep.subr.mxu0 0.0
  %2648 = vmatpush1.msra.mxu0 0.0
  %2649 = vmatprep.subr.mxu0 0.0
  %2650 = vmatpush1.msra.mxu0 0.0
  %2651 = vmatprep.subr.mxu0 0.0
  %2652 = vmatpush1.msra.mxu0 0.0
  %2653 = vmatprep.subr.mxu0 0.0
  %2654 = vmatpush1.msra.mxu0 0.0
  %2655 = vmatprep.subr.mxu0 0.0
  %2656 = vmatpush1.msra.mxu0 0.0
  %2657 = vmatprep.subr.mxu0 0.0
  %2658 = vmatpush1.msra.mxu0 0.0
  %2659 = vmatprep.subr.mxu0 0.0
  %2660 = vmatpush1.msra.mxu0 0.0
  %2661 = vmatprep.subr.mxu0 0.0
  %2662 = vmatpush1.msra.mxu0 0.0
  %2663 = vmatprep.subr.mxu0 0.0
  %2664 = vmatpush1.msra.mxu0 0.0
  %2665 = vmatprep.subr.mxu0 0.0
  %2666 = vmatpush1.msra.mxu0 0.0
  %2667 = vmatprep.subr.mxu0 0.0
  %2668 = vmatpush1.msra.mxu0 0.0
  %2669 = vmatprep.subr.mxu0 0.0
  %2670 = vmatpush1.msra.mxu0 0.0
  %2671 = vmatprep.mubr.f32.mxu0 0.0
  %2672 = vmatmul.mubr.f32.gmra.mrb[0].mxu0 %v2605
  %v2673 = vpop.f32.mrb[0].mxu0
  %v2674 = vadd.f32 0.0, %v2673
  %v2675 = vpop.f32.mrb[0].mxu0
  %2676 = vdwg.mxu0
  %v2677 = vadd.f32 %v1965, %v2674
  %v2678 = vxor.u32 %v2677, 2147483648
  %v2679 = vmul.f32 %v2678, 1.442695
  %v2680 = vpow.pop %v2679
  %v2681 = vadd.f32 %v2680, 1.0
  %v2682 = vrcp.pop %v2681
  %v2683 = vmul.f32 1.0, %v2682
  %v2684 = vtanh.pop %v2677
  %v2685 = vmul.f32 %v2683, %v2601
  %2687 = vrot.lane.b32.xlu0 %v2684, 32
  %v2688 = vpop.permute.xlu0 %2687
  %v2690 = vmul.f32 %v2683, %v2688
  %2692 = vrot.lane.b32.xlu0 %v2690, 32
  %v2693 = vpop.permute.xlu0 %2692
  %v2695 = vadd.f32 %v2685, %v2693
  %v2696 = vtanh.pop %v2695
  %2698 = vrot.lane.b32.xlu0 %v2696, 32
  %v2699 = vpop.permute.xlu0 %2698
  %v2701 = vmul.f32 %v2683, %v2699
  %2703 = vrot.lane.b32.xlu0 %v2695, 96
  %v2704 = vpop.permute.xlu0 %2703
  %v2705 = vsel %vm276, %v2704, 0
  %2707 = vmatprep.subr.mxu0 0.0
  %2708 = vmatpush1.msra.mxu0 %v67
  %2709 = vmatprep.subr.mxu0 0.0
  %2710 = vmatpush1.msra.mxu0 %v68
  %2711 = vmatprep.subr.mxu0 0.0
  %2712 = vmatpush1.msra.mxu0 %v69
  %2713 = vmatprep.subr.mxu0 0.0
  %2714 = vmatpush1.msra.mxu0 %v70
  %2715 = vmatprep.subr.mxu0 0.0
  %2716 = vmatpush1.msra.mxu0 0.0
  %2717 = vmatprep.subr.mxu0 0.0
  %2718 = vmatpush1.msra.mxu0 0.0
  %2719 = vmatprep.subr.mxu0 0.0
  %2720 = vmatpush1.msra.mxu0 0.0
  %2721 = vmatprep.subr.mxu0 0.0
  %2722 = vmatpush1.msra.mxu0 0.0
  %2723 = vmatprep.subr.mxu0 0.0
  %2724 = vmatpush1.msra.mxu0 0.0
  %2725 = vmatprep.subr.mxu0 0.0
  %2726 = vmatpush1.msra.mxu0 0.0
  %2727 = vmatprep.subr.mxu0 0.0
  %2728 = vmatpush1.msra.mxu0 0.0
  %2729 = vmatprep.subr.mxu0 0.0
  %2730 = vmatpush1.msra.mxu0 0.0
  %2731 = vmatprep.subr.mxu0 0.0
  %2732 = vmatpush1.msra.mxu0 0.0
  %2733 = vmatprep.subr.mxu0 0.0
  %2734 = vmatpush1.msra.mxu0 0.0
  %2735 = vmatprep.subr.mxu0 0.0
  %2736 = vmatpush1.msra.mxu0 0.0
  %2737 = vmatprep.subr.mxu0 0.0
  %2738 = vmatpush1.msra.mxu0 0.0
  %2739 = vmatprep.subr.mxu0 0.0
  %2740 = vmatpush1.msra.mxu0 0.0
  %2741 = vmatprep.subr.mxu0 0.0
  %2742 = vmatpush1.msra.mxu0 0.0
  %2743 = vmatprep.subr.mxu0 0.0
  %2744 = vmatpush1.msra.mxu0 0.0
  %2745 = vmatprep.subr.mxu0 0.0
  %2746 = vmatpush1.msra.mxu0 0.0
  %2747 = vmatprep.subr.mxu0 0.0
  %2748 = vmatpush1.msra.mxu0 0.0
  %2749 = vmatprep.subr.mxu0 0.0
  %2750 = vmatpush1.msra.mxu0 0.0
  %2751 = vmatprep.subr.mxu0 0.0
  %2752 = vmatpush1.msra.mxu0 0.0
  %2753 = vmatprep.subr.mxu0 0.0
  %2754 = vmatpush1.msra.mxu0 0.0
  %2755 = vmatprep.subr.mxu0 0.0
  %2756 = vmatpush1.msra.mxu0 0.0
  %2757 = vmatprep.subr.mxu0 0.0
  %2758 = vmatpush1.msra.mxu0 0.0
  %2759 = vmatprep.subr.mxu0 0.0
  %2760 = vmatpush1.msra.mxu0 0.0
  %2761 = vmatprep.subr.mxu0 0.0
  %2762 = vmatpush1.msra.mxu0 0.0
  %2763 = vmatprep.subr.mxu0 0.0
  %2764 = vmatpush1.msra.mxu0 0.0
  %2765 = vmatprep.subr.mxu0 0.0
  %2766 = vmatpush1.msra.mxu0 0.0
  %2767 = vmatprep.subr.mxu0 0.0
  %2768 = vmatpush1.msra.mxu0 0.0
  %2769 = vmatprep.subr.mxu0 0.0
  %2770 = vmatpush1.msra.mxu0 0.0
  %2771 = vmatprep.mubr.f32.mxu0 0.0
  %2772 = vmatmul.mubr.f32.gmra.mrb[0].mxu0 %v2705
  %v2773 = vpop.f32.mrb[0].mxu0
  %v2774 = vadd.f32 %v83, %v2773
  %v2775 = vpop.f32.mrb[0].mxu0
  %2776 = vdwg.mxu0
  %v2777 = vtanh.pop %v2774
  %2779 = vrot.lane.b32.xlu0 %v2777, 32
  %v2780 = vpop.permute.xlu0 %2779
  %v2782 = vsub.f32 %v2695, %v2780
  %v2783 = vmul.f32 %v2777, %v1032
  %2785 = vrot.lane.b32.xlu0 %v2783, 32
  %v2786 = vpop.permute.xlu0 %2785
  %v2788 = vadd.f32 %v2782, %v2786
  %2790 = vrot.lane.b32.xlu0 %v2701, 64
  %v2791 = vpop.permute.xlu0 %2790
  %v2792 = vsel %vm276, %v2791, 0
  %2794 = vmatprep.subr.mxu0 0.0
  %2795 = vmatpush1.msra.mxu0 %v63
  %2796 = vmatprep.subr.mxu0 0.0
  %2797 = vmatpush1.msra.mxu0 %v64
  %2798 = vmatprep.subr.mxu0 0.0
  %2799 = vmatpush1.msra.mxu0 %v65
  %2800 = vmatprep.subr.mxu0 0.0
  %2801 = vmatpush1.msra.mxu0 %v66
  %2802 = vmatprep.subr.mxu0 0.0
  %2803 = vmatpush1.msra.mxu0 0.0
  %2804 = vmatprep.subr.mxu0 0.0
  %2805 = vmatpush1.msra.mxu0 0.0
  %2806 = vmatprep.subr.mxu0 0.0
  %2807 = vmatpush1.msra.mxu0 0.0
  %2808 = vmatprep.subr.mxu0 0.0
  %2809 = vmatpush1.msra.mxu0 0.0
  %2810 = vmatprep.subr.mxu0 0.0
  %2811 = vmatpush1.msra.mxu0 0.0
  %2812 = vmatprep.subr.mxu0 0.0
  %2813 = vmatpush1.msra.mxu0 0.0
  %2814 = vmatprep.subr.mxu0 0.0
  %2815 = vmatpush1.msra.mxu0 0.0
  %2816 = vmatprep.subr.mxu0 0.0
  %2817 = vmatpush1.msra.mxu0 0.0
  %2818 = vmatprep.subr.mxu0 0.0
  %2819 = vmatpush1.msra.mxu0 0.0
  %2820 = vmatprep.subr.mxu0 0.0
  %2821 = vmatpush1.msra.mxu0 0.0
  %2822 = vmatprep.subr.mxu0 0.0
  %2823 = vmatpush1.msra.mxu0 0.0
  %2824 = vmatprep.subr.mxu0 0.0
  %2825 = vmatpush1.msra.mxu0 0.0
  %2826 = vmatprep.subr.mxu0 0.0
  %2827 = vmatpush1.msra.mxu0 0.0
  %2828 = vmatprep.subr.mxu0 0.0
  %2829 = vmatpush1.msra.mxu0 0.0
  %2830 = vmatprep.subr.mxu0 0.0
  %2831 = vmatpush1.msra.mxu0 0.0
  %2832 = vmatprep.subr.mxu0 0.0
  %2833 = vmatpush1.msra.mxu0 0.0
  %2834 = vmatprep.subr.mxu0 0.0
  %2835 = vmatpush1.msra.mxu0 0.0
  %2836 = vmatprep.subr.mxu0 0.0
  %2837 = vmatpush1.msra.mxu0 0.0
  %2838 = vmatprep.subr.mxu0 0.0
  %2839 = vmatpush1.msra.mxu0 0.0
  %2840 = vmatprep.subr.mxu0 0.0
  %2841 = vmatpush1.msra.mxu0 0.0
  %2842 = vmatprep.subr.mxu0 0.0
  %2843 = vmatpush1.msra.mxu0 0.0
  %2844 = vmatprep.subr.mxu0 0.0
  %2845 = vmatpush1.msra.mxu0 0.0
  %2846 = vmatprep.subr.mxu0 0.0
  %2847 = vmatpush1.msra.mxu0 0.0
  %2848 = vmatprep.subr.mxu0 0.0
  %2849 = vmatpush1.msra.mxu0 0.0
  %2850 = vmatprep.subr.mxu0 0.0
  %2851 = vmatpush1.msra.mxu0 0.0
  %2852 = vmatprep.subr.mxu0 0.0
  %2853 = vmatpush1.msra.mxu0 0.0
  %2854 = vmatprep.subr.mxu0 0.0
  %2855 = vmatpush1.msra.mxu0 0.0
  %2856 = vmatprep.subr.mxu0 0.0
  %2857 = vmatpush1.msra.mxu0 0.0
  %2858 = vmatprep.mubr.f32.mxu0 0.0
  %2859 = vmatmul.mubr.f32.gmra.mrb[0].mxu0 %v2792
  %v2860 = vpop.f32.mrb[0].mxu0
  %v2861 = vadd.f32 0.0, %v2860
  %v2862 = vpop.f32.mrb[0].mxu0
  %2863 = vdwg.mxu0
  %v2864 = vadd.f32 %v1965, %v2861
  %v2865 = vxor.u32 %v2864, 2147483648
  %v2866 = vmul.f32 %v2865, 1.442695
  %v2867 = vpow.pop %v2866
  %v2868 = vadd.f32 %v2867, 1.0
  %v2869 = vrcp.pop %v2868
  %v2870 = vmul.f32 1.0, %v2869
  %v2871 = vtanh.pop %v2864
  %v2872 = vmul.f32 %v2870, %v2788
  %2874 = vrot.lane.b32.xlu0 %v2871, 32
  %v2875 = vpop.permute.xlu0 %2874
  %v2877 = vmul.f32 %v2870, %v2875
  %2879 = vrot.lane.b32.xlu0 %v2877, 32
  %v2880 = vpop.permute.xlu0 %2879
  %v2882 = vadd.f32 %v2872, %v2880
  %v2883 = vtanh.pop %v2882
  %2885 = vrot.lane.b32.xlu0 %v2883, 32
  %v2886 = vpop.permute.xlu0 %2885
  %v2888 = vmul.f32 %v2870, %v2886
  %2890 = vrot.lane.b32.xlu0 %v2882, 96
  %v2891 = vpop.permute.xlu0 %2890
  %v2892 = vsel %vm276, %v2891, 0
  %2894 = vmatprep.subr.mxu0 0.0
  %2895 = vmatpush1.msra.mxu0 %v67
  %2896 = vmatprep.subr.mxu0 0.0
  %2897 = vmatpush1.msra.mxu0 %v68
  %2898 = vmatprep.subr.mxu0 0.0
  %2899 = vmatpush1.msra.mxu0 %v69
  %2900 = vmatprep.subr.mxu0 0.0
  %2901 = vmatpush1.msra.mxu0 %v70
  %2902 = vmatprep.subr.mxu0 0.0
  %2903 = vmatpush1.msra.mxu0 0.0
  %2904 = vmatprep.subr.mxu0 0.0
  %2905 = vmatpush1.msra.mxu0 0.0
  %2906 = vmatprep.subr.mxu0 0.0
  %2907 = vmatpush1.msra.mxu0 0.0
  %2908 = vmatprep.subr.mxu0 0.0
  %2909 = vmatpush1.msra.mxu0 0.0
  %2910 = vmatprep.subr.mxu0 0.0
  %2911 = vmatpush1.msra.mxu0 0.0
  %2912 = vmatprep.subr.mxu0 0.0
  %2913 = vmatpush1.msra.mxu0 0.0
  %2914 = vmatprep.subr.mxu0 0.0
  %2915 = vmatpush1.msra.mxu0 0.0
  %2916 = vmatprep.subr.mxu0 0.0
  %2917 = vmatpush1.msra.mxu0 0.0
  %2918 = vmatprep.subr.mxu0 0.0
  %2919 = vmatpush1.msra.mxu0 0.0
  %2920 = vmatprep.subr.mxu0 0.0
  %2921 = vmatpush1.msra.mxu0 0.0
  %2922 = vmatprep.subr.mxu0 0.0
  %2923 = vmatpush1.msra.mxu0 0.0
  %2924 = vmatprep.subr.mxu0 0.0
  %2925 = vmatpush1.msra.mxu0 0.0
  %2926 = vmatprep.subr.mxu0 0.0
  %2927 = vmatpush1.msra.mxu0 0.0
  %2928 = vmatprep.subr.mxu0 0.0
  %2929 = vmatpush1.msra.mxu0 0.0
  %2930 = vmatprep.subr.mxu0 0.0
  %2931 = vmatpush1.msra.mxu0 0.0
  %2932 = vmatprep.subr.mxu0 0.0
  %2933 = vmatpush1.msra.mxu0 0.0
  %2934 = vmatprep.subr.mxu0 0.0
  %2935 = vmatpush1.msra.mxu0 0.0
  %2936 = vmatprep.subr.mxu0 0.0
  %2937 = vmatpush1.msra.mxu0 0.0
  %2938 = vmatprep.subr.mxu0 0.0
  %2939 = vmatpush1.msra.mxu0 0.0
  %2940 = vmatprep.subr.mxu0 0.0
  %2941 = vmatpush1.msra.mxu0 0.0
  %2942 = vmatprep.subr.mxu0 0.0
  %2943 = vmatpush1.msra.mxu0 0.0
  %2944 = vmatprep.subr.mxu0 0.0
  %2945 = vmatpush1.msra.mxu0 0.0
  %2946 = vmatprep.subr.mxu0 0.0
  %2947 = vmatpush1.msra.mxu0 0.0
  %2948 = vmatprep.subr.mxu0 0.0
  %2949 = vmatpush1.msra.mxu0 0.0
  %2950 = vmatprep.subr.mxu0 0.0
  %2951 = vmatpush1.msra.mxu0 0.0
  %2952 = vmatprep.subr.mxu0 0.0
  %2953 = vmatpush1.msra.mxu0 0.0
  %2954 = vmatprep.subr.mxu0 0.0
  %2955 = vmatpush1.msra.mxu0 0.0
  %2956 = vmatprep.subr.mxu0 0.0
  %2957 = vmatpush1.msra.mxu0 0.0
  %2958 = vmatprep.mubr.f32.mxu0 0.0
  %2959 = vmatmul.mubr.f32.gmra.mrb[0].mxu0 %v2892
  %v2960 = vpop.f32.mrb[0].mxu0
  %v2961 = vadd.f32 %v83, %v2960
  %v2962 = vpop.f32.mrb[0].mxu0
  %2963 = vdwg.mxu0
  %v2964 = vtanh.pop %v2961
  %2966 = vrot.lane.b32.xlu0 %v2964, 32
  %v2967 = vpop.permute.xlu0 %2966
  %v2969 = vsub.f32 %v2882, %v2967
  %v2970 = vmul.f32 %v2964, %v1224
  %2972 = vrot.lane.b32.xlu0 %v2970, 32
  %v2973 = vpop.permute.xlu0 %2972
  %v2975 = vadd.f32 %v2969, %v2973
  %2977 = vrot.lane.b32.xlu0 %v2888, 64
  %v2978 = vpop.permute.xlu0 %2977
  %v2979 = vsel %vm276, %v2978, 0
  %2981 = vmatprep.subr.mxu0 0.0
  %2982 = vmatpush1.msra.mxu0 %v63
  %2983 = vmatprep.subr.mxu0 0.0
  %2984 = vmatpush1.msra.mxu0 %v64
  %2985 = vmatprep.subr.mxu0 0.0
  %2986 = vmatpush1.msra.mxu0 %v65
  %2987 = vmatprep.subr.mxu0 0.0
  %2988 = vmatpush1.msra.mxu0 %v66
  %2989 = vmatprep.subr.mxu0 0.0
  %2990 = vmatpush1.msra.mxu0 0.0
  %2991 = vmatprep.subr.mxu0 0.0
  %2992 = vmatpush1.msra.mxu0 0.0
  %2993 = vmatprep.subr.mxu0 0.0
  %2994 = vmatpush1.msra.mxu0 0.0
  %2995 = vmatprep.subr.mxu0 0.0
  %2996 = vmatpush1.msra.mxu0 0.0
  %2997 = vmatprep.subr.mxu0 0.0
  %2998 = vmatpush1.msra.mxu0 0.0
  %2999 = vmatprep.subr.mxu0 0.0
  %3000 = vmatpush1.msra.mxu0 0.0
  %3001 = vmatprep.subr.mxu0 0.0
  %3002 = vmatpush1.msra.mxu0 0.0
  %3003 = vmatprep.subr.mxu0 0.0
  %3004 = vmatpush1.msra.mxu0 0.0
  %3005 = vmatprep.subr.mxu0 0.0
  %3006 = vmatpush1.msra.mxu0 0.0
  %3007 = vmatprep.subr.mxu0 0.0
  %3008 = vmatpush1.msra.mxu0 0.0
  %3009 = vmatprep.subr.mxu0 0.0
  %3010 = vmatpush1.msra.mxu0 0.0
  %3011 = vmatprep.subr.mxu0 0.0
  %3012 = vmatpush1.msra.mxu0 0.0
  %3013 = vmatprep.subr.mxu0 0.0
  %3014 = vmatpush1.msra.mxu0 0.0
  %3015 = vmatprep.subr.mxu0 0.0
  %3016 = vmatpush1.msra.mxu0 0.0
  %3017 = vmatprep.subr.mxu0 0.0
  %3018 = vmatpush1.msra.mxu0 0.0
  %3019 = vmatprep.subr.mxu0 0.0
  %3020 = vmatpush1.msra.mxu0 0.0
  %3021 = vmatprep.subr.mxu0 0.0
  %3022 = vmatpush1.msra.mxu0 0.0
  %3023 = vmatprep.subr.mxu0 0.0
  %3024 = vmatpush1.msra.mxu0 0.0
  %3025 = vmatprep.subr.mxu0 0.0
  %3026 = vmatpush1.msra.mxu0 0.0
  %3027 = vmatprep.subr.mxu0 0.0
  %3028 = vmatpush1.msra.mxu0 0.0
  %3029 = vmatprep.subr.mxu0 0.0
  %3030 = vmatpush1.msra.mxu0 0.0
  %3031 = vmatprep.subr.mxu0 0.0
  %3032 = vmatpush1.msra.mxu0 0.0
  %3033 = vmatprep.subr.mxu0 0.0
  %3034 = vmatpush1.msra.mxu0 0.0
  %3035 = vmatprep.subr.mxu0 0.0
  %3036 = vmatpush1.msra.mxu0 0.0
  %3037 = vmatprep.subr.mxu0 0.0
  %3038 = vmatpush1.msra.mxu0 0.0
  %3039 = vmatprep.subr.mxu0 0.0
  %3040 = vmatpush1.msra.mxu0 0.0
  %3041 = vmatprep.subr.mxu0 0.0
  %3042 = vmatpush1.msra.mxu0 0.0
  %3043 = vmatprep.subr.mxu0 0.0
  %3044 = vmatpush1.msra.mxu0 0.0
  %3045 = vmatprep.mubr.f32.mxu0 0.0
  %3046 = vmatmul.mubr.f32.gmra.mrb[0].mxu0 %v2979
  %v3047 = vpop.f32.mrb[0].mxu0
  %v3048 = vadd.f32 0.0, %v3047
  %v3049 = vpop.f32.mrb[0].mxu0
  %3050 = vdwg.mxu0
  %v3051 = vadd.f32 %v1965, %v3048
  %v3052 = vxor.u32 %v3051, 2147483648
  %v3053 = vmul.f32 %v3052, 1.442695
  %v3054 = vpow.pop %v3053
  %v3055 = vadd.f32 %v3054, 1.0
  %v3056 = vrcp.pop %v3055
  %v3057 = vmul.f32 1.0, %v3056
  %v3058 = vtanh.pop %v3051
  %v3059 = vmul.f32 %v3057, %v2975
  %3061 = vrot.lane.b32.xlu0 %v3058, 32
  %v3062 = vpop.permute.xlu0 %3061
  %v3064 = vmul.f32 %v3057, %v3062
  %3066 = vrot.lane.b32.xlu0 %v3064, 32
  %v3067 = vpop.permute.xlu0 %3066
  %v3069 = vadd.f32 %v3059, %v3067
  %v3070 = vtanh.pop %v3069
  %3072 = vrot.lane.b32.xlu0 %v3070, 32
  %v3073 = vpop.permute.xlu0 %3072
  %v3075 = vmul.f32 %v3057, %v3073
  %3077 = vrot.lane.b32.xlu0 %v3069, 96
  %v3078 = vpop.permute.xlu0 %3077
  %v3079 = vsel %vm276, %v3078, 0
  %3081 = vmatprep.subr.mxu0 0.0
  %3082 = vmatpush1.msra.mxu0 %v67
  %3083 = vmatprep.subr.mxu0 0.0
  %3084 = vmatpush1.msra.mxu0 %v68
  %3085 = vmatprep.subr.mxu0 0.0
  %3086 = vmatpush1.msra.mxu0 %v69
  %3087 = vmatprep.subr.mxu0 0.0
  %3088 = vmatpush1.msra.mxu0 %v70
  %3089 = vmatprep.subr.mxu0 0.0
  %3090 = vmatpush1.msra.mxu0 0.0
  %3091 = vmatprep.subr.mxu0 0.0
  %3092 = vmatpush1.msra.mxu0 0.0
  %3093 = vmatprep.subr.mxu0 0.0
  %3094 = vmatpush1.msra.mxu0 0.0
  %3095 = vmatprep.subr.mxu0 0.0
  %3096 = vmatpush1.msra.mxu0 0.0
  %3097 = vmatprep.subr.mxu0 0.0
  %3098 = vmatpush1.msra.mxu0 0.0
  %3099 = vmatprep.subr.mxu0 0.0
  %3100 = vmatpush1.msra.mxu0 0.0
  %3101 = vmatprep.subr.mxu0 0.0
  %3102 = vmatpush1.msra.mxu0 0.0
  %3103 = vmatprep.subr.mxu0 0.0
  %3104 = vmatpush1.msra.mxu0 0.0
  %3105 = vmatprep.subr.mxu0 0.0
  %3106 = vmatpush1.msra.mxu0 0.0
  %3107 = vmatprep.subr.mxu0 0.0
  %3108 = vmatpush1.msra.mxu0 0.0
  %3109 = vmatprep.subr.mxu0 0.0
  %3110 = vmatpush1.msra.mxu0 0.0
  %3111 = vmatprep.subr.mxu0 0.0
  %3112 = vmatpush1.msra.mxu0 0.0
  %3113 = vmatprep.subr.mxu0 0.0
  %3114 = vmatpush1.msra.mxu0 0.0
  %3115 = vmatprep.subr.mxu0 0.0
  %3116 = vmatpush1.msra.mxu0 0.0
  %3117 = vmatprep.subr.mxu0 0.0
  %3118 = vmatpush1.msra.mxu0 0.0
  %3119 = vmatprep.subr.mxu0 0.0
  %3120 = vmatpush1.msra.mxu0 0.0
  %3121 = vmatprep.subr.mxu0 0.0
  %3122 = vmatpush1.msra.mxu0 0.0
  %3123 = vmatprep.subr.mxu0 0.0
  %3124 = vmatpush1.msra.mxu0 0.0
  %3125 = vmatprep.subr.mxu0 0.0
  %3126 = vmatpush1.msra.mxu0 0.0
  %3127 = vmatprep.subr.mxu0 0.0
  %3128 = vmatpush1.msra.mxu0 0.0
  %3129 = vmatprep.subr.mxu0 0.0
  %3130 = vmatpush1.msra.mxu0 0.0
  %3131 = vmatprep.subr.mxu0 0.0
  %3132 = vmatpush1.msra.mxu0 0.0
  %3133 = vmatprep.subr.mxu0 0.0
  %3134 = vmatpush1.msra.mxu0 0.0
  %3135 = vmatprep.subr.mxu0 0.0
  %3136 = vmatpush1.msra.mxu0 0.0
  %3137 = vmatprep.subr.mxu0 0.0
  %3138 = vmatpush1.msra.mxu0 0.0
  %3139 = vmatprep.subr.mxu0 0.0
  %3140 = vmatpush1.msra.mxu0 0.0
  %3141 = vmatprep.subr.mxu0 0.0
  %3142 = vmatpush1.msra.mxu0 0.0
  %3143 = vmatprep.subr.mxu0 0.0
  %3144 = vmatpush1.msra.mxu0 0.0
  %3145 = vmatprep.mubr.f32.mxu0 0.0
  %3146 = vmatmul.mubr.f32.gmra.mrb[0].mxu0 %v3079
  %v3147 = vpop.f32.mrb[0].mxu0
  %v3148 = vadd.f32 %v83, %v3147
  %v3149 = vpop.f32.mrb[0].mxu0
  %3150 = vdwg.mxu0
  %v3151 = vtanh.pop %v3148
  %3153 = vrot.lane.b32.xlu0 %v3151, 32
  %v3154 = vpop.permute.xlu0 %3153
  %v3156 = vsub.f32 %v3069, %v3154
  %v3157 = vmul.f32 %v3151, %v1416
  %3159 = vrot.lane.b32.xlu0 %v3157, 32
  %v3160 = vpop.permute.xlu0 %3159
  %v3162 = vadd.f32 %v3156, %v3160
  %3164 = vrot.lane.b32.xlu0 %v3075, 64
  %v3165 = vpop.permute.xlu0 %3164
  %v3166 = vsel %vm276, %v3165, 0
  %3168 = vmatprep.subr.mxu0 0.0
  %3169 = vmatpush1.msra.mxu0 %v63
  %3170 = vmatprep.subr.mxu0 0.0
  %3171 = vmatpush1.msra.mxu0 %v64
  %3172 = vmatprep.subr.mxu0 0.0
  %3173 = vmatpush1.msra.mxu0 %v65
  %3174 = vmatprep.subr.mxu0 0.0
  %3175 = vmatpush1.msra.mxu0 %v66
  %3176 = vmatprep.subr.mxu0 0.0
  %3177 = vmatpush1.msra.mxu0 0.0
  %3178 = vmatprep.subr.mxu0 0.0
  %3179 = vmatpush1.msra.mxu0 0.0
  %3180 = vmatprep.subr.mxu0 0.0
  %3181 = vmatpush1.msra.mxu0 0.0
  %3182 = vmatprep.subr.mxu0 0.0
  %3183 = vmatpush1.msra.mxu0 0.0
  %3184 = vmatprep.subr.mxu0 0.0
  %3185 = vmatpush1.msra.mxu0 0.0
  %3186 = vmatprep.subr.mxu0 0.0
  %3187 = vmatpush1.msra.mxu0 0.0
  %3188 = vmatprep.subr.mxu0 0.0
  %3189 = vmatpush1.msra.mxu0 0.0
  %3190 = vmatprep.subr.mxu0 0.0
  %3191 = vmatpush1.msra.mxu0 0.0
  %3192 = vmatprep.subr.mxu0 0.0
  %3193 = vmatpush1.msra.mxu0 0.0
  %3194 = vmatprep.subr.mxu0 0.0
  %3195 = vmatpush1.msra.mxu0 0.0
  %3196 = vmatprep.subr.mxu0 0.0
  %3197 = vmatpush1.msra.mxu0 0.0
  %3198 = vmatprep.subr.mxu0 0.0
  %3199 = vmatpush1.msra.mxu0 0.0
  %3200 = vmatprep.subr.mxu0 0.0
  %3201 = vmatpush1.msra.mxu0 0.0
  %3202 = vmatprep.subr.mxu0 0.0
  %3203 = vmatpush1.msra.mxu0 0.0
  %3204 = vmatprep.subr.mxu0 0.0
  %3205 = vmatpush1.msra.mxu0 0.0
  %3206 = vmatprep.subr.mxu0 0.0
  %3207 = vmatpush1.msra.mxu0 0.0
  %3208 = vmatprep.subr.mxu0 0.0
  %3209 = vmatpush1.msra.mxu0 0.0
  %3210 = vmatprep.subr.mxu0 0.0
  %3211 = vmatpush1.msra.mxu0 0.0
  %3212 = vmatprep.subr.mxu0 0.0
  %3213 = vmatpush1.msra.mxu0 0.0
  %3214 = vmatprep.subr.mxu0 0.0
  %3215 = vmatpush1.msra.mxu0 0.0
  %3216 = vmatprep.subr.mxu0 0.0
  %3217 = vmatpush1.msra.mxu0 0.0
  %3218 = vmatprep.subr.mxu0 0.0
  %3219 = vmatpush1.msra.mxu0 0.0
  %3220 = vmatprep.subr.mxu0 0.0
  %3221 = vmatpush1.msra.mxu0 0.0
  %3222 = vmatprep.subr.mxu0 0.0
  %3223 = vmatpush1.msra.mxu0 0.0
  %3224 = vmatprep.subr.mxu0 0.0
  %3225 = vmatpush1.msra.mxu0 0.0
  %3226 = vmatprep.subr.mxu0 0.0
  %3227 = vmatpush1.msra.mxu0 0.0
  %3228 = vmatprep.subr.mxu0 0.0
  %3229 = vmatpush1.msra.mxu0 0.0
  %3230 = vmatprep.subr.mxu0 0.0
  %3231 = vmatpush1.msra.mxu0 0.0
  %3232 = vmatprep.mubr.f32.mxu0 0.0
  %3233 = vmatmul.mubr.f32.gmra.mrb[0].mxu0 %v3166
  %v3234 = vpop.f32.mrb[0].mxu0
  %v3235 = vadd.f32 0.0, %v3234
  %v3236 = vpop.f32.mrb[0].mxu0
  %3237 = vdwg.mxu0
  %v3238 = vadd.f32 %v1965, %v3235
  %v3239 = vxor.u32 %v3238, 2147483648
  %v3240 = vmul.f32 %v3239, 1.442695
  %v3241 = vpow.pop %v3240
  %v3242 = vadd.f32 %v3241, 1.0
  %v3243 = vrcp.pop %v3242
  %v3244 = vmul.f32 1.0, %v3243
  %v3245 = vtanh.pop %v3238
  %v3246 = vmul.f32 %v3244, %v3162
  %3248 = vrot.lane.b32.xlu0 %v3245, 32
  %v3249 = vpop.permute.xlu0 %3248
  %v3251 = vmul.f32 %v3244, %v3249
  %3253 = vrot.lane.b32.xlu0 %v3251, 32
  %v3254 = vpop.permute.xlu0 %3253
  %v3256 = vadd.f32 %v3246, %v3254
  %v3257 = vtanh.pop %v3256
  %3259 = vrot.lane.b32.xlu0 %v3257, 32
  %v3260 = vpop.permute.xlu0 %3259
  %v3262 = vmul.f32 %v3244, %v3260
  %3264 = vrot.lane.b32.xlu0 %v3256, 96
  %v3265 = vpop.permute.xlu0 %3264
  %v3266 = vsel %vm276, %v3265, 0
  %3268 = vmatprep.subr.mxu0 0.0
  %3269 = vmatpush1.msra.mxu0 %v67
  %3270 = vmatprep.subr.mxu0 0.0
  %3271 = vmatpush1.msra.mxu0 %v68
  %3272 = vmatprep.subr.mxu0 0.0
  %3273 = vmatpush1.msra.mxu0 %v69
  %3274 = vmatprep.subr.mxu0 0.0
  %3275 = vmatpush1.msra.mxu0 %v70
  %3276 = vmatprep.subr.mxu0 0.0
  %3277 = vmatpush1.msra.mxu0 0.0
  %3278 = vmatprep.subr.mxu0 0.0
  %3279 = vmatpush1.msra.mxu0 0.0
  %3280 = vmatprep.subr.mxu0 0.0
  %3281 = vmatpush1.msra.mxu0 0.0
  %3282 = vmatprep.subr.mxu0 0.0
  %3283 = vmatpush1.msra.mxu0 0.0
  %3284 = vmatprep.subr.mxu0 0.0
  %3285 = vmatpush1.msra.mxu0 0.0
  %3286 = vmatprep.subr.mxu0 0.0
  %3287 = vmatpush1.msra.mxu0 0.0
  %3288 = vmatprep.subr.mxu0 0.0
  %3289 = vmatpush1.msra.mxu0 0.0
  %3290 = vmatprep.subr.mxu0 0.0
  %3291 = vmatpush1.msra.mxu0 0.0
  %3292 = vmatprep.subr.mxu0 0.0
  %3293 = vmatpush1.msra.mxu0 0.0
  %3294 = vmatprep.subr.mxu0 0.0
  %3295 = vmatpush1.msra.mxu0 0.0
  %3296 = vmatprep.subr.mxu0 0.0
  %3297 = vmatpush1.msra.mxu0 0.0
  %3298 = vmatprep.subr.mxu0 0.0
  %3299 = vmatpush1.msra.mxu0 0.0
  %3300 = vmatprep.subr.mxu0 0.0
  %3301 = vmatpush1.msra.mxu0 0.0
  %3302 = vmatprep.subr.mxu0 0.0
  %3303 = vmatpush1.msra.mxu0 0.0
  %3304 = vmatprep.subr.mxu0 0.0
  %3305 = vmatpush1.msra.mxu0 0.0
  %3306 = vmatprep.subr.mxu0 0.0
  %3307 = vmatpush1.msra.mxu0 0.0
  %3308 = vmatprep.subr.mxu0 0.0
  %3309 = vmatpush1.msra.mxu0 0.0
  %3310 = vmatprep.subr.mxu0 0.0
  %3311 = vmatpush1.msra.mxu0 0.0
  %3312 = vmatprep.subr.mxu0 0.0
  %3313 = vmatpush1.msra.mxu0 0.0
  %3314 = vmatprep.subr.mxu0 0.0
  %3315 = vmatpush1.msra.mxu0 0.0
  %3316 = vmatprep.subr.mxu0 0.0
  %3317 = vmatpush1.msra.mxu0 0.0
  %3318 = vmatprep.subr.mxu0 0.0
  %3319 = vmatpush1.msra.mxu0 0.0
  %3320 = vmatprep.subr.mxu0 0.0
  %3321 = vmatpush1.msra.mxu0 0.0
  %3322 = vmatprep.subr.mxu0 0.0
  %3323 = vmatpush1.msra.mxu0 0.0
  %3324 = vmatprep.subr.mxu0 0.0
  %3325 = vmatpush1.msra.mxu0 0.0
  %3326 = vmatprep.subr.mxu0 0.0
  %3327 = vmatpush1.msra.mxu0 0.0
  %3328 = vmatprep.subr.mxu0 0.0
  %3329 = vmatpush1.msra.mxu0 0.0
  %3330 = vmatprep.subr.mxu0 0.0
  %3331 = vmatpush1.msra.mxu0 0.0
  %3332 = vmatprep.mubr.f32.mxu0 0.0
  %3333 = vmatmul.mubr.f32.gmra.mrb[0].mxu0 %v3266
  %v3334 = vpop.f32.mrb[0].mxu0
  %v3335 = vadd.f32 %v83, %v3334
  %v3336 = vpop.f32.mrb[0].mxu0
  %3337 = vdwg.mxu0
  %v3338 = vtanh.pop %v3335
  %3340 = vrot.lane.b32.xlu0 %v3338, 32
  %v3341 = vpop.permute.xlu0 %3340
  %v3343 = vsub.f32 %v3256, %v3341
  %v3344 = vmul.f32 %v3338, %v1608
  %3346 = vrot.lane.b32.xlu0 %v3344, 32
  %v3347 = vpop.permute.xlu0 %3346
  %v3349 = vadd.f32 %v3343, %v3347
  %3351 = vrot.lane.b32.xlu0 %v3262, 64
  %v3352 = vpop.permute.xlu0 %3351
  %v3353 = vsel %vm276, %v3352, 0
  %3355 = vmatprep.subr.mxu0 0.0
  %3356 = vmatpush1.msra.mxu0 %v63
  %3357 = vmatprep.subr.mxu0 0.0
  %3358 = vmatpush1.msra.mxu0 %v64
  %3359 = vmatprep.subr.mxu0 0.0
  %3360 = vmatpush1.msra.mxu0 %v65
  %3361 = vmatprep.subr.mxu0 0.0
  %3362 = vmatpush1.msra.mxu0 %v66
  %3363 = vmatprep.subr.mxu0 0.0
  %3364 = vmatpush1.msra.mxu0 0.0
  %3365 = vmatprep.subr.mxu0 0.0
  %3366 = vmatpush1.msra.mxu0 0.0
  %3367 = vmatprep.subr.mxu0 0.0
  %3368 = vmatpush1.msra.mxu0 0.0
  %3369 = vmatprep.subr.mxu0 0.0
  %3370 = vmatpush1.msra.mxu0 0.0
  %3371 = vmatprep.subr.mxu0 0.0
  %3372 = vmatpush1.msra.mxu0 0.0
  %3373 = vmatprep.subr.mxu0 0.0
  %3374 = vmatpush1.msra.mxu0 0.0
  %3375 = vmatprep.subr.mxu0 0.0
  %3376 = vmatpush1.msra.mxu0 0.0
  %3377 = vmatprep.subr.mxu0 0.0
  %3378 = vmatpush1.msra.mxu0 0.0
  %3379 = vmatprep.subr.mxu0 0.0
  %3380 = vmatpush1.msra.mxu0 0.0
  %3381 = vmatprep.subr.mxu0 0.0
  %3382 = vmatpush1.msra.mxu0 0.0
  %3383 = vmatprep.subr.mxu0 0.0
  %3384 = vmatpush1.msra.mxu0 0.0
  %3385 = vmatprep.subr.mxu0 0.0
  %3386 = vmatpush1.msra.mxu0 0.0
  %3387 = vmatprep.subr.mxu0 0.0
  %3388 = vmatpush1.msra.mxu0 0.0
  %3389 = vmatprep.subr.mxu0 0.0
  %3390 = vmatpush1.msra.mxu0 0.0
  %3391 = vmatprep.subr.mxu0 0.0
  %3392 = vmatpush1.msra.mxu0 0.0
  %3393 = vmatprep.subr.mxu0 0.0
  %3394 = vmatpush1.msra.mxu0 0.0
  %3395 = vmatprep.subr.mxu0 0.0
  %3396 = vmatpush1.msra.mxu0 0.0
  %3397 = vmatprep.subr.mxu0 0.0
  %3398 = vmatpush1.msra.mxu0 0.0
  %3399 = vmatprep.subr.mxu0 0.0
  %3400 = vmatpush1.msra.mxu0 0.0
  %3401 = vmatprep.subr.mxu0 0.0
  %3402 = vmatpush1.msra.mxu0 0.0
  %3403 = vmatprep.subr.mxu0 0.0
  %3404 = vmatpush1.msra.mxu0 0.0
  %3405 = vmatprep.subr.mxu0 0.0
  %3406 = vmatpush1.msra.mxu0 0.0
  %3407 = vmatprep.subr.mxu0 0.0
  %3408 = vmatpush1.msra.mxu0 0.0
  %3409 = vmatprep.subr.mxu0 0.0
  %3410 = vmatpush1.msra.mxu0 0.0
  %3411 = vmatprep.subr.mxu0 0.0
  %3412 = vmatpush1.msra.mxu0 0.0
  %3413 = vmatprep.subr.mxu0 0.0
  %3414 = vmatpush1.msra.mxu0 0.0
  %3415 = vmatprep.subr.mxu0 0.0
  %3416 = vmatpush1.msra.mxu0 0.0
  %3417 = vmatprep.subr.mxu0 0.0
  %3418 = vmatpush1.msra.mxu0 0.0
  %3419 = vmatprep.mubr.f32.mxu0 0.0
  %3420 = vmatmul.mubr.f32.gmra.mrb[0].mxu0 %v3353
  %v3421 = vpop.f32.mrb[0].mxu0
  %v3422 = vadd.f32 0.0, %v3421
  %v3423 = vpop.f32.mrb[0].mxu0
  %3424 = vdwg.mxu0
  %v3425 = vadd.f32 %v1965, %v3422
  %v3426 = vxor.u32 %v3425, 2147483648
  %v3427 = vmul.f32 %v3426, 1.442695
  %v3428 = vpow.pop %v3427
  %v3429 = vadd.f32 %v3428, 1.0
  %v3430 = vrcp.pop %v3429
  %v3431 = vmul.f32 1.0, %v3430
  %v3432 = vtanh.pop %v3425
  %v3433 = vmul.f32 %v3431, %v3349
  %3435 = vrot.lane.b32.xlu0 %v3432, 32
  %v3436 = vpop.permute.xlu0 %3435
  %v3438 = vmul.f32 %v3431, %v3436
  %3440 = vrot.lane.b32.xlu0 %v3438, 32
  %v3441 = vpop.permute.xlu0 %3440
  %v3443 = vadd.f32 %v3433, %v3441
  %v3444 = vtanh.pop %v3443
  %3446 = vrot.lane.b32.xlu0 %v3444, 32
  %v3447 = vpop.permute.xlu0 %3446
  %v3449 = vmul.f32 %v3431, %v3447
  %v3450 = vld [vmem:[%s14] sm:$0xff]
  %v3451 = vld [vmem:[%s14 + $0x8] sm:$0xff]
  %v3452 = vld [vmem:[%s14 + $0x10] sm:$0xff]
  %v3453 = vld [vmem:[%s14 + $0x18] sm:$0xff]
  %v3454 = vld [vmem:[%s15] sm:$0x1]
  %v3456 = vlaneseq
  %v3457 = vshrl.u32 %v3456, 7
  %v3458 = vsub.s32 0, %v3457
  %v3459 = vrot.slane %v3454, %v3458
  %3462 = vrot.lane.b32.xlu0 %v3449, 64
  %v3463 = vpop.permute.xlu0 %3462
  %v3464 = vsel %vm276, %v3463, 0
  %3466 = vmatprep.subr.mxu0 0.0
  %3467 = vmatpush1.msra.mxu0 %v3450
  %3468 = vmatprep.subr.mxu0 0.0
  %3469 = vmatpush1.msra.mxu0 %v3451
  %3470 = vmatprep.subr.mxu0 0.0
  %3471 = vmatpush1.msra.mxu0 %v3452
  %3472 = vmatprep.subr.mxu0 0.0
  %3473 = vmatpush1.msra.mxu0 %v3453
  %3474 = vmatprep.subr.mxu0 0.0
  %3475 = vmatpush1.msra.mxu0 0.0
  %3476 = vmatprep.subr.mxu0 0.0
  %3477 = vmatpush1.msra.mxu0 0.0
  %3478 = vmatprep.subr.mxu0 0.0
  %3479 = vmatpush1.msra.mxu0 0.0
  %3480 = vmatprep.subr.mxu0 0.0
  %3481 = vmatpush1.msra.mxu0 0.0
  %3482 = vmatprep.subr.mxu0 0.0
  %3483 = vmatpush1.msra.mxu0 0.0
  %3484 = vmatprep.subr.mxu0 0.0
  %3485 = vmatpush1.msra.mxu0 0.0
  %3486 = vmatprep.subr.mxu0 0.0
  %3487 = vmatpush1.msra.mxu0 0.0
  %3488 = vmatprep.subr.mxu0 0.0
  %3489 = vmatpush1.msra.mxu0 0.0
  %3490 = vmatprep.subr.mxu0 0.0
  %3491 = vmatpush1.msra.mxu0 0.0
  %3492 = vmatprep.subr.mxu0 0.0
  %3493 = vmatpush1.msra.mxu0 0.0
  %3494 = vmatprep.subr.mxu0 0.0
  %3495 = vmatpush1.msra.mxu0 0.0
  %3496 = vmatprep.subr.mxu0 0.0
  %3497 = vmatpush1.msra.mxu0 0.0
  %3498 = vmatprep.subr.mxu0 0.0
  %3499 = vmatpush1.msra.mxu0 0.0
  %3500 = vmatprep.subr.mxu0 0.0
  %3501 = vmatpush1.msra.mxu0 0.0
  %3502 = vmatprep.subr.mxu0 0.0
  %3503 = vmatpush1.msra.mxu0 0.0
  %3504 = vmatprep.subr.mxu0 0.0
  %3505 = vmatpush1.msra.mxu0 0.0
  %3506 = vmatprep.subr.mxu0 0.0
  %3507 = vmatpush1.msra.mxu0 0.0
  %3508 = vmatprep.subr.mxu0 0.0
  %3509 = vmatpush1.msra.mxu0 0.0
  %3510 = vmatprep.subr.mxu0 0.0
  %3511 = vmatpush1.msra.mxu0 0.0
  %3512 = vmatprep.subr.mxu0 0.0
  %3513 = vmatpush1.msra.mxu0 0.0
  %3514 = vmatprep.subr.mxu0 0.0
  %3515 = vmatpush1.msra.mxu0 0.0
  %3516 = vmatprep.subr.mxu0 0.0
  %3517 = vmatpush1.msra.mxu0 0.0
  %3518 = vmatprep.subr.mxu0 0.0
  %3519 = vmatpush1.msra.mxu0 0.0
  %3520 = vmatprep.subr.mxu0 0.0
  %3521 = vmatpush1.msra.mxu0 0.0
  %3522 = vmatprep.subr.mxu0 0.0
  %3523 = vmatpush1.msra.mxu0 0.0
  %3524 = vmatprep.subr.mxu0 0.0
  %3525 = vmatpush1.msra.mxu0 0.0
  %3526 = vmatprep.subr.mxu0 0.0
  %3527 = vmatpush1.msra.mxu0 0.0
  %3528 = vmatprep.subr.mxu0 0.0
  %3529 = vmatpush1.msra.mxu0 0.0
  %3530 = vmatprep.mubr.f32.mxu0 0.0
  %3531 = vmatmul.mubr.f32.gmra.mrb[0].mxu0 %v2231
  %v3532 = vpop.f32.mrb[0].mxu0
  %v3533 = vadd.f32 %v3459, %v3532
  %v3534 = vpop.f32.mrb[0].mxu0
  %3535 = vmatprep.mubr.f32.mxu0 0.0
  %3536 = vmatmul.mubr.f32.gmra.mrb[0].mxu0 %v2418
  %v3537 = vpop.f32.mrb[0].mxu0
  %v3538 = vadd.f32 %v3459, %v3537
  %v3539 = vpop.f32.mrb[0].mxu0
  %3540 = vmatprep.mubr.f32.mxu0 0.0
  %3541 = vmatmul.mubr.f32.gmra.mrb[0].mxu0 %v2605
  %v3542 = vpop.f32.mrb[0].mxu0
  %v3543 = vadd.f32 %v3459, %v3542
  %v3544 = vpop.f32.mrb[0].mxu0
  %3545 = vmatprep.mubr.f32.mxu0 0.0
  %3546 = vmatmul.mubr.f32.gmra.mrb[0].mxu0 %v2792
  %v3547 = vpop.f32.mrb[0].mxu0
  %v3548 = vadd.f32 %v3459, %v3547
  %v3549 = vpop.f32.mrb[0].mxu0
  %3550 = vmatprep.mubr.f32.mxu0 0.0
  %3551 = vmatmul.mubr.f32.gmra.mrb[0].mxu0 %v2979
  %v3552 = vpop.f32.mrb[0].mxu0
  %v3553 = vadd.f32 %v3459, %v3552
  %v3554 = vpop.f32.mrb[0].mxu0
  %3555 = vmatprep.mubr.f32.mxu0 0.0
  %3556 = vmatmul.mubr.f32.gmra.mrb[0].mxu0 %v3166
  %v3557 = vpop.f32.mrb[0].mxu0
  %v3558 = vadd.f32 %v3459, %v3557
  %v3559 = vpop.f32.mrb[0].mxu0
  %3560 = vmatprep.mubr.f32.mxu0 0.0
  %3561 = vmatmul.mubr.f32.gmra.mrb[0].mxu0 %v3353
  %v3562 = vpop.f32.mrb[0].mxu0
  %v3563 = vadd.f32 %v3459, %v3562
  %v3564 = vpop.f32.mrb[0].mxu0
  %3565 = vmatprep.mubr.f32.mxu0 0.0
  %3566 = vmatmul.mubr.f32.gmra.mrb[0].mxu0 %v3464
  %v3567 = vpop.f32.mrb[0].mxu0
  %v3568 = vadd.f32 %v3459, %v3567
  %v3569 = vpop.f32.mrb[0].mxu0
  %3570 = vdwg.mxu0
  %3571 = vst.msk [vmem:[%s16] sm:$0xff] %vm141, %v3533
  %3572 = vst.msk [vmem:[%s16 + $0x8] sm:$0xff] %vm141, %v3538
  %3573 = vst.msk [vmem:[%s16 + $0x10] sm:$0xff] %vm141, %v3543
  %3574 = vst.msk [vmem:[%s16 + $0x18] sm:$0xff] %vm141, %v3548
  %3575 = vst.msk [vmem:[%s16 + $0x20] sm:$0xff] %vm141, %v3553
  %3576 = vst.msk [vmem:[%s16 + $0x28] sm:$0xff] %vm141, %v3558
  %3577 = vst.msk [vmem:[%s16 + $0x30] sm:$0xff] %vm141, %v3563
  %3578 = vst.msk [vmem:[%s16 + $0x38] sm:$0xff] %vm141, %v3568
  // Predicated region
  $region66: #{tlstm_generator_forward.1} parent=0 // pred_check
    _
  $region67: #{tlstm_generator_forward.1} parent=0 // pred_check_branch
    %3580 = sbr.rel (0) target = $region69
  $region68: #{tlstm_generator_forward.1} parent=0 // pred_region
    _
  $region69: #{tlstm_generator_forward.1} parent=0 // pred_fallthru
    _
  // Predicated region
  $region70: #{tlstm_generator_forward.1} parent=0 // pred_check
    _
  $region71: #{tlstm_generator_forward.1} parent=0 // pred_check_branch
    %3582 = sbr.rel (0) target = $region73
  $region72: #{tlstm_generator_forward.1} parent=0 // pred_region
    _
  $region73: #{tlstm_generator_forward.1} parent=0 // pred_fallthru
    _
  // Predicated region
  $region74: #{tlstm_generator_forward.1} parent=0 // pred_check
    _
  $region75: #{tlstm_generator_forward.1} parent=0 // pred_check_branch
    %3584 = sbr.rel (0) target = $region77
  $region76: #{tlstm_generator_forward.1} parent=0 // pred_region
    _
  $region77: #{tlstm_generator_forward.1} parent=0 // pred_fallthru
    _
  // Predicated region
  $region78: #{tlstm_generator_forward.1} parent=0 // pred_check
    _
  $region79: #{tlstm_generator_forward.1} parent=0 // pred_check_branch
    %3586 = sbr.rel (0) target = $region81
  $region80: #{tlstm_generator_forward.1} parent=0 // pred_region
    _
  $region81: #{tlstm_generator_forward.1} parent=0 // pred_fallthru
    _

</llo_original>
